<compile_context>
chip_gen: v6e
topology: v6e:2x2x1
jax: 0.10.0
libtpu: 0.0.40
codegen_flags: <defaults>
</compile_context>

<pallas_src>
import functools

import jax
import jax.numpy as jnp
from jax.experimental import pallas as pl
from jax.experimental.pallas import tpu as pltpu


# ----------------------------------------------------------------------------
# Fused multi-layer SAGE kernel.
# ----------------------------------------------------------------------------
def fused_sage_kernel(a_ref, x_hbm, w_ref, b_ref, g_ref, bt_ref, o_ref,
                      act_ref, y_ref, z_ref, sum_ref, ssq_ref, x_sem,
                      *, n_real, tm, eps):
    l = pl.program_id(0)            # layer index (outer, carries activations)
    t = pl.program_id(1)            # row-tile index (inner)
    n_layers = pl.num_programs(0)
    n_tiles = pl.num_programs(1)
    row0 = pl.multiple_of(t * tm, tm)
    is_hidden = l < n_layers - 1

    # One-shot seed of the resident activation buffer straight from HBM.  x is
    # read exactly once; no pipelined x block is held in VMEM for the kernel's
    # lifetime.
    @pl.when(jnp.logical_and(l == 0, t == 0))
    def _seed():
        cp = pltpu.make_async_copy(x_hbm, act_ref, x_sem)
        cp.start()
        cp.wait()

    # Per-layer head: precompute Y = act @ W_l and Z = act @ W_r + b once.
    # (lin_l(A @ act) == A @ (act @ W_l) by associativity; same FLOPs, but the
    # per-tile work collapses to one matmul against the resident Y.)
    @pl.when(t == 0)
    def _layer_head():
        act = act_ref[...]
        y_ref[...] = jnp.dot(
            act, w_ref[0, 0],
            preferred_element_type=jnp.float32).astype(y_ref.dtype)
        z_ref[...] = (jnp.dot(act, w_ref[0, 1],
                              preferred_element_type=jnp.float32)
                      + b_ref[0])
        sum_ref[...] = jnp.zeros_like(sum_ref)
        ssq_ref[...] = jnp.zeros_like(ssq_ref)

    # Steady state: one MXU matmul per row tile (f32 accumulation).
    h = (jnp.dot(a_ref[...], y_ref[...], preferred_element_type=jnp.float32)
         + z_ref[pl.ds(row0, tm), :])
    # o_ref has a constant index map -> stays VMEM-resident; hidden layers use
    # it as staging for the BN finalize, the last layer's rows ARE the output.
    o_ref[pl.ds(row0, tm), :] = h

    # BatchNorm batch statistics (training mode); hidden layers only, padded
    # rows masked out.
    @pl.when(is_hidden)
    def _stats():
        rid = jax.lax.broadcasted_iota(jnp.int32, (tm, 1), 0) + row0
        hm = jnp.where(rid < n_real, h, 0.0)
        sum_ref[...] += jnp.sum(hm, axis=0, keepdims=True)
        ssq_ref[...] += jnp.sum(hm * hm, axis=0, keepdims=True)

    # Per-layer tail (hidden layers): finalize BN + ReLU (+ identity dropout)
    # into the resident activation buffer.  Padded rows are explicitly zeroed.
    @pl.when(jnp.logical_and(is_hidden, t == n_tiles - 1))
    def _finalize():
        h_all = o_ref[...]
        inv_n = 1.0 / float(n_real)
        mean = sum_ref[...] * inv_n
        var = ssq_ref[...] * inv_n - mean * mean      # biased var (BN training)
        h_norm = ((h_all - mean) * jax.lax.rsqrt(var + eps) * g_ref[0]
                  + bt_ref[0])
        rid_all = jax.lax.broadcasted_iota(jnp.int32, (o_ref.shape[0], 1), 0)
        act_ref[...] = jnp.where(rid_all < n_real,
                                 jnp.maximum(h_norm, 0.0),
                                 0.0).astype(act_ref.dtype)


# ----------------------------------------------------------------------------
# Wrapper: padding, parameter packing, tile sizing, BlockSpecs / grid.
# ----------------------------------------------------------------------------
def _round_up(x, m):
    return (x + m - 1) // m * m


def _vmem_capacity_bytes():
    try:
        return int(pltpu.get_tpu_info().vmem_capacity_bytes)
    except Exception:
        return 64 * 2**20        # conservative fallback (v7x per-core VMEM)


def _resident_bytes(n_pad, c_pad):
    # act(bf16) + Y(bf16) + Z(f32) + resident f32 output + dbl-buffered weights
    return (n_pad * c_pad * (2 + 2 + 4 + 4)
            + 2 * 2 * c_pad * c_pad * 2
            + 64 * 1024)


def _choose_row_tile(n_pad, c_pad, vmem_bytes):
    """Largest row tile whose (double-buffered) A slab fits the VMEM budget.

    If the whole adjacency fits, tm == n_pad: the A block index becomes
    constant and Pallas keeps A pinned in VMEM for the entire kernel.
    """
    budget = int(0.70 * vmem_bytes) - _resident_bytes(n_pad, c_pad)
    for tm in (n_pad, 2048, 1024, 512, 256):
        if tm <= n_pad and n_pad % tm == 0 and 2 * tm * n_pad * 2 <= budget:
            return tm
    return 128


def build_mean_adjacency(edge_index, num_nodes, padded_nodes=None):
    """Dense row-normalized adjacency: A[i, j] = (#edges j->i) / deg_in(i)."""
    n = num_nodes if padded_nodes is None else padded_nodes
    src, dst = edge_index[0], edge_index[1]
    A = jnp.zeros((n, n), jnp.float32)
    A = A.at[dst, src].add(1.0)
    deg = jnp.sum(A, axis=1, keepdims=True)
    return A / jnp.maximum(deg, 1.0)


def init_params(key, in_channels, hidden_channels, out_channels, num_layers):
    params = []
    c_in = in_channels
    for i in range(num_layers):
        c_out = out_channels if i == num_layers - 1 else hidden_channels
        key, k1, k2 = jax.random.split(key, 3)
        scale = 1.0 / jnp.sqrt(jnp.float32(c_in))
        w_l = jax.random.normal(k1, (c_in, c_out), jnp.float32) * scale
        w_r = jax.random.normal(k2, (c_in, c_out), jnp.float32) * scale
        b = jnp.zeros((c_out,), jnp.float32)
        gamma = jnp.ones((c_out,), jnp.float32)
        beta = jnp.zeros((c_out,), jnp.float32)
        params.append((w_l, w_r, b, gamma, beta))
        c_in = c_out
    return params


def supervised_sage_forward(params, x, edge_index, *, eps=1e-5, row_tile=None):
    n_real, c_in = x.shape
    num_layers = len(params)
    c_out_final = params[-1][0].shape[1]
    c_max = max([c_in] + [p[0].shape[1] for p in params])
    c_pad = _round_up(c_max, 128)          # lane-dense channels for the MXU
    n_pad = _round_up(n_real, 128)

    vmem_bytes = _vmem_capacity_bytes()
    tm = row_tile if row_tile is not None else _choose_row_tile(
        n_pad, c_pad, vmem_bytes)
    assert n_pad % tm == 0
    n_tiles = n_pad // tm

    # bf16 operands for the MXU (accumulation stays f32 inside the kernel).
    A = build_mean_adjacency(edge_index, n_real, n_pad).astype(jnp.bfloat16)
    x_pad = jnp.zeros((n_pad, c_pad), jnp.bfloat16)
    x_pad = x_pad.at[:n_real, :c_in].set(x.astype(jnp.bfloat16))

    # Stack per-layer params, zero-padded to c_pad; lin_l / lin_r are packed
    # along a leading axis so both linears stream as one per-layer block.
    w_stack = jnp.zeros((num_layers, 2, c_pad, c_pad), jnp.float32)
    b_stack = jnp.zeros((num_layers, 1, c_pad), jnp.float32)
    g_stack = jnp.zeros((num_layers, 1, c_pad), jnp.float32)
    bt_stack = jnp.zeros((num_layers, 1, c_pad), jnp.float32)
    for i, (w_l, w_r, b, g, bt) in enumerate(params):
        ci, co = w_l.shape
        w_stack = w_stack.at[i, 0, :ci, :co].set(w_l)
        w_stack = w_stack.at[i, 1, :ci, :co].set(w_r)
        b_stack = b_stack.at[i, 0, :co].set(b)
        g_stack = g_stack.at[i, 0, :co].set(g)
        bt_stack = bt_stack.at[i, 0, :co].set(bt)
    w_stack = w_stack.astype(jnp.bfloat16)

    # VMEM footprint -> scoped limit, capped at ~80% of physical capacity
    # (so ~51 MiB on v7x, <=100 MiB on v5e/v6e).
    est = 2 * tm * n_pad * 2 + _resident_bytes(n_pad, c_pad)
    cap = max(32 * 2**20, min(int(0.80 * vmem_bytes), 100 * 2**20))
    vmem_limit = int(min(max(2 * est, 32 * 2**20), cap))

    kernel = functools.partial(fused_sage_kernel, n_real=n_real, tm=tm, eps=eps)

    grid_spec = pltpu.PrefetchScalarGridSpec(
        num_scalar_prefetch=0,
        grid=(num_layers, n_tiles),
        in_specs=[
            pl.BlockSpec((tm, n_pad), lambda l, t: (t, 0)),        # A row tiles
            pl.BlockSpec(memory_space=pl.ANY),                     # x (HBM, DMA once)
            pl.BlockSpec((1, 2, c_pad, c_pad), lambda l, t: (l, 0, 0, 0)),
            pl.BlockSpec((1, 1, c_pad), lambda l, t: (l, 0, 0)),   # bias
            pl.BlockSpec((1, 1, c_pad), lambda l, t: (l, 0, 0)),   # gamma
            pl.BlockSpec((1, 1, c_pad), lambda l, t: (l, 0, 0)),   # beta
        ],
        out_specs=pl.BlockSpec((n_pad, c_pad), lambda l, t: (0, 0)),  # resident
        scratch_shapes=[
            pltpu.VMEM((n_pad, c_pad), jnp.bfloat16),   # layer-input activations
            pltpu.VMEM((n_pad, c_pad), jnp.bfloat16),   # Y = act @ W_l
            pltpu.VMEM((n_pad, c_pad), jnp.float32),    # Z = act @ W_r + b
            pltpu.VMEM((1, c_pad), jnp.float32),        # BN sum
            pltpu.VMEM((1, c_pad), jnp.float32),        # BN sum of squares
            pltpu.SemaphoreType.DMA,                    # x seed DMA
        ],
    )

    out_pad = pl.pallas_call(
        kernel,
        out_shape=jax.ShapeDtypeStruct((n_pad, c_pad), jnp.float32),
        grid_spec=grid_spec,
        compiler_params=pltpu.CompilerParams(
            dimension_semantics=("arbitrary", "arbitrary"),
            vmem_limit_bytes=vmem_limit),
    )(A, x_pad, w_stack, b_stack, g_stack, bt_stack)

    return out_pad[:n_real, :c_out_final]


# ----------------------------------------------------------------------------
# Pure-JAX reference with the same bf16 casting points (sanity check).
# ----------------------------------------------------------------------------
def reference_forward(params, x, edge_index, eps=1e-5):
    n = x.shape[0]
    A = build_mean_adjacency(edge_index, n).astype(jnp.bfloat16)
    h = x.astype(jnp.bfloat16)
    num_layers = len(params)
    for i, (w_l, w_r, b, g, bt) in enumerate(params):
        y = jnp.dot(h, w_l.astype(jnp.bfloat16),
                    preferred_element_type=jnp.float32).astype(jnp.bfloat16)
        z = jnp.dot(h, w_r.astype(jnp.bfloat16),
                    preferred_element_type=jnp.float32) + b[None, :]
        out = jnp.dot(A, y, preferred_element_type=jnp.float32) + z
        if i < num_layers - 1:
            mean = jnp.mean(out, axis=0, keepdims=True)
            var = jnp.mean(out * out, axis=0, keepdims=True) - mean * mean
            out = (out - mean) * jax.lax.rsqrt(var + eps) * g[None, :] + bt[None, :]
            h = jnp.maximum(out, 0.0).astype(jnp.bfloat16)
        else:
            h = out
    return h


if __name__ == "__main__":
    key = jax.random.PRNGKey(0)

    # Small, module-consistent shapes (multi-layer path exercised).
    num_nodes = 300
    num_edges = 1200
    in_channels = 48
    hidden_channels = 64
    out_channels = 24
    num_layers = 3
    dropout = 0.0   # identity dropout -> deterministic forward

    key, kx, ke1, ke2, kp = jax.random.split(key, 5)
    x = jax.random.normal(kx, (num_nodes, in_channels), jnp.float32)
    src = jax.random.randint(ke1, (num_edges,), 0, num_nodes, jnp.int32)
    dst = jax.random.randint(ke2, (num_edges,), 0, num_nodes, jnp.int32)
    edge_index = jnp.stack([src, dst], axis=0)   # (2, E)

    params = init_params(kp, in_channels, hidden_channels, out_channels,
                         num_layers)

    ref = reference_forward(params, x, edge_index)

    # Path 1: auto tile size (A pinned in VMEM, one row tile per layer).
    out = supervised_sage_forward(params, x, edge_index)
    out = jax.block_until_ready(out)
    assert out.shape == (num_nodes, out_channels)
    err = float(jnp.max(jnp.abs(out - ref)))
    assert jnp.allclose(out, ref, atol=2e-2, rtol=2e-2), (
        f"pinned-A path mismatch vs reference, max abs err {err:.3e}")

    # Path 2: forced small row tile (exercises the streamed multi-tile BN path).
    out_tiled = supervised_sage_forward(params, x, edge_index, row_tile=128)
    out_tiled = jax.block_until_ready(out_tiled)
    err_t = float(jnp.max(jnp.abs(out_tiled - ref)))
    assert jnp.allclose(out_tiled, ref, atol=2e-2, rtol=2e-2), (
        f"tiled path mismatch vs reference, max abs err {err_t:.3e}")

    print("KERNEL_OK")
</pallas_src>

<mosaic_0001>
module attributes {stable_mosaic.version = 11 : i64} {
  func.func @fused_sage_kernel(%arg0: i32, %arg1: i32, %arg2: memref<384x384xbf16, #tpu.memory_space<vmem>>, %arg3: memref<384x128xbf16, #tpu.memory_space<any>>, %arg4: memref<1x2x128x128xbf16, #tpu.memory_space<vmem>>, %arg5: memref<1x1x128xf32, #tpu.memory_space<vmem>>, %arg6: memref<1x1x128xf32, #tpu.memory_space<vmem>>, %arg7: memref<1x1x128xf32, #tpu.memory_space<vmem>>, %arg8: memref<384x128xf32, #tpu.memory_space<vmem>>, %arg9: memref<384x128xbf16, #tpu.memory_space<vmem>>, %arg10: memref<384x128xbf16, #tpu.memory_space<vmem>>, %arg11: memref<384x128xf32, #tpu.memory_space<vmem>>, %arg12: memref<1x128xf32, #tpu.memory_space<vmem>>, %arg13: memref<1x128xf32, #tpu.memory_space<vmem>>, %arg14: memref<!tpu.dma_semaphore, #tpu.memory_space<semaphore_mem>>) attributes {dimension_semantics = [#tpu.dimension_semantics<arbitrary>, #tpu.dimension_semantics<arbitrary>], iteration_bounds = array<i64: 3, 1>, scalar_prefetch = 0 : i64, scratch_operands = 6 : i64, tpu.core_type = #tpu.core_type<tc>, window_params = [{transform_indices = @transform_0, window_bounds = array<i64: 384, 384>}, {}, {transform_indices = @transform_2, window_bounds = array<i64: 1, 2, 128, 128>}, {transform_indices = @transform_3, window_bounds = array<i64: 1, 1, 128>}, {transform_indices = @transform_4, window_bounds = array<i64: 1, 1, 128>}, {transform_indices = @transform_5, window_bounds = array<i64: 1, 1, 128>}, {pipeline_mode = #tpu.pipeline_mode<synchronous>, transform_indices = @transform_6, window_bounds = array<i64: 384, 128>}]} {
    %c384_i32 = arith.constant 384 : i32
    %0 = arith.muli %arg1, %c384_i32 : i32
    %1 = tpu.assume_multiple %0, 384 : i32
    %c2_i32 = arith.constant 2 : i32
    %2 = arith.cmpi slt, %arg0, %c2_i32 : i32
    %c0_i32 = arith.constant 0 : i32
    %3 = arith.cmpi eq, %arg0, %c0_i32 : i32
    %c0_i32_0 = arith.constant 0 : i32
    %4 = arith.cmpi eq, %arg1, %c0_i32_0 : i32
    %5 = arith.andi %3, %4 : i1
    %6 = arith.extui %5 : i1 to i32
    %c0_i32_1 = arith.constant 0 : i32
    %7 = arith.cmpi ne, %6, %c0_i32_1 : i32
    scf.if %7 {
      tpu.enqueue_dma source(%arg3 : memref<384x128xbf16, #tpu.memory_space<any>>) target(%arg9 : memref<384x128xbf16, #tpu.memory_space<vmem>>) target_semaphore(%arg14 : memref<!tpu.dma_semaphore, #tpu.memory_space<semaphore_mem>>)
      tpu.wait_dma2 semaphore(%arg14 : memref<!tpu.dma_semaphore, #tpu.memory_space<semaphore_mem>>) src(%arg3 : memref<384x128xbf16, #tpu.memory_space<any>>) dst(%arg9 : memref<384x128xbf16, #tpu.memory_space<vmem>>)
    } else {
    }
    %c0_i32_2 = arith.constant 0 : i32
    %8 = arith.cmpi eq, %arg1, %c0_i32_2 : i32
    %9 = arith.extui %8 : i1 to i32
    %c0_i32_3 = arith.constant 0 : i32
    %10 = arith.cmpi ne, %9, %c0_i32_3 : i32
    scf.if %10 {
      %c0_12 = arith.constant 0 : index
      %c0_13 = arith.constant 0 : index
      %25 = vector.load %arg9[%c0_12, %c0_13] : memref<384x128xbf16, #tpu.memory_space<vmem>>, vector<384x128xbf16>
      %c0_14 = arith.constant 0 : index
      %c0_15 = arith.constant 0 : index
      %c0_16 = arith.constant 0 : index
      %c0_17 = arith.constant 0 : index
      %26 = vector.load %arg4[%c0_14, %c0_15, %c0_16, %c0_17] : memref<1x2x128x128xbf16, #tpu.memory_space<vmem>>, vector<1x1x128x128xbf16>
      %27 = vector.shape_cast %26 : vector<1x1x128x128xbf16> to vector<128x128xbf16>
      %cst_18 = arith.constant dense<0.000000e+00> : vector<384x128xf32>
      %28 = tpu.matmul %25, %27, %cst_18 {dimension_numbers = #tpu.dot_dimension_numbers<[1], [0], [0], [1], [0, 0, 1, 1], [], []>} : vector<384x128xbf16>, vector<128x128xbf16>, vector<384x128xf32> -> vector<384x128xf32>
      %29 = arith.truncf %28 : vector<384x128xf32> to vector<384x128xbf16>
      %c0_19 = arith.constant 0 : index
      %c0_20 = arith.constant 0 : index
      %30 = vector.load %arg10[%c0_19, %c0_20] : memref<384x128xbf16, #tpu.memory_space<vmem>>, vector<384x128xbf16>
      tpu.vector_store %arg10[%c0_19, %c0_20], %29 {strides = array<i32>} : memref<384x128xbf16, #tpu.memory_space<vmem>>, vector<384x128xbf16>,
      %c0_21 = arith.constant 0 : index
      %c1 = arith.constant 1 : index
      %c0_22 = arith.constant 0 : index
      %c0_23 = arith.constant 0 : index
      %31 = vector.load %arg4[%c0_21, %c1, %c0_22, %c0_23] : memref<1x2x128x128xbf16, #tpu.memory_space<vmem>>, vector<1x1x128x128xbf16>
      %32 = vector.shape_cast %31 : vector<1x1x128x128xbf16> to vector<128x128xbf16>
      %cst_24 = arith.constant dense<0.000000e+00> : vector<384x128xf32>
      %33 = tpu.matmul %25, %32, %cst_24 {dimension_numbers = #tpu.dot_dimension_numbers<[1], [0], [0], [1], [0, 0, 1, 1], [], []>} : vector<384x128xbf16>, vector<128x128xbf16>, vector<384x128xf32> -> vector<384x128xf32>
      %c0_25 = arith.constant 0 : index
      %c0_26 = arith.constant 0 : index
      %c0_27 = arith.constant 0 : index
      %34 = vector.load %arg5[%c0_25, %c0_26, %c0_27] : memref<1x1x128xf32, #tpu.memory_space<vmem>>, vector<1x1x128xf32>
      %35 = vector.shape_cast %34 : vector<1x1x128xf32> to vector<1x128xf32>
      %36 = vector.broadcast %35 : vector<1x128xf32> to vector<384x128xf32>
      %37 = arith.addf %33, %36 : vector<384x128xf32>
      %c0_28 = arith.constant 0 : index
      %c0_29 = arith.constant 0 : index
      %38 = vector.load %arg11[%c0_28, %c0_29] : memref<384x128xf32, #tpu.memory_space<vmem>>, vector<384x128xf32>
      tpu.vector_store %arg11[%c0_28, %c0_29], %37 {strides = array<i32>} : memref<384x128xf32, #tpu.memory_space<vmem>>, vector<384x128xf32>,
      %cst_30 = arith.constant 0.000000e+00 : f32
      %39 = vector.broadcast %cst_30 : f32 to vector<1x128xf32>
      %c0_31 = arith.constant 0 : index
      %c0_32 = arith.constant 0 : index
      %40 = vector.load %arg12[%c0_31, %c0_32] : memref<1x128xf32, #tpu.memory_space<vmem>>, vector<1x128xf32>
      tpu.vector_store %arg12[%c0_31, %c0_32], %39 {strides = array<i32>} : memref<1x128xf32, #tpu.memory_space<vmem>>, vector<1x128xf32>,
      %cst_33 = arith.constant 0.000000e+00 : f32
      %41 = vector.broadcast %cst_33 : f32 to vector<1x128xf32>
      %c0_34 = arith.constant 0 : index
      %c0_35 = arith.constant 0 : index
      %42 = vector.load %arg13[%c0_34, %c0_35] : memref<1x128xf32, #tpu.memory_space<vmem>>, vector<1x128xf32>
      tpu.vector_store %arg13[%c0_34, %c0_35], %41 {strides = array<i32>} : memref<1x128xf32, #tpu.memory_space<vmem>>, vector<1x128xf32>,
    } else {
    }
    %c0 = arith.constant 0 : index
    %c0_4 = arith.constant 0 : index
    %11 = vector.load %arg2[%c0, %c0_4] : memref<384x384xbf16, #tpu.memory_space<vmem>>, vector<384x384xbf16>
    %c0_5 = arith.constant 0 : index
    %c0_6 = arith.constant 0 : index
    %12 = vector.load %arg10[%c0_5, %c0_6] : memref<384x128xbf16, #tpu.memory_space<vmem>>, vector<384x128xbf16>
    %cst = arith.constant dense<0.000000e+00> : vector<384x128xf32>
    %13 = tpu.matmul %11, %12, %cst {dimension_numbers = #tpu.dot_dimension_numbers<[1], [0], [0], [1], [0, 0, 1, 1], [], []>} : vector<384x384xbf16>, vector<384x128xbf16>, vector<384x128xf32> -> vector<384x128xf32>
    %14 = arith.index_cast %1 : i32 to index
    %c0_7 = arith.constant 0 : index
    %15 = vector.load %arg11[%14, %c0_7] : memref<384x128xf32, #tpu.memory_space<vmem>>, vector<384x128xf32>
    %16 = arith.addf %13, %15 : vector<384x128xf32>
    %17 = arith.index_cast %1 : i32 to index
    %c0_8 = arith.constant 0 : index
    %18 = vector.load %arg8[%17, %c0_8] : memref<384x128xf32, #tpu.memory_space<vmem>>, vector<384x128xf32>
    tpu.vector_store %arg8[%17, %c0_8], %16 {strides = array<i32>} : memref<384x128xf32, #tpu.memory_space<vmem>>, vector<384x128xf32>,
    %19 = arith.extui %2 : i1 to i32
    %c0_i32_9 = arith.constant 0 : i32
    %20 = arith.cmpi ne, %19, %c0_i32_9 : i32
    scf.if %20 {
      %25 = tpu.iota {dimensions = array<i32: 0>} : vector<384x1xi32>
      %26 = vector.broadcast %1 : i32 to vector<384x1xi32>
      %27 = arith.addi %25, %26 : vector<384x1xi32>
      %c300_i32 = arith.constant 300 : i32
      %28 = vector.broadcast %c300_i32 : i32 to vector<384x1xi32>
      %29 = arith.cmpi slt, %27, %28 : vector<384x1xi32>
      %cst_12 = arith.constant 0.000000e+00 : f32
      %30 = vector.shape_cast %29 : vector<384x1xi1> to vector<384x1xi1>
      %31 = vector.broadcast %30 : vector<384x1xi1> to vector<384x128xi1>
      %32 = vector.broadcast %cst_12 : f32 to vector<384x128xf32>
      %33 = arith.select %31, %16, %32 : vector<384x128xi1>, vector<384x128xf32>
      %c0_13 = arith.constant 0 : index
      %c0_14 = arith.constant 0 : index
      %34 = vector.load %arg12[%c0_13, %c0_14] : memref<1x128xf32, #tpu.memory_space<vmem>>, vector<1x128xf32>
      %cst_15 = arith.constant dense<0.000000e+00> : vector<128xf32>
      %35 = vector.multi_reduction <add>, %33, %cst_15 [0] : vector<384x128xf32> to vector<128xf32>
      %36 = vector.shape_cast %35 : vector<128xf32> to vector<1x128xf32>
      %37 = arith.addf %34, %36 : vector<1x128xf32>
      %c0_16 = arith.constant 0 : index
      %c0_17 = arith.constant 0 : index
      %38 = vector.load %arg12[%c0_16, %c0_17] : memref<1x128xf32, #tpu.memory_space<vmem>>, vector<1x128xf32>
      tpu.vector_store %arg12[%c0_16, %c0_17], %37 {strides = array<i32>} : memref<1x128xf32, #tpu.memory_space<vmem>>, vector<1x128xf32>,
      %c0_18 = arith.constant 0 : index
      %c0_19 = arith.constant 0 : index
      %39 = vector.load %arg13[%c0_18, %c0_19] : memref<1x128xf32, #tpu.memory_space<vmem>>, vector<1x128xf32>
      %40 = arith.mulf %33, %33 : vector<384x128xf32>
      %cst_20 = arith.constant dense<0.000000e+00> : vector<128xf32>
      %41 = vector.multi_reduction <add>, %40, %cst_20 [0] : vector<384x128xf32> to vector<128xf32>
      %42 = vector.shape_cast %41 : vector<128xf32> to vector<1x128xf32>
      %43 = arith.addf %39, %42 : vector<1x128xf32>
      %c0_21 = arith.constant 0 : index
      %c0_22 = arith.constant 0 : index
      %44 = vector.load %arg13[%c0_21, %c0_22] : memref<1x128xf32, #tpu.memory_space<vmem>>, vector<1x128xf32>
      tpu.vector_store %arg13[%c0_21, %c0_22], %43 {strides = array<i32>} : memref<1x128xf32, #tpu.memory_space<vmem>>, vector<1x128xf32>,
    } else {
    }
    %c0_i32_10 = arith.constant 0 : i32
    %21 = arith.cmpi eq, %arg1, %c0_i32_10 : i32
    %22 = arith.andi %2, %21 : i1
    %23 = arith.extui %22 : i1 to i32
    %c0_i32_11 = arith.constant 0 : i32
    %24 = arith.cmpi ne, %23, %c0_i32_11 : i32
    scf.if %24 {
      %c0_12 = arith.constant 0 : index
      %c0_13 = arith.constant 0 : index
      %25 = vector.load %arg8[%c0_12, %c0_13] : memref<384x128xf32, #tpu.memory_space<vmem>>, vector<384x128xf32>
      %c0_14 = arith.constant 0 : index
      %c0_15 = arith.constant 0 : index
      %26 = vector.load %arg12[%c0_14, %c0_15] : memref<1x128xf32, #tpu.memory_space<vmem>>, vector<1x128xf32>
      %cst_16 = arith.constant 0.00333333341 : f32
      %27 = vector.broadcast %cst_16 : f32 to vector<1x128xf32>
      %28 = arith.mulf %26, %27 : vector<1x128xf32>
      %c0_17 = arith.constant 0 : index
      %c0_18 = arith.constant 0 : index
      %29 = vector.load %arg13[%c0_17, %c0_18] : memref<1x128xf32, #tpu.memory_space<vmem>>, vector<1x128xf32>
      %cst_19 = arith.constant 0.00333333341 : f32
      %30 = vector.broadcast %cst_19 : f32 to vector<1x128xf32>
      %31 = arith.mulf %29, %30 : vector<1x128xf32>
      %32 = arith.mulf %28, %28 : vector<1x128xf32>
      %33 = arith.subf %31, %32 : vector<1x128xf32>
      %34 = vector.broadcast %28 : vector<1x128xf32> to vector<384x128xf32>
      %35 = arith.subf %25, %34 : vector<384x128xf32>
      %cst_20 = arith.constant 9.99999974E-6 : f32
      %36 = vector.broadcast %cst_20 : f32 to vector<1x128xf32>
      %37 = arith.addf %33, %36 : vector<1x128xf32>
      %38 = math.rsqrt %37 : vector<1x128xf32>
      %39 = vector.broadcast %38 : vector<1x128xf32> to vector<384x128xf32>
      %40 = arith.mulf %35, %39 : vector<384x128xf32>
      %c0_21 = arith.constant 0 : index
      %c0_22 = arith.constant 0 : index
      %c0_23 = arith.constant 0 : index
      %41 = vector.load %arg6[%c0_21, %c0_22, %c0_23] : memref<1x1x128xf32, #tpu.memory_space<vmem>>, vector<1x1x128xf32>
      %42 = vector.shape_cast %41 : vector<1x1x128xf32> to vector<1x128xf32>
      %43 = vector.broadcast %42 : vector<1x128xf32> to vector<384x128xf32>
      %44 = arith.mulf %40, %43 : vector<384x128xf32>
      %c0_24 = arith.constant 0 : index
      %c0_25 = arith.constant 0 : index
      %c0_26 = arith.constant 0 : index
      %45 = vector.load %arg7[%c0_24, %c0_25, %c0_26] : memref<1x1x128xf32, #tpu.memory_space<vmem>>, vector<1x1x128xf32>
      %46 = vector.shape_cast %45 : vector<1x1x128xf32> to vector<1x128xf32>
      %47 = vector.broadcast %46 : vector<1x128xf32> to vector<384x128xf32>
      %48 = arith.addf %44, %47 : vector<384x128xf32>
      %49 = tpu.iota {dimensions = array<i32: 0>} : vector<384x1xi32>
      %c300_i32 = arith.constant 300 : i32
      %50 = vector.broadcast %c300_i32 : i32 to vector<384x1xi32>
      %51 = arith.cmpi slt, %49, %50 : vector<384x1xi32>
      %cst_27 = arith.constant 0.000000e+00 : f32
      %52 = vector.broadcast %cst_27 : f32 to vector<384x128xf32>
      %53 = arith.maximumf %48, %52 : vector<384x128xf32>
      %cst_28 = arith.constant 0.000000e+00 : f32
      %54 = vector.shape_cast %51 : vector<384x1xi1> to vector<384x1xi1>
      %55 = vector.broadcast %54 : vector<384x1xi1> to vector<384x128xi1>
      %56 = vector.broadcast %cst_28 : f32 to vector<384x128xf32>
      %57 = arith.select %55, %53, %56 : vector<384x128xi1>, vector<384x128xf32>
      %58 = arith.truncf %57 : vector<384x128xf32> to vector<384x128xbf16>
      %c0_29 = arith.constant 0 : index
      %c0_30 = arith.constant 0 : index
      %59 = vector.load %arg9[%c0_29, %c0_30] : memref<384x128xbf16, #tpu.memory_space<vmem>>, vector<384x128xbf16>
      tpu.vector_store %arg9[%c0_29, %c0_30], %58 {strides = array<i32>} : memref<384x128xbf16, #tpu.memory_space<vmem>>, vector<384x128xbf16>,
    } else {
    }
    return
  }
  func.func @transform_0(%arg0: i32, %arg1: i32) -> (i32, i32) {
    %c0_i32 = arith.constant 0 : i32
    %c0_i32_0 = arith.constant 0 : i32
    return %arg1, %c0_i32 : i32, i32
  }
  func.func @transform_2(%arg0: i32, %arg1: i32) -> (i32, i32, i32, i32) {
    %c0_i32 = arith.constant 0 : i32
    %c0_i32_0 = arith.constant 0 : i32
    %c0_i32_1 = arith.constant 0 : i32
    %c0_i32_2 = arith.constant 0 : i32
    return %arg0, %c0_i32, %c0_i32_0, %c0_i32_1 : i32, i32, i32, i32
  }
  func.func @transform_3(%arg0: i32, %arg1: i32) -> (i32, i32, i32) {
    %c0_i32 = arith.constant 0 : i32
    %c0_i32_0 = arith.constant 0 : i32
    %c0_i32_1 = arith.constant 0 : i32
    return %arg0, %c0_i32, %c0_i32_0 : i32, i32, i32
  }
  func.func @transform_4(%arg0: i32, %arg1: i32) -> (i32, i32, i32) {
    %c0_i32 = arith.constant 0 : i32
    %c0_i32_0 = arith.constant 0 : i32
    %c0_i32_1 = arith.constant 0 : i32
    return %arg0, %c0_i32, %c0_i32_0 : i32, i32, i32
  }
  func.func @transform_5(%arg0: i32, %arg1: i32) -> (i32, i32, i32) {
    %c0_i32 = arith.constant 0 : i32
    %c0_i32_0 = arith.constant 0 : i32
    %c0_i32_1 = arith.constant 0 : i32
    return %arg0, %c0_i32, %c0_i32_0 : i32, i32, i32
  }
  func.func @transform_6(%arg0: i32, %arg1: i32) -> (i32, i32) {
    %c0_i32 = arith.constant 0 : i32
    %c0_i32_0 = arith.constant 0 : i32
    %c0_i32_1 = arith.constant 0 : i32
    return %c0_i32, %c0_i32_0 : i32, i32
  }
}

</mosaic_0001>

<llo_original>
// kernel: tpu_custom_call.1
$region0: #{tpu_custom_call.1}
  #allocation0 [shape = 'u32[]', space=smem, size = 0x4, offset = 0x4, fixed_abs, tag = 'smem constant byte address 0x4 - core index']
  #allocation1 [shape = 'u32[144,128]{1,0:T(1,128)}', space=vmem, size = 0x12000, scoped, tag = 'internal scratch']
  #allocation2 [shape = 'bf16[384,128]{1,0:T(8,128)(2,1)}', space=vmem, size = 0x18000, scoped, tag = 'scratch operand']
  #allocation3 [shape = 'bf16[384,128]{1,0:T(8,128)(2,1)}', space=vmem, size = 0x18000, scoped, tag = 'scratch operand']
  #allocation4 [shape = 'f32[384,128]{1,0:T(8,128)}', space=vmem, size = 0x30000, scoped, tag = 'scratch operand']
  #allocation5 [shape = 'f32[1,128]{1,0:T(1,128)}', space=vmem, size = 0x200, scoped, tag = 'scratch operand']
  #allocation6 [shape = 'f32[1,128]{1,0:T(1,128)}', space=vmem, size = 0x200, scoped, tag = 'scratch operand']
  #allocation7 [shape = 's32[1]{0}', space=sflag, size = 0x4, scoped, tag = 'scratch operand']
  #allocation14 [shape = 's32[]', space=sflag, size = 0x4, offset = 0, fixed_abs, tag = 'sflag constant byte address 0x0 - dummy sync flag']
  #allocation15 [shape = 's32[]', space=sflag, size = 0x4, offset = 0, fixed_abs, tag = 'sflag constant byte address 0x0 - dummy sync flag']
  #allocation16 [shape = 'u32[]', space=smem, size = 0x4, offset = 0x44, fixed_abs, tag = 'smem constant byte address 0x44 - assertion arg 0']
  #allocation17 [shape = 'u32[]', space=smem, size = 0x4, offset = 0x48, fixed_abs, tag = 'smem constant byte address 0x48 - assertion arg 1']
  %s0 = inlined_call_operand.hbm [shape: bf16[384,384], index: 0, kind: input, shape index: {}]
  %s1 = inlined_call_operand.hbm [shape: bf16[384,128], index: 1, kind: input, shape index: {}]
  %s2 = inlined_call_operand.hbm [shape: bf16[3,2,128,128], index: 2, kind: input, shape index: {}]
  %s3 = inlined_call_operand.vmem [shape: f32[3,1,128], index: 3, kind: input, shape index: {}]
  %s4 = inlined_call_operand.vmem [shape: f32[3,1,128], index: 4, kind: input, shape index: {}]
  %s5 = inlined_call_operand.vmem [shape: f32[3,1,128], index: 5, kind: input, shape index: {}]
  %s6 = inlined_call_operand.hbm [shape: f32[384,128], index: 6, kind: output, shape index: {}]
  %s7 = sld [smem:[#allocation0]]
  $region81: #{tpu_custom_call.1} parent=0
    _
  %s9 = ssub.s32 1, %s7
  %s10 = scalar_select 0, %s9, %s7
  $region1: #{tpu_custom_call.1} parent=0
    #allocation8 [shape = 'u8[294912]{0}', space=vmem, size = 0x48000, scoped, tag = 'input window, operand 0, single buffered']
    #allocation9 [shape = 's32[2]{0}', space=sflag, size = 0x8, scoped, tag = 'scoped memory for tpu_custom_call.1']
    #allocation10 [shape = 's32[2]{0}', space=sflag, size = 0x8, scoped, tag = 'scoped memory for tpu_custom_call.1']
    #allocation11 [shape = 'u8[131072]{0}', space=vmem, size = 0x20000, scoped, tag = 'input window, operand 2']
    #allocation12 [shape = 's32[2]{0}', space=sflag, size = 0x8, scoped, tag = 'scoped memory for tpu_custom_call.1']
    #allocation13 [shape = 'u8[196608]{0}', space=vmem, size = 0x30000, scoped, tag = 'output window, operand 0, single buffered']
    %11 = vsyncpa [#allocation9], 0
    %12 = vsyncpa [#allocation12], 0
    %s13 = scalar_lea.sflag [#allocation12], 1
    %14 = vsyncpa %s13, 0
    %15 = vsyncpa [#allocation10], 0
    loop: start=0, step=1, limit=5
    $region2: #{tpu_custom_call.1} parent=1 // loop_pre_header
      _
    $region3: #{tpu_custom_call.1} parent=1 // loop_header
      %s17 = sphi 0, %s21
      %p18 = scmp.ge.s32.totalorder %s17, 5
      %s24 = sphi 0, %s36
      %s25 = sphi 0, %s32
      %s26 = sphi 0, %s24
      %s27 = sphi 0, %s25
      %s28 = sphi 0, %s26
      %s29 = sphi 0, %s27
      %s39 = sphi 0, %s41
      %s42 = sphi 0, %s39
      %s43 = sphi 0, %s42
      %s59 = sphi 0, %s43
      %s65 = sphi 0, %s67
      %s68 = sphi 0, %s65
      %s69 = sphi 0, %s68
      %s85 = sphi 0, %s69
      %s91 = sphi 0, %s93
      %s94 = sphi 0, %s91
      %s95 = sphi 0, %s94
      %s111 = sphi 0, %s95
      %s117 = sphi 0, %s119
      %s120 = sphi 0, %s117
      %s121 = sphi 0, %s120
      %s137 = sphi 0, %s121
      %s143 = sphi 0, %s145
      %s146 = sphi 0, %s143
      %s147 = sphi 0, %s146
      %s163 = sphi 0, %s147
      %s167 = sphi 0, %s167
      %s169 = sphi 0, %s167
      %s170 = sphi 0, %s169
      %s184 = sphi 0, %s170
    $region4: #{tpu_custom_call.1} parent=1 // loop_header_branch
      %20 = sbr.rel (%p18) target = $region8
    $region5: #{tpu_custom_call.1} parent=1 // loop_body
      %s22 = ssub.s32 %s17, 1
      %s23 = ssub.s32 %s17, 2
      %s30 = sadd.s32 1, %s25
      %p31 = scmp.ge.s32.totalorder %s30, 1
      %s32 = scalar_select %p31, 0, %s30
      %s33 = sadd.s32 1, %s24
      %s34 = scalar_select %p31, %s33, %s24
      %p35 = scmp.ge.s32.totalorder %s34, 3
      %s36 = scalar_select %p35, 0, %s34
      %s37 = ssub.s32 %s25, %s32
      %p38 = scmp.eq.s32.totalorder %s37, 0
      %s40 = sadd.s32 %s39, 1
      %s41 = scalar_select %p38, %s39, %s40
      %p44 = pneg %p38
      %p45 = scmp.eq.s32.totalorder %s17, 2
      %p46 = por %p44, %p45
      %p47 = scmp.ne.s32.totalorder %s39, %s42
      %p48 = scmp.eq.s32.totalorder %s17, 0
      %p49 = por %p47, %p48
      %p50 = scmp.ne.s32.totalorder %s39, %s42
      %p51 = scmp.eq.s32.totalorder %s22, 2
      %p52 = por %p50, %p51
      %p53 = scmp.ne.s32.totalorder %s42, %s43
      %p54 = scmp.eq.s32.totalorder %s22, 0
      %p55 = por %p53, %p54
      %p56 = scmp.ne.s32.totalorder %s42, %s43
      %p57 = scmp.eq.s32.totalorder %s23, 2
      %p58 = por %p56, %p57
      %p60 = scmp.ne.s32.totalorder %s43, %s59
      %p61 = scmp.eq.s32.totalorder %s23, 0
      %p62 = por %p60, %p61
      %s63 = ssub.s32 %s24, %s36
      %p64 = scmp.eq.s32.totalorder %s63, 0
      %s66 = sadd.s32 %s65, 1
      %s67 = scalar_select %p64, %s65, %s66
      %p70 = pneg %p64
      %p71 = scmp.eq.s32.totalorder %s17, 2
      %p72 = por %p70, %p71
      %p73 = scmp.ne.s32.totalorder %s65, %s68
      %p74 = scmp.eq.s32.totalorder %s17, 0
      %p75 = por %p73, %p74
      %p76 = scmp.ne.s32.totalorder %s65, %s68
      %p77 = scmp.eq.s32.totalorder %s22, 2
      %p78 = por %p76, %p77
      %p79 = scmp.ne.s32.totalorder %s68, %s69
      %p80 = scmp.eq.s32.totalorder %s22, 0
      %p81 = por %p79, %p80
      %p82 = scmp.ne.s32.totalorder %s68, %s69
      %p83 = scmp.eq.s32.totalorder %s23, 2
      %p84 = por %p82, %p83
      %p86 = scmp.ne.s32.totalorder %s69, %s85
      %p87 = scmp.eq.s32.totalorder %s23, 0
      %p88 = por %p86, %p87
      %s89 = ssub.s32 %s24, %s36
      %p90 = scmp.eq.s32.totalorder %s89, 0
      %s92 = sadd.s32 %s91, 1
      %s93 = scalar_select %p90, %s91, %s92
      %p96 = pneg %p90
      %p97 = scmp.eq.s32.totalorder %s17, 2
      %p98 = por %p96, %p97
      %p99 = scmp.ne.s32.totalorder %s91, %s94
      %p100 = scmp.eq.s32.totalorder %s17, 0
      %p101 = por %p99, %p100
      %p102 = scmp.ne.s32.totalorder %s91, %s94
      %p103 = scmp.eq.s32.totalorder %s22, 2
      %p104 = por %p102, %p103
      %p105 = scmp.ne.s32.totalorder %s94, %s95
      %p106 = scmp.eq.s32.totalorder %s22, 0
      %p107 = por %p105, %p106
      %p108 = scmp.ne.s32.totalorder %s94, %s95
      %p109 = scmp.eq.s32.totalorder %s23, 2
      %p110 = por %p108, %p109
      %p112 = scmp.ne.s32.totalorder %s95, %s111
      %p113 = scmp.eq.s32.totalorder %s23, 0
      %p114 = por %p112, %p113
      %s115 = ssub.s32 %s24, %s36
      %p116 = scmp.eq.s32.totalorder %s115, 0
      %s118 = sadd.s32 %s117, 1
      %s119 = scalar_select %p116, %s117, %s118
      %p122 = pneg %p116
      %p123 = scmp.eq.s32.totalorder %s17, 2
      %p124 = por %p122, %p123
      %p125 = scmp.ne.s32.totalorder %s117, %s120
      %p126 = scmp.eq.s32.totalorder %s17, 0
      %p127 = por %p125, %p126
      %p128 = scmp.ne.s32.totalorder %s117, %s120
      %p129 = scmp.eq.s32.totalorder %s22, 2
      %p130 = por %p128, %p129
      %p131 = scmp.ne.s32.totalorder %s120, %s121
      %p132 = scmp.eq.s32.totalorder %s22, 0
      %p133 = por %p131, %p132
      %p134 = scmp.ne.s32.totalorder %s120, %s121
      %p135 = scmp.eq.s32.totalorder %s23, 2
      %p136 = por %p134, %p135
      %p138 = scmp.ne.s32.totalorder %s121, %s137
      %p139 = scmp.eq.s32.totalorder %s23, 0
      %p140 = por %p138, %p139
      %s141 = ssub.s32 %s24, %s36
      %p142 = scmp.eq.s32.totalorder %s141, 0
      %s144 = sadd.s32 %s143, 1
      %s145 = scalar_select %p142, %s143, %s144
      %p148 = pneg %p142
      %p149 = scmp.eq.s32.totalorder %s17, 2
      %p150 = por %p148, %p149
      %p151 = scmp.ne.s32.totalorder %s143, %s146
      %p152 = scmp.eq.s32.totalorder %s17, 0
      %p153 = por %p151, %p152
      %p154 = scmp.ne.s32.totalorder %s143, %s146
      %p155 = scmp.eq.s32.totalorder %s22, 2
      %p156 = por %p154, %p155
      %p157 = scmp.ne.s32.totalorder %s146, %s147
      %p158 = scmp.eq.s32.totalorder %s22, 0
      %p159 = por %p157, %p158
      %p160 = scmp.ne.s32.totalorder %s146, %s147
      %p161 = scmp.eq.s32.totalorder %s23, 2
      %p162 = por %p160, %p161
      %p164 = scmp.ne.s32.totalorder %s147, %s163
      %p165 = scmp.eq.s32.totalorder %s23, 0
      %p166 = por %p164, %p165
      %s168 = sadd.s32 %s167, 1
      %p171 = scmp.eq.s32.totalorder %s17, 2
      %p172 = scmp.ne.s32.totalorder %s167, %s169
      %p173 = scmp.eq.s32.totalorder %s17, 0
      %p174 = por %p172, %p173
      %p175 = scmp.ne.s32.totalorder %s167, %s169
      %p176 = scmp.eq.s32.totalorder %s22, 2
      %p177 = por %p175, %p176
      %p178 = scmp.ne.s32.totalorder %s169, %s170
      %p179 = scmp.eq.s32.totalorder %s22, 0
      %p180 = por %p178, %p179
      %p181 = scmp.ne.s32.totalorder %s169, %s170
      %p182 = scmp.eq.s32.totalorder %s23, 2
      %p183 = por %p181, %p182
      %p185 = scmp.ne.s32.totalorder %s170, %s184
      %p186 = scmp.eq.s32.totalorder %s23, 0
      %p187 = por %p185, %p186
      %p188 = scmp.le.s32.totalorder 1, %s17
      %p189 = scmp.lt.s32.totalorder %s17, 4
      %p190 = pnand %p188, %p189
      %p191 = pneg %p190
      // Predicated region
      $region9: #{tpu_custom_call.1} parent=5 // pred_check
        _
      $region10: #{tpu_custom_call.1} parent=5 // pred_check_branch
        %193 = sbr.rel (%p190) target = $region12
      $region11: #{tpu_custom_call.1} parent=5 // pred_region
        %s194 = ssub.s32 %s17, 1
        // Predicated region
        $region13: #{tpu_custom_call.1} parent=11 // pred_check
          %p195 = pneg %p55
        $region14: #{tpu_custom_call.1} parent=11 // pred_check_branch
          %197 = sbr.rel (%p195) target = $region16
        $region15: #{tpu_custom_call.1} parent=11 // pred_region
          %s198 = smul.u32 48, %s27
          %s200 = ssub.s32 9216, 9216
          %201 = vsyncadd [#allocation9], %s200
          %s202 = smul.addr %s198, 3
          %s203 = smul.addr %s202, 64
          %s204 = scalar_lea.hbm %s0, %s203
          %s205 = sshll.u32 [#allocation8], 4
          %s206 = int_to_ptr.vmem [resolvable:$true] %s205
          %211 = dma.hbm_to_vmem [thread:$0]  %s204, 9216, %s206, [#allocation9], 192, 192, 12
        $region16: #{tpu_custom_call.1} parent=11 // pred_fallthru
          _
      $region12: #{tpu_custom_call.1} parent=5 // pred_fallthru
        _
      %p212 = scmp.lt.s32.totalorder %s17, 3
      // Predicated region
      $region17: #{tpu_custom_call.1} parent=5 // pred_check
        %p213 = pneg %p212
      $region18: #{tpu_custom_call.1} parent=5 // pred_check_branch
        %215 = sbr.rel (%p213) target = $region20
      $region19: #{tpu_custom_call.1} parent=5 // pred_region
        // Predicated region
        $region21: #{tpu_custom_call.1} parent=19 // pred_check
          %p216 = pneg %p75
        $region22: #{tpu_custom_call.1} parent=19 // pred_check_branch
          %218 = sbr.rel (%p216) target = $region24
        $region23: #{tpu_custom_call.1} parent=19 // pred_region
          %s219 = sand.u32 %s65, 1
          %s220 = scalar_lea.sflag [#allocation12], %s219
          %s221 = sand.u32 %s65, 1
          %s222 = smul.addr %s221, 128
          %s223 = scalar_lea.vmem [#allocation11], %s222
          %s225 = ssub.s32 2048, 2048
          %226 = vsyncadd %s220, %s225
          %s227 = smul.addr %s24, 32
          %s228 = smul.addr %s227, 64
          %s229 = scalar_lea.hbm %s2, %s228
          %s230 = sshll.u32 %s223, 4
          %s231 = int_to_ptr.vmem [resolvable:$true] %s230
          %236 = dma.hbm_to_vmem [thread:$0]  %s229, 2048, %s231, %s220, 64, 64, 4
        $region24: #{tpu_custom_call.1} parent=19 // pred_fallthru
          _
        // Predicated region
        $region25: #{tpu_custom_call.1} parent=19 // pred_check
          %p237 = pneg %p101
        $region26: #{tpu_custom_call.1} parent=19 // pred_check_branch
          %239 = sbr.rel (%p237) target = $region28
        $region27: #{tpu_custom_call.1} parent=19 // pred_region
          %p240 = scmp.lt.s32.totalorder %s24, 2
          %s241 = scalar_select %p240, %s24, 2
          %s242 = scalar_lea.vmem %s3, %s241
        $region28: #{tpu_custom_call.1} parent=19 // pred_fallthru
          _
        // Predicated region
        $region29: #{tpu_custom_call.1} parent=19 // pred_check
          %p243 = pneg %p127
        $region30: #{tpu_custom_call.1} parent=19 // pred_check_branch
          %245 = sbr.rel (%p243) target = $region32
        $region31: #{tpu_custom_call.1} parent=19 // pred_region
          %p246 = scmp.lt.s32.totalorder %s24, 2
          %s247 = scalar_select %p246, %s24, 2
          %s248 = scalar_lea.vmem %s4, %s247
        $region32: #{tpu_custom_call.1} parent=19 // pred_fallthru
          _
        // Predicated region
        $region33: #{tpu_custom_call.1} parent=19 // pred_check
          %p249 = pneg %p153
        $region34: #{tpu_custom_call.1} parent=19 // pred_check_branch
          %251 = sbr.rel (%p249) target = $region36
        $region35: #{tpu_custom_call.1} parent=19 // pred_region
          %p252 = scmp.lt.s32.totalorder %s24, 2
          %s253 = scalar_select %p252, %s24, 2
          %s254 = scalar_lea.vmem %s5, %s253
        $region36: #{tpu_custom_call.1} parent=19 // pred_fallthru
          _
      $region20: #{tpu_custom_call.1} parent=5 // pred_fallthru
        _
      %p255 = scmp.le.s32.totalorder 1, %s17
      %p256 = scmp.lt.s32.totalorder %s17, 4
      %p257 = pnand %p255, %p256
      %p258 = pneg %p257
      // Predicated region
      $region37: #{tpu_custom_call.1} parent=5 // pred_check
        _
      $region38: #{tpu_custom_call.1} parent=5 // pred_check_branch
        %260 = sbr.rel (%p257) target = $region40
      $region39: #{tpu_custom_call.1} parent=5 // pred_region
        %s261 = ssub.s32 %s17, 1
        // Predicated region
        $region41: #{tpu_custom_call.1} parent=39 // pred_check
          %p262 = pneg %p55
        $region42: #{tpu_custom_call.1} parent=39 // pred_check_branch
          %264 = sbr.rel (%p262) target = $region44
        $region43: #{tpu_custom_call.1} parent=39 // pred_region
          %265 = dma.done [#allocation9], 9216
        $region44: #{tpu_custom_call.1} parent=39 // pred_fallthru
          _
        %s266 = sand.u32 %s68, 1
        %s267 = scalar_lea.sflag [#allocation12], %s266
        %s268 = sand.u32 %s68, 1
        %s269 = smul.addr %s268, 128
        %s270 = scalar_lea.vmem [#allocation11], %s269
        // Predicated region
        $region45: #{tpu_custom_call.1} parent=39 // pred_check
          %p271 = pneg %p81
        $region46: #{tpu_custom_call.1} parent=39 // pred_check_branch
          %273 = sbr.rel (%p271) target = $region48
        $region47: #{tpu_custom_call.1} parent=39 // pred_region
          %274 = dma.done %s267, 2048
        $region48: #{tpu_custom_call.1} parent=39 // pred_fallthru
          _
        %p275 = pneg %p55
        %p276 = pneg %p52
        %s277 = sand.u32 %s68, 1
        %s278 = scalar_lea.sflag [#allocation12], %s277
        %s279 = sand.u32 %s68, 1
        %s280 = smul.addr %s279, 128
        %s281 = scalar_lea.vmem [#allocation11], %s280
        %p282 = pneg %p81
        %p283 = pneg %p78
        %p284 = scmp.lt.s32.totalorder %s26, 2
        %s285 = scalar_select %p284, %s26, 2
        %s286 = scalar_lea.vmem %s3, %s285
        %p287 = pneg %p107
        %p288 = pneg %p104
        %p289 = scmp.lt.s32.totalorder %s26, 2
        %s290 = scalar_select %p289, %s26, 2
        %s291 = scalar_lea.vmem %s4, %s290
        %p292 = pneg %p133
        %p293 = pneg %p130
        %p294 = scmp.lt.s32.totalorder %s26, 2
        %s295 = scalar_select %p294, %s26, 2
        %s296 = scalar_lea.vmem %s5, %s295
        %p297 = pneg %p159
        %p298 = pneg %p156
        %p299 = pneg %p180
        %p300 = pneg %p177
        %s301 = smul.u32 48, %s27
        %p302 = scmp.lt.s32.totalorder %s26, 2
        %s303 = scalar_select %p302, %s26, 2
        %s304 = scalar_lea.vmem %s3, %s303
        %p305 = scmp.lt.s32.totalorder %s26, 2
        %s306 = scalar_select %p305, %s26, 2
        %s307 = scalar_lea.vmem %s4, %s306
        %p308 = scmp.lt.s32.totalorder %s26, 2
        %s309 = scalar_select %p308, %s26, 2
        %s310 = scalar_lea.vmem %s5, %s309
        %s312 = smul.u32 %s27, 384
        %p313 = scmp.lt.s32.totalorder %s26, 2
        %p314 = scmp.eq.s32.totalorder %s26, 0
        %p315 = scmp.eq.s32.totalorder %s27, 0
        %p316 = pnand %p314, %p315
        %p317 = pneg %p316
        // Predicated region
        $region49: #{tpu_custom_call.1} parent=39 // pred_check
          _
        $region50: #{tpu_custom_call.1} parent=39 // pred_check_branch
          %319 = sbr.rel (%p316) target = $region52
        $region51: #{tpu_custom_call.1} parent=39 // pred_region
          // Predicated region
          $region53: #{tpu_custom_call.1} parent=51 // pred_check
            _
          $region54: #{tpu_custom_call.1} parent=51 // pred_check_branch
            %321 = sbr.rel target = $region56
          $region55: #{tpu_custom_call.1} parent=51 // pred_region
            %322 = sst [smem:[#allocation16]] [#allocation15]
            %323 = sst [smem:[#allocation17]] [#allocation14]
          $region56: #{tpu_custom_call.1} parent=51 // pred_fallthru
            _
          %325 = shalt.err (0)
          %s327 = sshll.u32 [#allocation2], 4
          %s328 = int_to_ptr.vmem [resolvable:$true] %s327
          %330 = dma.hbm_to_vmem [thread:$0]  %s1, 3072, %s328, [#allocation7]
          %s331 = smul.u32 4, 48
          %s332 = smul.u32 %s331, 1
          %s333 = sshll.u32 %s332, 4
          %334 = dma.done [#allocation7], %s333
        $region52: #{tpu_custom_call.1} parent=39 // pred_fallthru
          _
        // Predicated region
        $region57: #{tpu_custom_call.1} parent=39 // pred_check
          %p335 = pneg %p315
        $region58: #{tpu_custom_call.1} parent=39 // pred_check_branch
          %337 = sbr.rel (%p335) target = $region60
        $region59: #{tpu_custom_call.1} parent=39 // pred_region
          %v338 = vld [vmem:[#allocation2] sm:$0xf]
          %v339 = vld [vmem:[#allocation2 + $0x4] sm:$0xf]
          %v340 = vld [vmem:[#allocation2 + $0x8] sm:$0xf]
          %v341 = vld [vmem:[#allocation2 + $0xc] sm:$0xf]
          %v342 = vld [vmem:[#allocation2 + $0x10] sm:$0xf]
          %v343 = vld [vmem:[#allocation2 + $0x14] sm:$0xf]
          %v344 = vld [vmem:[#allocation2 + $0x18] sm:$0xf]
          %v345 = vld [vmem:[#allocation2 + $0x1c] sm:$0xf]
          %v346 = vld [vmem:[#allocation2 + $0x20] sm:$0xf]
          %v347 = vld [vmem:[#allocation2 + $0x24] sm:$0xf]
          %v348 = vld [vmem:[#allocation2 + $0x28] sm:$0xf]
          %v349 = vld [vmem:[#allocation2 + $0x2c] sm:$0xf]
          %v350 = vld [vmem:[#allocation2 + $0x30] sm:$0xf]
          %v351 = vld [vmem:[#allocation2 + $0x34] sm:$0xf]
          %v352 = vld [vmem:[#allocation2 + $0x38] sm:$0xf]
          %v353 = vld [vmem:[#allocation2 + $0x3c] sm:$0xf]
          %v354 = vld [vmem:[#allocation2 + $0x40] sm:$0xf]
          %v355 = vld [vmem:[#allocation2 + $0x44] sm:$0xf]
          %v356 = vld [vmem:[#allocation2 + $0x48] sm:$0xf]
          %v357 = vld [vmem:[#allocation2 + $0x4c] sm:$0xf]
          %v358 = vld [vmem:[#allocation2 + $0x50] sm:$0xf]
          %v359 = vld [vmem:[#allocation2 + $0x54] sm:$0xf]
          %v360 = vld [vmem:[#allocation2 + $0x58] sm:$0xf]
          %v361 = vld [vmem:[#allocation2 + $0x5c] sm:$0xf]
          %v362 = vld [vmem:[#allocation2 + $0x60] sm:$0xf]
          %v363 = vld [vmem:[#allocation2 + $0x64] sm:$0xf]
          %v364 = vld [vmem:[#allocation2 + $0x68] sm:$0xf]
          %v365 = vld [vmem:[#allocation2 + $0x6c] sm:$0xf]
          %v366 = vld [vmem:[#allocation2 + $0x70] sm:$0xf]
          %v367 = vld [vmem:[#allocation2 + $0x74] sm:$0xf]
          %v368 = vld [vmem:[#allocation2 + $0x78] sm:$0xf]
          %v369 = vld [vmem:[#allocation2 + $0x7c] sm:$0xf]
          %v370 = vld [vmem:[#allocation2 + $0x80] sm:$0xf]
          %v371 = vld [vmem:[#allocation2 + $0x84] sm:$0xf]
          %v372 = vld [vmem:[#allocation2 + $0x88] sm:$0xf]
          %v373 = vld [vmem:[#allocation2 + $0x8c] sm:$0xf]
          %v374 = vld [vmem:[#allocation2 + $0x90] sm:$0xf]
          %v375 = vld [vmem:[#allocation2 + $0x94] sm:$0xf]
          %v376 = vld [vmem:[#allocation2 + $0x98] sm:$0xf]
          %v377 = vld [vmem:[#allocation2 + $0x9c] sm:$0xf]
          %v378 = vld [vmem:[#allocation2 + $0xa0] sm:$0xf]
          %v379 = vld [vmem:[#allocation2 + $0xa4] sm:$0xf]
          %v380 = vld [vmem:[#allocation2 + $0xa8] sm:$0xf]
          %v381 = vld [vmem:[#allocation2 + $0xac] sm:$0xf]
          %v382 = vld [vmem:[#allocation2 + $0xb0] sm:$0xf]
          %v383 = vld [vmem:[#allocation2 + $0xb4] sm:$0xf]
          %v384 = vld [vmem:[#allocation2 + $0xb8] sm:$0xf]
          %v385 = vld [vmem:[#allocation2 + $0xbc] sm:$0xf]
          %v386 = vld [vmem:[%s270] sm:$0xf]
          %v387 = vld [vmem:[%s270 + $0x4] sm:$0xf]
          %v388 = vld [vmem:[%s270 + $0x8] sm:$0xf]
          %v389 = vld [vmem:[%s270 + $0xc] sm:$0xf]
          %v390 = vld [vmem:[%s270 + $0x10] sm:$0xf]
          %v391 = vld [vmem:[%s270 + $0x14] sm:$0xf]
          %v392 = vld [vmem:[%s270 + $0x18] sm:$0xf]
          %v393 = vld [vmem:[%s270 + $0x1c] sm:$0xf]
          %v394 = vld [vmem:[%s270 + $0x20] sm:$0xf]
          %v395 = vld [vmem:[%s270 + $0x24] sm:$0xf]
          %v396 = vld [vmem:[%s270 + $0x28] sm:$0xf]
          %v397 = vld [vmem:[%s270 + $0x2c] sm:$0xf]
          %v398 = vld [vmem:[%s270 + $0x30] sm:$0xf]
          %v399 = vld [vmem:[%s270 + $0x34] sm:$0xf]
          %v400 = vld [vmem:[%s270 + $0x38] sm:$0xf]
          %v401 = vld [vmem:[%s270 + $0x3c] sm:$0xf]
          %v450 = vunpack.c.l.b16 %v338
          %v451 = vunpack.c.l.b16 %v339
          %v452 = vunpack.c.l.b16 %v340
          %v453 = vunpack.c.l.b16 %v341
          %v454 = vunpack.c.l.b16 %v342
          %v455 = vunpack.c.l.b16 %v343
          %v456 = vunpack.c.l.b16 %v344
          %v457 = vunpack.c.l.b16 %v345
          %v458 = vunpack.c.l.b16 %v346
          %v459 = vunpack.c.l.b16 %v347
          %v460 = vunpack.c.l.b16 %v348
          %v461 = vunpack.c.l.b16 %v349
          %v462 = vunpack.c.l.b16 %v350
          %v463 = vunpack.c.l.b16 %v351
          %v464 = vunpack.c.l.b16 %v352
          %v465 = vunpack.c.l.b16 %v353
          %v466 = vunpack.c.l.b16 %v354
          %v467 = vunpack.c.l.b16 %v355
          %v468 = vunpack.c.l.b16 %v356
          %v469 = vunpack.c.l.b16 %v357
          %v470 = vunpack.c.l.b16 %v358
          %v471 = vunpack.c.l.b16 %v359
          %v472 = vunpack.c.l.b16 %v360
          %v473 = vunpack.c.l.b16 %v361
          %v474 = vunpack.c.l.b16 %v362
          %v475 = vunpack.c.l.b16 %v363
          %v476 = vunpack.c.l.b16 %v364
          %v477 = vunpack.c.l.b16 %v365
          %v478 = vunpack.c.l.b16 %v366
          %v479 = vunpack.c.l.b16 %v367
          %v480 = vunpack.c.l.b16 %v368
          %v481 = vunpack.c.l.b16 %v369
          %v482 = vunpack.c.l.b16 %v370
          %v483 = vunpack.c.l.b16 %v371
          %v484 = vunpack.c.l.b16 %v372
          %v485 = vunpack.c.l.b16 %v373
          %v486 = vunpack.c.l.b16 %v374
          %v487 = vunpack.c.l.b16 %v375
          %v488 = vunpack.c.l.b16 %v376
          %v489 = vunpack.c.l.b16 %v377
          %v490 = vunpack.c.l.b16 %v378
          %v491 = vunpack.c.l.b16 %v379
          %v492 = vunpack.c.l.b16 %v380
          %v493 = vunpack.c.l.b16 %v381
          %v494 = vunpack.c.l.b16 %v382
          %v495 = vunpack.c.l.b16 %v383
          %v496 = vunpack.c.l.b16 %v384
          %v497 = vunpack.c.l.b16 %v385
          %v498 = vpack.c.b16 %v451, %v450
          %v499 = vpack.c.b16 %v453, %v452
          %v500 = vpack.c.b16 %v455, %v454
          %v501 = vpack.c.b16 %v457, %v456
          %v502 = vpack.c.b16 %v459, %v458
          %v503 = vpack.c.b16 %v461, %v460
          %v504 = vpack.c.b16 %v463, %v462
          %v505 = vpack.c.b16 %v465, %v464
          %v506 = vpack.c.b16 %v467, %v466
          %v507 = vpack.c.b16 %v469, %v468
          %v508 = vpack.c.b16 %v471, %v470
          %v509 = vpack.c.b16 %v473, %v472
          %v510 = vpack.c.b16 %v475, %v474
          %v511 = vpack.c.b16 %v477, %v476
          %v512 = vpack.c.b16 %v479, %v478
          %v513 = vpack.c.b16 %v481, %v480
          %v514 = vpack.c.b16 %v483, %v482
          %v515 = vpack.c.b16 %v485, %v484
          %v516 = vpack.c.b16 %v487, %v486
          %v517 = vpack.c.b16 %v489, %v488
          %v518 = vpack.c.b16 %v491, %v490
          %v519 = vpack.c.b16 %v493, %v492
          %v520 = vpack.c.b16 %v495, %v494
          %v521 = vpack.c.b16 %v497, %v496
          %v562 = vunpack.c.l.b16 %v386
          %v563 = vunpack.c.l.b16 %v387
          %v564 = vunpack.c.l.b16 %v388
          %v565 = vunpack.c.l.b16 %v389
          %v566 = vunpack.c.l.b16 %v390
          %v567 = vunpack.c.l.b16 %v391
          %v568 = vunpack.c.l.b16 %v392
          %v569 = vunpack.c.l.b16 %v393
          %v570 = vunpack.c.l.b16 %v394
          %v571 = vunpack.c.l.b16 %v395
          %v572 = vunpack.c.l.b16 %v396
          %v573 = vunpack.c.l.b16 %v397
          %v574 = vunpack.c.l.b16 %v398
          %v575 = vunpack.c.l.b16 %v399
          %v576 = vunpack.c.l.b16 %v400
          %v577 = vunpack.c.l.b16 %v401
          %v578 = vpack.c.b16 %v563, %v562
          %v579 = vpack.c.b16 %v565, %v564
          %v580 = vpack.c.b16 %v567, %v566
          %v581 = vpack.c.b16 %v569, %v568
          %v582 = vpack.c.b16 %v571, %v570
          %v583 = vpack.c.b16 %v573, %v572
          %v584 = vpack.c.b16 %v575, %v574
          %v585 = vpack.c.b16 %v577, %v576
          %594 = vmatprep.subr.bf16.mxu0 0
          %595 = vmatpush1.bf16.msra.mxu0 %v585
          %596 = vmatprep.subr.bf16.mxu0 0
          %597 = vmatpush1.bf16.msra.mxu0 %v584
          %598 = vmatprep.subr.bf16.mxu0 0
          %599 = vmatpush1.bf16.msra.mxu0 %v583
          %600 = vmatprep.subr.bf16.mxu0 0
          %601 = vmatpush1.bf16.msra.mxu0 %v582
          %602 = vmatprep.subr.bf16.mxu0 0
          %603 = vmatpush1.bf16.msra.mxu0 %v581
          %604 = vmatprep.subr.bf16.mxu0 0
          %605 = vmatpush1.bf16.msra.mxu0 %v580
          %606 = vmatprep.subr.bf16.mxu0 0
          %607 = vmatpush1.bf16.msra.mxu0 %v579
          %608 = vmatprep.subr.bf16.mxu0 0
          %609 = vmatpush1.bf16.msra.mxu0 %v578
          %610 = vmatprep.subr.bf16.mxu0 0
          %611 = vmatpush2.bf16.msra.mxu0 0
          %612 = vmatprep.subr.bf16.mxu0 0
          %613 = vmatpush2.bf16.msra.mxu0 0
          %614 = vmatprep.subr.bf16.mxu0 0
          %615 = vmatpush2.bf16.msra.mxu0 0
          %616 = vmatprep.subr.bf16.mxu0 0
          %617 = vmatpush2.bf16.msra.mxu0 0
          %618 = vmatprep.subr.bf16.mxu0 0
          %619 = vmatpush2.bf16.msra.mxu0 0
          %620 = vmatprep.subr.bf16.mxu0 0
          %621 = vmatpush2.bf16.msra.mxu0 0
          %622 = vmatprep.subr.bf16.mxu0 0
          %623 = vmatpush2.bf16.msra.mxu0 0
          %624 = vmatprep.subr.bf16.mxu0 0
          %625 = vmatpush2.bf16.msra.mxu0 0
          %626 = vmatprep.mubr.bf16.mxu0 0
          %627 = vmatmul.mubr.bf16.gmra.mxu0 %v498
          %v628 = vpop.f32.mrf.mxu0
          %v629 = vadd.f32 0.0, %v628
          %v630 = vpop.f32.mrf.mxu0
          %v631 = vpop.f32.mrf.mxu0
          %v632 = vadd.f32 0.0, %v631
          %v633 = vpop.f32.mrf.mxu0
          %634 = vmatprep.mubr.bf16.mxu0 0
          %635 = vmatmul.mubr.bf16.gmra.mxu0 %v499
          %v636 = vpop.f32.mrf.mxu0
          %v637 = vadd.f32 0.0, %v636
          %v638 = vpop.f32.mrf.mxu0
          %v639 = vpop.f32.mrf.mxu0
          %v640 = vadd.f32 0.0, %v639
          %v641 = vpop.f32.mrf.mxu0
          %642 = vmatprep.mubr.bf16.mxu0 0
          %643 = vmatmul.mubr.bf16.gmra.mxu0 %v500
          %v644 = vpop.f32.mrf.mxu0
          %v645 = vadd.f32 0.0, %v644
          %v646 = vpop.f32.mrf.mxu0
          %v647 = vpop.f32.mrf.mxu0
          %v648 = vadd.f32 0.0, %v647
          %v649 = vpop.f32.mrf.mxu0
          %650 = vmatprep.mubr.bf16.mxu0 0
          %651 = vmatmul.mubr.bf16.gmra.mxu0 %v501
          %v652 = vpop.f32.mrf.mxu0
          %v653 = vadd.f32 0.0, %v652
          %v654 = vpop.f32.mrf.mxu0
          %v655 = vpop.f32.mrf.mxu0
          %v656 = vadd.f32 0.0, %v655
          %v657 = vpop.f32.mrf.mxu0
          %658 = vmatprep.mubr.bf16.mxu0 0
          %659 = vmatmul.mubr.bf16.gmra.mxu0 %v502
          %v660 = vpop.f32.mrf.mxu0
          %v661 = vadd.f32 0.0, %v660
          %v662 = vpop.f32.mrf.mxu0
          %v663 = vpop.f32.mrf.mxu0
          %v664 = vadd.f32 0.0, %v663
          %v665 = vpop.f32.mrf.mxu0
          %666 = vmatprep.mubr.bf16.mxu0 0
          %667 = vmatmul.mubr.bf16.gmra.mxu0 %v503
          %v668 = vpop.f32.mrf.mxu0
          %v669 = vadd.f32 0.0, %v668
          %v670 = vpop.f32.mrf.mxu0
          %v671 = vpop.f32.mrf.mxu0
          %v672 = vadd.f32 0.0, %v671
          %v673 = vpop.f32.mrf.mxu0
          %674 = vmatprep.mubr.bf16.mxu0 0
          %675 = vmatmul.mubr.bf16.gmra.mxu0 %v504
          %v676 = vpop.f32.mrf.mxu0
          %v677 = vadd.f32 0.0, %v676
          %v678 = vpop.f32.mrf.mxu0
          %v679 = vpop.f32.mrf.mxu0
          %v680 = vadd.f32 0.0, %v679
          %v681 = vpop.f32.mrf.mxu0
          %682 = vmatprep.mubr.bf16.mxu0 0
          %683 = vmatmul.mubr.bf16.gmra.mxu0 %v505
          %v684 = vpop.f32.mrf.mxu0
          %v685 = vadd.f32 0.0, %v684
          %v686 = vpop.f32.mrf.mxu0
          %v687 = vpop.f32.mrf.mxu0
          %v688 = vadd.f32 0.0, %v687
          %v689 = vpop.f32.mrf.mxu0
          %690 = vmatprep.mubr.bf16.mxu0 0
          %691 = vmatmul.mubr.bf16.gmra.mxu0 %v506
          %v692 = vpop.f32.mrf.mxu0
          %v693 = vadd.f32 0.0, %v692
          %v694 = vpop.f32.mrf.mxu0
          %v695 = vpop.f32.mrf.mxu0
          %v696 = vadd.f32 0.0, %v695
          %v697 = vpop.f32.mrf.mxu0
          %698 = vmatprep.mubr.bf16.mxu0 0
          %699 = vmatmul.mubr.bf16.gmra.mxu0 %v507
          %v700 = vpop.f32.mrf.mxu0
          %v701 = vadd.f32 0.0, %v700
          %v702 = vpop.f32.mrf.mxu0
          %v703 = vpop.f32.mrf.mxu0
          %v704 = vadd.f32 0.0, %v703
          %v705 = vpop.f32.mrf.mxu0
          %706 = vmatprep.mubr.bf16.mxu0 0
          %707 = vmatmul.mubr.bf16.gmra.mxu0 %v508
          %v708 = vpop.f32.mrf.mxu0
          %v709 = vadd.f32 0.0, %v708
          %v710 = vpop.f32.mrf.mxu0
          %v711 = vpop.f32.mrf.mxu0
          %v712 = vadd.f32 0.0, %v711
          %v713 = vpop.f32.mrf.mxu0
          %714 = vmatprep.mubr.bf16.mxu0 0
          %715 = vmatmul.mubr.bf16.gmra.mxu0 %v509
          %v716 = vpop.f32.mrf.mxu0
          %v717 = vadd.f32 0.0, %v716
          %v718 = vpop.f32.mrf.mxu0
          %v719 = vpop.f32.mrf.mxu0
          %v720 = vadd.f32 0.0, %v719
          %v721 = vpop.f32.mrf.mxu0
          %722 = vmatprep.mubr.bf16.mxu0 0
          %723 = vmatmul.mubr.bf16.gmra.mxu0 %v510
          %v724 = vpop.f32.mrf.mxu0
          %v725 = vadd.f32 0.0, %v724
          %v726 = vpop.f32.mrf.mxu0
          %v727 = vpop.f32.mrf.mxu0
          %v728 = vadd.f32 0.0, %v727
          %v729 = vpop.f32.mrf.mxu0
          %730 = vmatprep.mubr.bf16.mxu0 0
          %731 = vmatmul.mubr.bf16.gmra.mxu0 %v511
          %v732 = vpop.f32.mrf.mxu0
          %v733 = vadd.f32 0.0, %v732
          %v734 = vpop.f32.mrf.mxu0
          %v735 = vpop.f32.mrf.mxu0
          %v736 = vadd.f32 0.0, %v735
          %v737 = vpop.f32.mrf.mxu0
          %738 = vmatprep.mubr.bf16.mxu0 0
          %739 = vmatmul.mubr.bf16.gmra.mxu0 %v512
          %v740 = vpop.f32.mrf.mxu0
          %v741 = vadd.f32 0.0, %v740
          %v742 = vpop.f32.mrf.mxu0
          %v743 = vpop.f32.mrf.mxu0
          %v744 = vadd.f32 0.0, %v743
          %v745 = vpop.f32.mrf.mxu0
          %746 = vmatprep.mubr.bf16.mxu0 0
          %747 = vmatmul.mubr.bf16.gmra.mxu0 %v513
          %v748 = vpop.f32.mrf.mxu0
          %v749 = vadd.f32 0.0, %v748
          %v750 = vpop.f32.mrf.mxu0
          %v751 = vpop.f32.mrf.mxu0
          %v752 = vadd.f32 0.0, %v751
          %v753 = vpop.f32.mrf.mxu0
          %754 = vmatprep.mubr.bf16.mxu0 0
          %755 = vmatmul.mubr.bf16.gmra.mxu0 %v514
          %v756 = vpop.f32.mrf.mxu0
          %v757 = vadd.f32 0.0, %v756
          %v758 = vpop.f32.mrf.mxu0
          %v759 = vpop.f32.mrf.mxu0
          %v760 = vadd.f32 0.0, %v759
          %v761 = vpop.f32.mrf.mxu0
          %762 = vmatprep.mubr.bf16.mxu0 0
          %763 = vmatmul.mubr.bf16.gmra.mxu0 %v515
          %v764 = vpop.f32.mrf.mxu0
          %v765 = vadd.f32 0.0, %v764
          %v766 = vpop.f32.mrf.mxu0
          %v767 = vpop.f32.mrf.mxu0
          %v768 = vadd.f32 0.0, %v767
          %v769 = vpop.f32.mrf.mxu0
          %770 = vmatprep.mubr.bf16.mxu0 0
          %771 = vmatmul.mubr.bf16.gmra.mxu0 %v516
          %v772 = vpop.f32.mrf.mxu0
          %v773 = vadd.f32 0.0, %v772
          %v774 = vpop.f32.mrf.mxu0
          %v775 = vpop.f32.mrf.mxu0
          %v776 = vadd.f32 0.0, %v775
          %v777 = vpop.f32.mrf.mxu0
          %778 = vmatprep.mubr.bf16.mxu0 0
          %779 = vmatmul.mubr.bf16.gmra.mxu0 %v517
          %v780 = vpop.f32.mrf.mxu0
          %v781 = vadd.f32 0.0, %v780
          %v782 = vpop.f32.mrf.mxu0
          %v783 = vpop.f32.mrf.mxu0
          %v784 = vadd.f32 0.0, %v783
          %v785 = vpop.f32.mrf.mxu0
          %786 = vmatprep.mubr.bf16.mxu0 0
          %787 = vmatmul.mubr.bf16.gmra.mxu0 %v518
          %v788 = vpop.f32.mrf.mxu0
          %v789 = vadd.f32 0.0, %v788
          %v790 = vpop.f32.mrf.mxu0
          %v791 = vpop.f32.mrf.mxu0
          %v792 = vadd.f32 0.0, %v791
          %v793 = vpop.f32.mrf.mxu0
          %794 = vmatprep.mubr.bf16.mxu0 0
          %795 = vmatmul.mubr.bf16.gmra.mxu0 %v519
          %v796 = vpop.f32.mrf.mxu0
          %v797 = vadd.f32 0.0, %v796
          %v798 = vpop.f32.mrf.mxu0
          %v799 = vpop.f32.mrf.mxu0
          %v800 = vadd.f32 0.0, %v799
          %v801 = vpop.f32.mrf.mxu0
          %802 = vmatprep.mubr.bf16.mxu0 0
          %803 = vmatmul.mubr.bf16.gmra.mxu0 %v520
          %v804 = vpop.f32.mrf.mxu0
          %v805 = vadd.f32 0.0, %v804
          %v806 = vpop.f32.mrf.mxu0
          %v807 = vpop.f32.mrf.mxu0
          %v808 = vadd.f32 0.0, %v807
          %v809 = vpop.f32.mrf.mxu0
          %810 = vmatprep.mubr.bf16.mxu0 0
          %811 = vmatmul.mubr.bf16.gmra.mxu0 %v521
          %v812 = vpop.f32.mrf.mxu0
          %v813 = vadd.f32 0.0, %v812
          %v814 = vpop.f32.mrf.mxu0
          %v815 = vpop.f32.mrf.mxu0
          %v816 = vadd.f32 0.0, %v815
          %v817 = vpop.f32.mrf.mxu0
          %818 = vdwg.mxu0
          %v819 = vpack.c.bf16 %v632, %v629
          %v820 = vpack.c.bf16 %v640, %v637
          %v821 = vpack.c.bf16 %v648, %v645
          %v822 = vpack.c.bf16 %v656, %v653
          %v823 = vpack.c.bf16 %v664, %v661
          %v824 = vpack.c.bf16 %v672, %v669
          %v825 = vpack.c.bf16 %v680, %v677
          %v826 = vpack.c.bf16 %v688, %v685
          %v827 = vpack.c.bf16 %v696, %v693
          %v828 = vpack.c.bf16 %v704, %v701
          %v829 = vpack.c.bf16 %v712, %v709
          %v830 = vpack.c.bf16 %v720, %v717
          %v831 = vpack.c.bf16 %v728, %v725
          %v832 = vpack.c.bf16 %v736, %v733
          %v833 = vpack.c.bf16 %v744, %v741
          %v834 = vpack.c.bf16 %v752, %v749
          %v835 = vpack.c.bf16 %v760, %v757
          %v836 = vpack.c.bf16 %v768, %v765
          %v837 = vpack.c.bf16 %v776, %v773
          %v838 = vpack.c.bf16 %v784, %v781
          %v839 = vpack.c.bf16 %v792, %v789
          %v840 = vpack.c.bf16 %v800, %v797
          %v841 = vpack.c.bf16 %v808, %v805
          %v842 = vpack.c.bf16 %v816, %v813
          %v867 = vunpack.c.l.b16 %v819
          %v868 = vunpack.c.h.b16 %v819
          %v869 = vunpack.c.l.b16 %v820
          %v870 = vunpack.c.h.b16 %v820
          %v871 = vunpack.c.l.b16 %v821
          %v872 = vunpack.c.h.b16 %v821
          %v873 = vunpack.c.l.b16 %v822
          %v874 = vunpack.c.h.b16 %v822
          %v875 = vunpack.c.l.b16 %v823
          %v876 = vunpack.c.h.b16 %v823
          %v877 = vunpack.c.l.b16 %v824
          %v878 = vunpack.c.h.b16 %v824
          %v879 = vunpack.c.l.b16 %v825
          %v880 = vunpack.c.h.b16 %v825
          %v881 = vunpack.c.l.b16 %v826
          %v882 = vunpack.c.h.b16 %v826
          %v883 = vunpack.c.l.b16 %v827
          %v884 = vunpack.c.h.b16 %v827
          %v885 = vunpack.c.l.b16 %v828
          %v886 = vunpack.c.h.b16 %v828
          %v887 = vunpack.c.l.b16 %v829
          %v888 = vunpack.c.h.b16 %v829
          %v889 = vunpack.c.l.b16 %v830
          %v890 = vunpack.c.h.b16 %v830
          %v891 = vunpack.c.l.b16 %v831
          %v892 = vunpack.c.h.b16 %v831
          %v893 = vunpack.c.l.b16 %v832
          %v894 = vunpack.c.h.b16 %v832
          %v895 = vunpack.c.l.b16 %v833
          %v896 = vunpack.c.h.b16 %v833
          %v897 = vunpack.c.l.b16 %v834
          %v898 = vunpack.c.h.b16 %v834
          %v899 = vunpack.c.l.b16 %v835
          %v900 = vunpack.c.h.b16 %v835
          %v901 = vunpack.c.l.b16 %v836
          %v902 = vunpack.c.h.b16 %v836
          %v903 = vunpack.c.l.b16 %v837
          %v904 = vunpack.c.h.b16 %v837
          %v905 = vunpack.c.l.b16 %v838
          %v906 = vunpack.c.h.b16 %v838
          %v907 = vunpack.c.l.b16 %v839
          %v908 = vunpack.c.h.b16 %v839
          %v909 = vunpack.c.l.b16 %v840
          %v910 = vunpack.c.h.b16 %v840
          %v911 = vunpack.c.l.b16 %v841
          %v912 = vunpack.c.h.b16 %v841
          %v913 = vunpack.c.l.b16 %v842
          %v914 = vunpack.c.h.b16 %v842
          %v915 = vpack.c.b16 %v867, %v867
          %v916 = vpack.c.b16 %v868, %v868
          %v917 = vpack.c.b16 %v869, %v869
          %v918 = vpack.c.b16 %v870, %v870
          %v919 = vpack.c.b16 %v871, %v871
          %v920 = vpack.c.b16 %v872, %v872
          %v921 = vpack.c.b16 %v873, %v873
          %v922 = vpack.c.b16 %v874, %v874
          %v923 = vpack.c.b16 %v875, %v875
          %v924 = vpack.c.b16 %v876, %v876
          %v925 = vpack.c.b16 %v877, %v877
          %v926 = vpack.c.b16 %v878, %v878
          %v927 = vpack.c.b16 %v879, %v879
          %v928 = vpack.c.b16 %v880, %v880
          %v929 = vpack.c.b16 %v881, %v881
          %v930 = vpack.c.b16 %v882, %v882
          %v931 = vpack.c.b16 %v883, %v883
          %v932 = vpack.c.b16 %v884, %v884
          %v933 = vpack.c.b16 %v885, %v885
          %v934 = vpack.c.b16 %v886, %v886
          %v935 = vpack.c.b16 %v887, %v887
          %v936 = vpack.c.b16 %v888, %v888
          %v937 = vpack.c.b16 %v889, %v889
          %v938 = vpack.c.b16 %v890, %v890
          %v939 = vpack.c.b16 %v891, %v891
          %v940 = vpack.c.b16 %v892, %v892
          %v941 = vpack.c.b16 %v893, %v893
          %v942 = vpack.c.b16 %v894, %v894
          %v943 = vpack.c.b16 %v895, %v895
          %v944 = vpack.c.b16 %v896, %v896
          %v945 = vpack.c.b16 %v897, %v897
          %v946 = vpack.c.b16 %v898, %v898
          %v947 = vpack.c.b16 %v899, %v899
          %v948 = vpack.c.b16 %v900, %v900
          %v949 = vpack.c.b16 %v901, %v901
          %v950 = vpack.c.b16 %v902, %v902
          %v951 = vpack.c.b16 %v903, %v903
          %v952 = vpack.c.b16 %v904, %v904
          %v953 = vpack.c.b16 %v905, %v905
          %v954 = vpack.c.b16 %v906, %v906
          %v955 = vpack.c.b16 %v907, %v907
          %v956 = vpack.c.b16 %v908, %v908
          %v957 = vpack.c.b16 %v909, %v909
          %v958 = vpack.c.b16 %v910, %v910
          %v959 = vpack.c.b16 %v911, %v911
          %v960 = vpack.c.b16 %v912, %v912
          %v961 = vpack.c.b16 %v913, %v913
          %v962 = vpack.c.b16 %v914, %v914
          %1011 = vst [vmem:[#allocation3] sm:$0xf] %v915
          %1012 = vst [vmem:[#allocation3 + $0x4] sm:$0xf] %v916
          %1013 = vst [vmem:[#allocation3 + $0x8] sm:$0xf] %v917
          %1014 = vst [vmem:[#allocation3 + $0xc] sm:$0xf] %v918
          %1015 = vst [vmem:[#allocation3 + $0x10] sm:$0xf] %v919
          %1016 = vst [vmem:[#allocation3 + $0x14] sm:$0xf] %v920
          %1017 = vst [vmem:[#allocation3 + $0x18] sm:$0xf] %v921
          %1018 = vst [vmem:[#allocation3 + $0x1c] sm:$0xf] %v922
          %1019 = vst [vmem:[#allocation3 + $0x20] sm:$0xf] %v923
          %1020 = vst [vmem:[#allocation3 + $0x24] sm:$0xf] %v924
          %1021 = vst [vmem:[#allocation3 + $0x28] sm:$0xf] %v925
          %1022 = vst [vmem:[#allocation3 + $0x2c] sm:$0xf] %v926
          %1023 = vst [vmem:[#allocation3 + $0x30] sm:$0xf] %v927
          %1024 = vst [vmem:[#allocation3 + $0x34] sm:$0xf] %v928
          %1025 = vst [vmem:[#allocation3 + $0x38] sm:$0xf] %v929
          %1026 = vst [vmem:[#allocation3 + $0x3c] sm:$0xf] %v930
          %1027 = vst [vmem:[#allocation3 + $0x40] sm:$0xf] %v931
          %1028 = vst [vmem:[#allocation3 + $0x44] sm:$0xf] %v932
          %1029 = vst [vmem:[#allocation3 + $0x48] sm:$0xf] %v933
          %1030 = vst [vmem:[#allocation3 + $0x4c] sm:$0xf] %v934
          %1031 = vst [vmem:[#allocation3 + $0x50] sm:$0xf] %v935
          %1032 = vst [vmem:[#allocation3 + $0x54] sm:$0xf] %v936
          %1033 = vst [vmem:[#allocation3 + $0x58] sm:$0xf] %v937
          %1034 = vst [vmem:[#allocation3 + $0x5c] sm:$0xf] %v938
          %1035 = vst [vmem:[#allocation3 + $0x60] sm:$0xf] %v939
          %1036 = vst [vmem:[#allocation3 + $0x64] sm:$0xf] %v940
          %1037 = vst [vmem:[#allocation3 + $0x68] sm:$0xf] %v941
          %1038 = vst [vmem:[#allocation3 + $0x6c] sm:$0xf] %v942
          %1039 = vst [vmem:[#allocation3 + $0x70] sm:$0xf] %v943
          %1040 = vst [vmem:[#allocation3 + $0x74] sm:$0xf] %v944
          %1041 = vst [vmem:[#allocation3 + $0x78] sm:$0xf] %v945
          %1042 = vst [vmem:[#allocation3 + $0x7c] sm:$0xf] %v946
          %1043 = vst [vmem:[#allocation3 + $0x80] sm:$0xf] %v947
          %1044 = vst [vmem:[#allocation3 + $0x84] sm:$0xf] %v948
          %1045 = vst [vmem:[#allocation3 + $0x88] sm:$0xf] %v949
          %1046 = vst [vmem:[#allocation3 + $0x8c] sm:$0xf] %v950
          %1047 = vst [vmem:[#allocation3 + $0x90] sm:$0xf] %v951
          %1048 = vst [vmem:[#allocation3 + $0x94] sm:$0xf] %v952
          %1049 = vst [vmem:[#allocation3 + $0x98] sm:$0xf] %v953
          %1050 = vst [vmem:[#allocation3 + $0x9c] sm:$0xf] %v954
          %1051 = vst [vmem:[#allocation3 + $0xa0] sm:$0xf] %v955
          %1052 = vst [vmem:[#allocation3 + $0xa4] sm:$0xf] %v956
          %1053 = vst [vmem:[#allocation3 + $0xa8] sm:$0xf] %v957
          %1054 = vst [vmem:[#allocation3 + $0xac] sm:$0xf] %v958
          %1055 = vst [vmem:[#allocation3 + $0xb0] sm:$0xf] %v959
          %1056 = vst [vmem:[#allocation3 + $0xb4] sm:$0xf] %v960
          %1057 = vst [vmem:[#allocation3 + $0xb8] sm:$0xf] %v961
          %1058 = vst [vmem:[#allocation3 + $0xbc] sm:$0xf] %v962
          %s1059 = scalar_lea.vmem %s270, 64 [#allocation11]
          %v1060 = vld [vmem:[%s1059] sm:$0xf]
          %v1061 = vld [vmem:[%s1059 + $0x4] sm:$0xf]
          %v1062 = vld [vmem:[%s1059 + $0x8] sm:$0xf]
          %v1063 = vld [vmem:[%s1059 + $0xc] sm:$0xf]
          %v1064 = vld [vmem:[%s1059 + $0x10] sm:$0xf]
          %v1065 = vld [vmem:[%s1059 + $0x14] sm:$0xf]
          %v1066 = vld [vmem:[%s1059 + $0x18] sm:$0xf]
          %v1067 = vld [vmem:[%s1059 + $0x1c] sm:$0xf]
          %v1068 = vld [vmem:[%s1059 + $0x20] sm:$0xf]
          %v1069 = vld [vmem:[%s1059 + $0x24] sm:$0xf]
          %v1070 = vld [vmem:[%s1059 + $0x28] sm:$0xf]
          %v1071 = vld [vmem:[%s1059 + $0x2c] sm:$0xf]
          %v1072 = vld [vmem:[%s1059 + $0x30] sm:$0xf]
          %v1073 = vld [vmem:[%s1059 + $0x34] sm:$0xf]
          %v1074 = vld [vmem:[%s1059 + $0x38] sm:$0xf]
          %v1075 = vld [vmem:[%s1059 + $0x3c] sm:$0xf]
          %v1076 = vld [vmem:[%s304] sm:$0x1]
          %v1078 = vlaneseq
          %v1079 = vshrl.u32 %v1078, 7
          %v1080 = vsub.s32 0, %v1079
          %v1081 = vrot.slane %v1076, %v1080
          %v1099 = vunpack.c.l.b16 %v1060
          %v1100 = vunpack.c.l.b16 %v1061
          %v1101 = vunpack.c.l.b16 %v1062
          %v1102 = vunpack.c.l.b16 %v1063
          %v1103 = vunpack.c.l.b16 %v1064
          %v1104 = vunpack.c.l.b16 %v1065
          %v1105 = vunpack.c.l.b16 %v1066
          %v1106 = vunpack.c.l.b16 %v1067
          %v1107 = vunpack.c.l.b16 %v1068
          %v1108 = vunpack.c.l.b16 %v1069
          %v1109 = vunpack.c.l.b16 %v1070
          %v1110 = vunpack.c.l.b16 %v1071
          %v1111 = vunpack.c.l.b16 %v1072
          %v1112 = vunpack.c.l.b16 %v1073
          %v1113 = vunpack.c.l.b16 %v1074
          %v1114 = vunpack.c.l.b16 %v1075
          %v1115 = vpack.c.b16 %v1100, %v1099
          %v1116 = vpack.c.b16 %v1102, %v1101
          %v1117 = vpack.c.b16 %v1104, %v1103
          %v1118 = vpack.c.b16 %v1106, %v1105
          %v1119 = vpack.c.b16 %v1108, %v1107
          %v1120 = vpack.c.b16 %v1110, %v1109
          %v1121 = vpack.c.b16 %v1112, %v1111
          %v1122 = vpack.c.b16 %v1114, %v1113
          %1131 = vmatprep.subr.bf16.mxu0 0
          %1132 = vmatpush1.bf16.msra.mxu0 %v1122
          %1133 = vmatprep.subr.bf16.mxu0 0
          %1134 = vmatpush1.bf16.msra.mxu0 %v1121
          %1135 = vmatprep.subr.bf16.mxu0 0
          %1136 = vmatpush1.bf16.msra.mxu0 %v1120
          %1137 = vmatprep.subr.bf16.mxu0 0
          %1138 = vmatpush1.bf16.msra.mxu0 %v1119
          %1139 = vmatprep.subr.bf16.mxu0 0
          %1140 = vmatpush1.bf16.msra.mxu0 %v1118
          %1141 = vmatprep.subr.bf16.mxu0 0
          %1142 = vmatpush1.bf16.msra.mxu0 %v1117
          %1143 = vmatprep.subr.bf16.mxu0 0
          %1144 = vmatpush1.bf16.msra.mxu0 %v1116
          %1145 = vmatprep.subr.bf16.mxu0 0
          %1146 = vmatpush1.bf16.msra.mxu0 %v1115
          %1147 = vmatprep.subr.bf16.mxu0 0
          %1148 = vmatpush2.bf16.msra.mxu0 0
          %1149 = vmatprep.subr.bf16.mxu0 0
          %1150 = vmatpush2.bf16.msra.mxu0 0
          %1151 = vmatprep.subr.bf16.mxu0 0
          %1152 = vmatpush2.bf16.msra.mxu0 0
          %1153 = vmatprep.subr.bf16.mxu0 0
          %1154 = vmatpush2.bf16.msra.mxu0 0
          %1155 = vmatprep.subr.bf16.mxu0 0
          %1156 = vmatpush2.bf16.msra.mxu0 0
          %1157 = vmatprep.subr.bf16.mxu0 0
          %1158 = vmatpush2.bf16.msra.mxu0 0
          %1159 = vmatprep.subr.bf16.mxu0 0
          %1160 = vmatpush2.bf16.msra.mxu0 0
          %1161 = vmatprep.subr.bf16.mxu0 0
          %1162 = vmatpush2.bf16.msra.mxu0 0
          %1163 = vmatprep.mubr.bf16.mxu0 0
          %1164 = vmatmul.mubr.bf16.gmra.mxu0 %v498
          %v1165 = vpop.f32.mrf.mxu0
          %v1166 = vadd.f32 %v1081, %v1165
          %v1167 = vpop.f32.mrf.mxu0
          %v1168 = vpop.f32.mrf.mxu0
          %v1169 = vadd.f32 %v1081, %v1168
          %v1170 = vpop.f32.mrf.mxu0
          %1171 = vmatprep.mubr.bf16.mxu0 0
          %1172 = vmatmul.mubr.bf16.gmra.mxu0 %v499
          %v1173 = vpop.f32.mrf.mxu0
          %v1174 = vadd.f32 %v1081, %v1173
          %v1175 = vpop.f32.mrf.mxu0
          %v1176 = vpop.f32.mrf.mxu0
          %v1177 = vadd.f32 %v1081, %v1176
          %v1178 = vpop.f32.mrf.mxu0
          %1179 = vmatprep.mubr.bf16.mxu0 0
          %1180 = vmatmul.mubr.bf16.gmra.mxu0 %v500
          %v1181 = vpop.f32.mrf.mxu0
          %v1182 = vadd.f32 %v1081, %v1181
          %v1183 = vpop.f32.mrf.mxu0
          %v1184 = vpop.f32.mrf.mxu0
          %v1185 = vadd.f32 %v1081, %v1184
          %v1186 = vpop.f32.mrf.mxu0
          %1187 = vmatprep.mubr.bf16.mxu0 0
          %1188 = vmatmul.mubr.bf16.gmra.mxu0 %v501
          %v1189 = vpop.f32.mrf.mxu0
          %v1190 = vadd.f32 %v1081, %v1189
          %v1191 = vpop.f32.mrf.mxu0
          %v1192 = vpop.f32.mrf.mxu0
          %v1193 = vadd.f32 %v1081, %v1192
          %v1194 = vpop.f32.mrf.mxu0
          %1195 = vmatprep.mubr.bf16.mxu0 0
          %1196 = vmatmul.mubr.bf16.gmra.mxu0 %v502
          %v1197 = vpop.f32.mrf.mxu0
          %v1198 = vadd.f32 %v1081, %v1197
          %v1199 = vpop.f32.mrf.mxu0
          %v1200 = vpop.f32.mrf.mxu0
          %v1201 = vadd.f32 %v1081, %v1200
          %v1202 = vpop.f32.mrf.mxu0
          %1203 = vmatprep.mubr.bf16.mxu0 0
          %1204 = vmatmul.mubr.bf16.gmra.mxu0 %v503
          %v1205 = vpop.f32.mrf.mxu0
          %v1206 = vadd.f32 %v1081, %v1205
          %v1207 = vpop.f32.mrf.mxu0
          %v1208 = vpop.f32.mrf.mxu0
          %v1209 = vadd.f32 %v1081, %v1208
          %v1210 = vpop.f32.mrf.mxu0
          %1211 = vmatprep.mubr.bf16.mxu0 0
          %1212 = vmatmul.mubr.bf16.gmra.mxu0 %v504
          %v1213 = vpop.f32.mrf.mxu0
          %v1214 = vadd.f32 %v1081, %v1213
          %v1215 = vpop.f32.mrf.mxu0
          %v1216 = vpop.f32.mrf.mxu0
          %v1217 = vadd.f32 %v1081, %v1216
          %v1218 = vpop.f32.mrf.mxu0
          %1219 = vmatprep.mubr.bf16.mxu0 0
          %1220 = vmatmul.mubr.bf16.gmra.mxu0 %v505
          %v1221 = vpop.f32.mrf.mxu0
          %v1222 = vadd.f32 %v1081, %v1221
          %v1223 = vpop.f32.mrf.mxu0
          %v1224 = vpop.f32.mrf.mxu0
          %v1225 = vadd.f32 %v1081, %v1224
          %v1226 = vpop.f32.mrf.mxu0
          %1227 = vmatprep.mubr.bf16.mxu0 0
          %1228 = vmatmul.mubr.bf16.gmra.mxu0 %v506
          %v1229 = vpop.f32.mrf.mxu0
          %v1230 = vadd.f32 %v1081, %v1229
          %v1231 = vpop.f32.mrf.mxu0
          %v1232 = vpop.f32.mrf.mxu0
          %v1233 = vadd.f32 %v1081, %v1232
          %v1234 = vpop.f32.mrf.mxu0
          %1235 = vmatprep.mubr.bf16.mxu0 0
          %1236 = vmatmul.mubr.bf16.gmra.mxu0 %v507
          %v1237 = vpop.f32.mrf.mxu0
          %v1238 = vadd.f32 %v1081, %v1237
          %v1239 = vpop.f32.mrf.mxu0
          %v1240 = vpop.f32.mrf.mxu0
          %v1241 = vadd.f32 %v1081, %v1240
          %v1242 = vpop.f32.mrf.mxu0
          %1243 = vmatprep.mubr.bf16.mxu0 0
          %1244 = vmatmul.mubr.bf16.gmra.mxu0 %v508
          %v1245 = vpop.f32.mrf.mxu0
          %v1246 = vadd.f32 %v1081, %v1245
          %v1247 = vpop.f32.mrf.mxu0
          %v1248 = vpop.f32.mrf.mxu0
          %v1249 = vadd.f32 %v1081, %v1248
          %v1250 = vpop.f32.mrf.mxu0
          %1251 = vmatprep.mubr.bf16.mxu0 0
          %1252 = vmatmul.mubr.bf16.gmra.mxu0 %v509
          %v1253 = vpop.f32.mrf.mxu0
          %v1254 = vadd.f32 %v1081, %v1253
          %v1255 = vpop.f32.mrf.mxu0
          %v1256 = vpop.f32.mrf.mxu0
          %v1257 = vadd.f32 %v1081, %v1256
          %v1258 = vpop.f32.mrf.mxu0
          %1259 = vmatprep.mubr.bf16.mxu0 0
          %1260 = vmatmul.mubr.bf16.gmra.mxu0 %v510
          %v1261 = vpop.f32.mrf.mxu0
          %v1262 = vadd.f32 %v1081, %v1261
          %v1263 = vpop.f32.mrf.mxu0
          %v1264 = vpop.f32.mrf.mxu0
          %v1265 = vadd.f32 %v1081, %v1264
          %v1266 = vpop.f32.mrf.mxu0
          %1267 = vmatprep.mubr.bf16.mxu0 0
          %1268 = vmatmul.mubr.bf16.gmra.mxu0 %v511
          %v1269 = vpop.f32.mrf.mxu0
          %v1270 = vadd.f32 %v1081, %v1269
          %v1271 = vpop.f32.mrf.mxu0
          %v1272 = vpop.f32.mrf.mxu0
          %v1273 = vadd.f32 %v1081, %v1272
          %v1274 = vpop.f32.mrf.mxu0
          %1275 = vmatprep.mubr.bf16.mxu0 0
          %1276 = vmatmul.mubr.bf16.gmra.mxu0 %v512
          %v1277 = vpop.f32.mrf.mxu0
          %v1278 = vadd.f32 %v1081, %v1277
          %v1279 = vpop.f32.mrf.mxu0
          %v1280 = vpop.f32.mrf.mxu0
          %v1281 = vadd.f32 %v1081, %v1280
          %v1282 = vpop.f32.mrf.mxu0
          %1283 = vmatprep.mubr.bf16.mxu0 0
          %1284 = vmatmul.mubr.bf16.gmra.mxu0 %v513
          %v1285 = vpop.f32.mrf.mxu0
          %v1286 = vadd.f32 %v1081, %v1285
          %v1287 = vpop.f32.mrf.mxu0
          %v1288 = vpop.f32.mrf.mxu0
          %v1289 = vadd.f32 %v1081, %v1288
          %v1290 = vpop.f32.mrf.mxu0
          %1291 = vmatprep.mubr.bf16.mxu0 0
          %1292 = vmatmul.mubr.bf16.gmra.mxu0 %v514
          %v1293 = vpop.f32.mrf.mxu0
          %v1294 = vadd.f32 %v1081, %v1293
          %v1295 = vpop.f32.mrf.mxu0
          %v1296 = vpop.f32.mrf.mxu0
          %v1297 = vadd.f32 %v1081, %v1296
          %v1298 = vpop.f32.mrf.mxu0
          %1299 = vmatprep.mubr.bf16.mxu0 0
          %1300 = vmatmul.mubr.bf16.gmra.mxu0 %v515
          %v1301 = vpop.f32.mrf.mxu0
          %v1302 = vadd.f32 %v1081, %v1301
          %v1303 = vpop.f32.mrf.mxu0
          %v1304 = vpop.f32.mrf.mxu0
          %v1305 = vadd.f32 %v1081, %v1304
          %v1306 = vpop.f32.mrf.mxu0
          %1307 = vmatprep.mubr.bf16.mxu0 0
          %1308 = vmatmul.mubr.bf16.gmra.mxu0 %v516
          %v1309 = vpop.f32.mrf.mxu0
          %v1310 = vadd.f32 %v1081, %v1309
          %v1311 = vpop.f32.mrf.mxu0
          %v1312 = vpop.f32.mrf.mxu0
          %v1313 = vadd.f32 %v1081, %v1312
          %v1314 = vpop.f32.mrf.mxu0
          %1315 = vmatprep.mubr.bf16.mxu0 0
          %1316 = vmatmul.mubr.bf16.gmra.mxu0 %v517
          %v1317 = vpop.f32.mrf.mxu0
          %v1318 = vadd.f32 %v1081, %v1317
          %v1319 = vpop.f32.mrf.mxu0
          %v1320 = vpop.f32.mrf.mxu0
          %v1321 = vadd.f32 %v1081, %v1320
          %v1322 = vpop.f32.mrf.mxu0
          %1323 = vmatprep.mubr.bf16.mxu0 0
          %1324 = vmatmul.mubr.bf16.gmra.mxu0 %v518
          %v1325 = vpop.f32.mrf.mxu0
          %v1326 = vadd.f32 %v1081, %v1325
          %v1327 = vpop.f32.mrf.mxu0
          %v1328 = vpop.f32.mrf.mxu0
          %v1329 = vadd.f32 %v1081, %v1328
          %v1330 = vpop.f32.mrf.mxu0
          %1331 = vmatprep.mubr.bf16.mxu0 0
          %1332 = vmatmul.mubr.bf16.gmra.mxu0 %v519
          %v1333 = vpop.f32.mrf.mxu0
          %v1334 = vadd.f32 %v1081, %v1333
          %v1335 = vpop.f32.mrf.mxu0
          %v1336 = vpop.f32.mrf.mxu0
          %v1337 = vadd.f32 %v1081, %v1336
          %v1338 = vpop.f32.mrf.mxu0
          %1339 = vmatprep.mubr.bf16.mxu0 0
          %1340 = vmatmul.mubr.bf16.gmra.mxu0 %v520
          %v1341 = vpop.f32.mrf.mxu0
          %v1342 = vadd.f32 %v1081, %v1341
          %v1343 = vpop.f32.mrf.mxu0
          %v1344 = vpop.f32.mrf.mxu0
          %v1345 = vadd.f32 %v1081, %v1344
          %v1346 = vpop.f32.mrf.mxu0
          %1347 = vmatprep.mubr.bf16.mxu0 0
          %1348 = vmatmul.mubr.bf16.gmra.mxu0 %v521
          %v1349 = vpop.f32.mrf.mxu0
          %v1350 = vadd.f32 %v1081, %v1349
          %v1351 = vpop.f32.mrf.mxu0
          %v1352 = vpop.f32.mrf.mxu0
          %v1353 = vadd.f32 %v1081, %v1352
          %v1354 = vpop.f32.mrf.mxu0
          %1355 = vdwg.mxu0
          %1356 = vst [vmem:[#allocation4] sm:$0xff] %v1166
          %1357 = vst [vmem:[#allocation4 + $0x8] sm:$0xff] %v1169
          %1358 = vst [vmem:[#allocation4 + $0x10] sm:$0xff] %v1174
          %1359 = vst [vmem:[#allocation4 + $0x18] sm:$0xff] %v1177
          %1360 = vst [vmem:[#allocation4 + $0x20] sm:$0xff] %v1182
          %1361 = vst [vmem:[#allocation4 + $0x28] sm:$0xff] %v1185
          %1362 = vst [vmem:[#allocation4 + $0x30] sm:$0xff] %v1190
          %1363 = vst [vmem:[#allocation4 + $0x38] sm:$0xff] %v1193
          %1364 = vst [vmem:[#allocation4 + $0x40] sm:$0xff] %v1198
          %1365 = vst [vmem:[#allocation4 + $0x48] sm:$0xff] %v1201
          %1366 = vst [vmem:[#allocation4 + $0x50] sm:$0xff] %v1206
          %1367 = vst [vmem:[#allocation4 + $0x58] sm:$0xff] %v1209
          %1368 = vst [vmem:[#allocation4 + $0x60] sm:$0xff] %v1214
          %1369 = vst [vmem:[#allocation4 + $0x68] sm:$0xff] %v1217
          %1370 = vst [vmem:[#allocation4 + $0x70] sm:$0xff] %v1222
          %1371 = vst [vmem:[#allocation4 + $0x78] sm:$0xff] %v1225
          %1372 = vst [vmem:[#allocation4 + $0x80] sm:$0xff] %v1230
          %1373 = vst [vmem:[#allocation4 + $0x88] sm:$0xff] %v1233
          %1374 = vst [vmem:[#allocation4 + $0x90] sm:$0xff] %v1238
          %1375 = vst [vmem:[#allocation4 + $0x98] sm:$0xff] %v1241
          %1376 = vst [vmem:[#allocation4 + $0xa0] sm:$0xff] %v1246
          %1377 = vst [vmem:[#allocation4 + $0xa8] sm:$0xff] %v1249
          %1378 = vst [vmem:[#allocation4 + $0xb0] sm:$0xff] %v1254
          %1379 = vst [vmem:[#allocation4 + $0xb8] sm:$0xff] %v1257
          %1380 = vst [vmem:[#allocation4 + $0xc0] sm:$0xff] %v1262
          %1381 = vst [vmem:[#allocation4 + $0xc8] sm:$0xff] %v1265
          %1382 = vst [vmem:[#allocation4 + $0xd0] sm:$0xff] %v1270
          %1383 = vst [vmem:[#allocation4 + $0xd8] sm:$0xff] %v1273
          %1384 = vst [vmem:[#allocation4 + $0xe0] sm:$0xff] %v1278
          %1385 = vst [vmem:[#allocation4 + $0xe8] sm:$0xff] %v1281
          %1386 = vst [vmem:[#allocation4 + $0xf0] sm:$0xff] %v1286
          %1387 = vst [vmem:[#allocation4 + $0xf8] sm:$0xff] %v1289
          %1388 = vst [vmem:[#allocation4 + $0x100] sm:$0xff] %v1294
          %1389 = vst [vmem:[#allocation4 + $0x108] sm:$0xff] %v1297
          %1390 = vst [vmem:[#allocation4 + $0x110] sm:$0xff] %v1302
          %1391 = vst [vmem:[#allocation4 + $0x118] sm:$0xff] %v1305
          %1392 = vst [vmem:[#allocation4 + $0x120] sm:$0xff] %v1310
          %1393 = vst [vmem:[#allocation4 + $0x128] sm:$0xff] %v1313
          %1394 = vst [vmem:[#allocation4 + $0x130] sm:$0xff] %v1318
          %1395 = vst [vmem:[#allocation4 + $0x138] sm:$0xff] %v1321
          %1396 = vst [vmem:[#allocation4 + $0x140] sm:$0xff] %v1326
          %1397 = vst [vmem:[#allocation4 + $0x148] sm:$0xff] %v1329
          %1398 = vst [vmem:[#allocation4 + $0x150] sm:$0xff] %v1334
          %1399 = vst [vmem:[#allocation4 + $0x158] sm:$0xff] %v1337
          %1400 = vst [vmem:[#allocation4 + $0x160] sm:$0xff] %v1342
          %1401 = vst [vmem:[#allocation4 + $0x168] sm:$0xff] %v1345
          %1402 = vst [vmem:[#allocation4 + $0x170] sm:$0xff] %v1350
          %1403 = vst [vmem:[#allocation4 + $0x178] sm:$0xff] %v1353
          %1404 = vst [vmem:[#allocation5] sm:$0x1] 0.0
          %1405 = vst [vmem:[#allocation6] sm:$0x1] 0.0
        $region60: #{tpu_custom_call.1} parent=39 // pred_fallthru
          _
        %v1406 = vld [vmem:[#allocation8] sm:$0xff]
        %v1407 = vld [vmem:[#allocation8 + $0x8] sm:$0xf]
        %v1408 = vld [vmem:[#allocation8 + $0xc] sm:$0xff]
        %v1409 = vld [vmem:[#allocation8 + $0x14] sm:$0xf]
        %v1410 = vld [vmem:[#allocation8 + $0x18] sm:$0xff]
        %v1411 = vld [vmem:[#allocation8 + $0x20] sm:$0xf]
        %v1412 = vld [vmem:[#allocation8 + $0x24] sm:$0xff]
        %v1413 = vld [vmem:[#allocation8 + $0x2c] sm:$0xf]
        %v1414 = vld [vmem:[#allocation8 + $0x30] sm:$0xff]
        %v1415 = vld [vmem:[#allocation8 + $0x38] sm:$0xf]
        %v1416 = vld [vmem:[#allocation8 + $0x3c] sm:$0xff]
        %v1417 = vld [vmem:[#allocation8 + $0x44] sm:$0xf]
        %v1418 = vld [vmem:[#allocation8 + $0x48] sm:$0xff]
        %v1419 = vld [vmem:[#allocation8 + $0x50] sm:$0xf]
        %v1420 = vld [vmem:[#allocation8 + $0x54] sm:$0xff]
        %v1421 = vld [vmem:[#allocation8 + $0x5c] sm:$0xf]
        %v1422 = vld [vmem:[#allocation8 + $0x60] sm:$0xff]
        %v1423 = vld [vmem:[#allocation8 + $0x68] sm:$0xf]
        %v1424 = vld [vmem:[#allocation8 + $0x6c] sm:$0xff]
        %v1425 = vld [vmem:[#allocation8 + $0x74] sm:$0xf]
        %v1426 = vld [vmem:[#allocation8 + $0x78] sm:$0xff]
        %v1427 = vld [vmem:[#allocation8 + $0x80] sm:$0xf]
        %v1428 = vld [vmem:[#allocation8 + $0x84] sm:$0xff]
        %v1429 = vld [vmem:[#allocation8 + $0x8c] sm:$0xf]
        %v1430 = vld [vmem:[#allocation8 + $0x90] sm:$0xff]
        %v1431 = vld [vmem:[#allocation8 + $0x98] sm:$0xf]
        %v1432 = vld [vmem:[#allocation8 + $0x9c] sm:$0xff]
        %v1433 = vld [vmem:[#allocation8 + $0xa4] sm:$0xf]
        %v1434 = vld [vmem:[#allocation8 + $0xa8] sm:$0xff]
        %v1435 = vld [vmem:[#allocation8 + $0xb0] sm:$0xf]
        %v1436 = vld [vmem:[#allocation8 + $0xb4] sm:$0xff]
        %v1437 = vld [vmem:[#allocation8 + $0xbc] sm:$0xf]
        %v1438 = vld [vmem:[#allocation8 + $0xc0] sm:$0xff]
        %v1439 = vld [vmem:[#allocation8 + $0xc8] sm:$0xf]
        %v1440 = vld [vmem:[#allocation8 + $0xcc] sm:$0xff]
        %v1441 = vld [vmem:[#allocation8 + $0xd4] sm:$0xf]
        %v1442 = vld [vmem:[#allocation8 + $0xd8] sm:$0xff]
        %v1443 = vld [vmem:[#allocation8 + $0xe0] sm:$0xf]
        %v1444 = vld [vmem:[#allocation8 + $0xe4] sm:$0xff]
        %v1445 = vld [vmem:[#allocation8 + $0xec] sm:$0xf]
        %v1446 = vld [vmem:[#allocation8 + $0xf0] sm:$0xff]
        %v1447 = vld [vmem:[#allocation8 + $0xf8] sm:$0xf]
        %v1448 = vld [vmem:[#allocation8 + $0xfc] sm:$0xff]
        %v1449 = vld [vmem:[#allocation8 + $0x104] sm:$0xf]
        %v1450 = vld [vmem:[#allocation8 + $0x108] sm:$0xff]
        %v1451 = vld [vmem:[#allocation8 + $0x110] sm:$0xf]
        %v1452 = vld [vmem:[#allocation8 + $0x114] sm:$0xff]
        %v1453 = vld [vmem:[#allocation8 + $0x11c] sm:$0xf]
        %v1454 = vld [vmem:[#allocation8 + $0x120] sm:$0xff]
        %v1455 = vld [vmem:[#allocation8 + $0x128] sm:$0xf]
        %v1456 = vld [vmem:[#allocation8 + $0x12c] sm:$0xff]
        %v1457 = vld [vmem:[#allocation8 + $0x134] sm:$0xf]
        %v1458 = vld [vmem:[#allocation8 + $0x138] sm:$0xff]
        %v1459 = vld [vmem:[#allocation8 + $0x140] sm:$0xf]
        %v1460 = vld [vmem:[#allocation8 + $0x144] sm:$0xff]
        %v1461 = vld [vmem:[#allocation8 + $0x14c] sm:$0xf]
        %v1462 = vld [vmem:[#allocation8 + $0x150] sm:$0xff]
        %v1463 = vld [vmem:[#allocation8 + $0x158] sm:$0xf]
        %v1464 = vld [vmem:[#allocation8 + $0x15c] sm:$0xff]
        %v1465 = vld [vmem:[#allocation8 + $0x164] sm:$0xf]
        %v1466 = vld [vmem:[#allocation8 + $0x168] sm:$0xff]
        %v1467 = vld [vmem:[#allocation8 + $0x170] sm:$0xf]
        %v1468 = vld [vmem:[#allocation8 + $0x174] sm:$0xff]
        %v1469 = vld [vmem:[#allocation8 + $0x17c] sm:$0xf]
        %v1470 = vld [vmem:[#allocation8 + $0x180] sm:$0xff]
        %v1471 = vld [vmem:[#allocation8 + $0x188] sm:$0xf]
        %v1472 = vld [vmem:[#allocation8 + $0x18c] sm:$0xff]
        %v1473 = vld [vmem:[#allocation8 + $0x194] sm:$0xf]
        %v1474 = vld [vmem:[#allocation8 + $0x198] sm:$0xff]
        %v1475 = vld [vmem:[#allocation8 + $0x1a0] sm:$0xf]
        %v1476 = vld [vmem:[#allocation8 + $0x1a4] sm:$0xff]
        %v1477 = vld [vmem:[#allocation8 + $0x1ac] sm:$0xf]
        %v1478 = vld [vmem:[#allocation8 + $0x1b0] sm:$0xff]
        %v1479 = vld [vmem:[#allocation8 + $0x1b8] sm:$0xf]
        %v1480 = vld [vmem:[#allocation8 + $0x1bc] sm:$0xff]
        %v1481 = vld [vmem:[#allocation8 + $0x1c4] sm:$0xf]
        %v1482 = vld [vmem:[#allocation8 + $0x1c8] sm:$0xff]
        %v1483 = vld [vmem:[#allocation8 + $0x1d0] sm:$0xf]
        %v1484 = vld [vmem:[#allocation8 + $0x1d4] sm:$0xff]
        %v1485 = vld [vmem:[#allocation8 + $0x1dc] sm:$0xf]
        %v1486 = vld [vmem:[#allocation8 + $0x1e0] sm:$0xff]
        %v1487 = vld [vmem:[#allocation8 + $0x1e8] sm:$0xf]
        %v1488 = vld [vmem:[#allocation8 + $0x1ec] sm:$0xff]
        %v1489 = vld [vmem:[#allocation8 + $0x1f4] sm:$0xf]
        %v1490 = vld [vmem:[#allocation8 + $0x1f8] sm:$0xff]
        %v1491 = vld [vmem:[#allocation8 + $0x200] sm:$0xf]
        %v1492 = vld [vmem:[#allocation8 + $0x204] sm:$0xff]
        %v1493 = vld [vmem:[#allocation8 + $0x20c] sm:$0xf]
        %v1494 = vld [vmem:[#allocation8 + $0x210] sm:$0xff]
        %v1495 = vld [vmem:[#allocation8 + $0x218] sm:$0xf]
        %v1496 = vld [vmem:[#allocation8 + $0x21c] sm:$0xff]
        %v1497 = vld [vmem:[#allocation8 + $0x224] sm:$0xf]
        %v1498 = vld [vmem:[#allocation8 + $0x228] sm:$0xff]
        %v1499 = vld [vmem:[#allocation8 + $0x230] sm:$0xf]
        %v1500 = vld [vmem:[#allocation8 + $0x234] sm:$0xff]
        %v1501 = vld [vmem:[#allocation8 + $0x23c] sm:$0xf]
        %v1502 = vld [vmem:[#allocation3] sm:$0xf]
        %v1503 = vld [vmem:[#allocation3 + $0x4] sm:$0xf]
        %v1504 = vld [vmem:[#allocation3 + $0x8] sm:$0xf]
        %v1505 = vld [vmem:[#allocation3 + $0xc] sm:$0xf]
        %v1506 = vld [vmem:[#allocation3 + $0x10] sm:$0xf]
        %v1507 = vld [vmem:[#allocation3 + $0x14] sm:$0xf]
        %v1508 = vld [vmem:[#allocation3 + $0x18] sm:$0xf]
        %v1509 = vld [vmem:[#allocation3 + $0x1c] sm:$0xf]
        %v1510 = vld [vmem:[#allocation3 + $0x20] sm:$0xf]
        %v1511 = vld [vmem:[#allocation3 + $0x24] sm:$0xf]
        %v1512 = vld [vmem:[#allocation3 + $0x28] sm:$0xf]
        %v1513 = vld [vmem:[#allocation3 + $0x2c] sm:$0xf]
        %v1514 = vld [vmem:[#allocation3 + $0x30] sm:$0xf]
        %v1515 = vld [vmem:[#allocation3 + $0x34] sm:$0xf]
        %v1516 = vld [vmem:[#allocation3 + $0x38] sm:$0xf]
        %v1517 = vld [vmem:[#allocation3 + $0x3c] sm:$0xf]
        %v1518 = vld [vmem:[#allocation3 + $0x40] sm:$0xf]
        %v1519 = vld [vmem:[#allocation3 + $0x44] sm:$0xf]
        %v1520 = vld [vmem:[#allocation3 + $0x48] sm:$0xf]
        %v1521 = vld [vmem:[#allocation3 + $0x4c] sm:$0xf]
        %v1522 = vld [vmem:[#allocation3 + $0x50] sm:$0xf]
        %v1523 = vld [vmem:[#allocation3 + $0x54] sm:$0xf]
        %v1524 = vld [vmem:[#allocation3 + $0x58] sm:$0xf]
        %v1525 = vld [vmem:[#allocation3 + $0x5c] sm:$0xf]
        %v1526 = vld [vmem:[#allocation3 + $0x60] sm:$0xf]
        %v1527 = vld [vmem:[#allocation3 + $0x64] sm:$0xf]
        %v1528 = vld [vmem:[#allocation3 + $0x68] sm:$0xf]
        %v1529 = vld [vmem:[#allocation3 + $0x6c] sm:$0xf]
        %v1530 = vld [vmem:[#allocation3 + $0x70] sm:$0xf]
        %v1531 = vld [vmem:[#allocation3 + $0x74] sm:$0xf]
        %v1532 = vld [vmem:[#allocation3 + $0x78] sm:$0xf]
        %v1533 = vld [vmem:[#allocation3 + $0x7c] sm:$0xf]
        %v1534 = vld [vmem:[#allocation3 + $0x80] sm:$0xf]
        %v1535 = vld [vmem:[#allocation3 + $0x84] sm:$0xf]
        %v1536 = vld [vmem:[#allocation3 + $0x88] sm:$0xf]
        %v1537 = vld [vmem:[#allocation3 + $0x8c] sm:$0xf]
        %v1538 = vld [vmem:[#allocation3 + $0x90] sm:$0xf]
        %v1539 = vld [vmem:[#allocation3 + $0x94] sm:$0xf]
        %v1540 = vld [vmem:[#allocation3 + $0x98] sm:$0xf]
        %v1541 = vld [vmem:[#allocation3 + $0x9c] sm:$0xf]
        %v1542 = vld [vmem:[#allocation3 + $0xa0] sm:$0xf]
        %v1543 = vld [vmem:[#allocation3 + $0xa4] sm:$0xf]
        %v1544 = vld [vmem:[#allocation3 + $0xa8] sm:$0xf]
        %v1545 = vld [vmem:[#allocation3 + $0xac] sm:$0xf]
        %v1546 = vld [vmem:[#allocation3 + $0xb0] sm:$0xf]
        %v1547 = vld [vmem:[#allocation3 + $0xb4] sm:$0xf]
        %v1548 = vld [vmem:[#allocation3 + $0xb8] sm:$0xf]
        %v1549 = vld [vmem:[#allocation3 + $0xbc] sm:$0xf]
        %s1550 = scalar_lea.vmem [#allocation4], %s312
        %v1551 = vld [vmem:[%s1550] sm:$0xff]
        %v1552 = vld [vmem:[%s1550 + $0x8] sm:$0xff]
        %v1553 = vld [vmem:[%s1550 + $0x10] sm:$0xff]
        %v1554 = vld [vmem:[%s1550 + $0x18] sm:$0xff]
        %v1555 = vld [vmem:[%s1550 + $0x20] sm:$0xff]
        %v1556 = vld [vmem:[%s1550 + $0x28] sm:$0xff]
        %v1557 = vld [vmem:[%s1550 + $0x30] sm:$0xff]
        %v1558 = vld [vmem:[%s1550 + $0x38] sm:$0xff]
        %v1559 = vld [vmem:[%s1550 + $0x40] sm:$0xff]
        %v1560 = vld [vmem:[%s1550 + $0x48] sm:$0xff]
        %v1561 = vld [vmem:[%s1550 + $0x50] sm:$0xff]
        %v1562 = vld [vmem:[%s1550 + $0x58] sm:$0xff]
        %v1563 = vld [vmem:[%s1550 + $0x60] sm:$0xff]
        %v1564 = vld [vmem:[%s1550 + $0x68] sm:$0xff]
        %v1565 = vld [vmem:[%s1550 + $0x70] sm:$0xff]
        %v1566 = vld [vmem:[%s1550 + $0x78] sm:$0xff]
        %v1567 = vld [vmem:[%s1550 + $0x80] sm:$0xff]
        %v1568 = vld [vmem:[%s1550 + $0x88] sm:$0xff]
        %v1569 = vld [vmem:[%s1550 + $0x90] sm:$0xff]
        %v1570 = vld [vmem:[%s1550 + $0x98] sm:$0xff]
        %v1571 = vld [vmem:[%s1550 + $0xa0] sm:$0xff]
        %v1572 = vld [vmem:[%s1550 + $0xa8] sm:$0xff]
        %v1573 = vld [vmem:[%s1550 + $0xb0] sm:$0xff]
        %v1574 = vld [vmem:[%s1550 + $0xb8] sm:$0xff]
        %v1575 = vld [vmem:[%s1550 + $0xc0] sm:$0xff]
        %v1576 = vld [vmem:[%s1550 + $0xc8] sm:$0xff]
        %v1577 = vld [vmem:[%s1550 + $0xd0] sm:$0xff]
        %v1578 = vld [vmem:[%s1550 + $0xd8] sm:$0xff]
        %v1579 = vld [vmem:[%s1550 + $0xe0] sm:$0xff]
        %v1580 = vld [vmem:[%s1550 + $0xe8] sm:$0xff]
        %v1581 = vld [vmem:[%s1550 + $0xf0] sm:$0xff]
        %v1582 = vld [vmem:[%s1550 + $0xf8] sm:$0xff]
        %v1583 = vld [vmem:[%s1550 + $0x100] sm:$0xff]
        %v1584 = vld [vmem:[%s1550 + $0x108] sm:$0xff]
        %v1585 = vld [vmem:[%s1550 + $0x110] sm:$0xff]
        %v1586 = vld [vmem:[%s1550 + $0x118] sm:$0xff]
        %v1587 = vld [vmem:[%s1550 + $0x120] sm:$0xff]
        %v1588 = vld [vmem:[%s1550 + $0x128] sm:$0xff]
        %v1589 = vld [vmem:[%s1550 + $0x130] sm:$0xff]
        %v1590 = vld [vmem:[%s1550 + $0x138] sm:$0xff]
        %v1591 = vld [vmem:[%s1550 + $0x140] sm:$0xff]
        %v1592 = vld [vmem:[%s1550 + $0x148] sm:$0xff]
        %v1593 = vld [vmem:[%s1550 + $0x150] sm:$0xff]
        %v1594 = vld [vmem:[%s1550 + $0x158] sm:$0xff]
        %v1595 = vld [vmem:[%s1550 + $0x160] sm:$0xff]
        %v1596 = vld [vmem:[%s1550 + $0x168] sm:$0xff]
        %v1597 = vld [vmem:[%s1550 + $0x170] sm:$0xff]
        %v1598 = vld [vmem:[%s1550 + $0x178] sm:$0xff]
        %v1695 = vunpack.c.l.b16 %v1406
        %v1696 = vunpack.c.h.b16 %v1406
        %v1697 = vunpack.c.l.b16 %v1407
        %v1698 = vunpack.c.l.b16 %v1408
        %v1699 = vunpack.c.h.b16 %v1408
        %v1700 = vunpack.c.l.b16 %v1409
        %v1701 = vunpack.c.l.b16 %v1410
        %v1702 = vunpack.c.h.b16 %v1410
        %v1703 = vunpack.c.l.b16 %v1411
        %v1704 = vunpack.c.l.b16 %v1412
        %v1705 = vunpack.c.h.b16 %v1412
        %v1706 = vunpack.c.l.b16 %v1413
        %v1707 = vunpack.c.l.b16 %v1414
        %v1708 = vunpack.c.h.b16 %v1414
        %v1709 = vunpack.c.l.b16 %v1415
        %v1710 = vunpack.c.l.b16 %v1416
        %v1711 = vunpack.c.h.b16 %v1416
        %v1712 = vunpack.c.l.b16 %v1417
        %v1713 = vunpack.c.l.b16 %v1418
        %v1714 = vunpack.c.h.b16 %v1418
        %v1715 = vunpack.c.l.b16 %v1419
        %v1716 = vunpack.c.l.b16 %v1420
        %v1717 = vunpack.c.h.b16 %v1420
        %v1718 = vunpack.c.l.b16 %v1421
        %v1719 = vunpack.c.l.b16 %v1422
        %v1720 = vunpack.c.h.b16 %v1422
        %v1721 = vunpack.c.l.b16 %v1423
        %v1722 = vunpack.c.l.b16 %v1424
        %v1723 = vunpack.c.h.b16 %v1424
        %v1724 = vunpack.c.l.b16 %v1425
        %v1725 = vunpack.c.l.b16 %v1426
        %v1726 = vunpack.c.h.b16 %v1426
        %v1727 = vunpack.c.l.b16 %v1427
        %v1728 = vunpack.c.l.b16 %v1428
        %v1729 = vunpack.c.h.b16 %v1428
        %v1730 = vunpack.c.l.b16 %v1429
        %v1731 = vunpack.c.l.b16 %v1430
        %v1732 = vunpack.c.h.b16 %v1430
        %v1733 = vunpack.c.l.b16 %v1431
        %v1734 = vunpack.c.l.b16 %v1432
        %v1735 = vunpack.c.h.b16 %v1432
        %v1736 = vunpack.c.l.b16 %v1433
        %v1737 = vunpack.c.l.b16 %v1434
        %v1738 = vunpack.c.h.b16 %v1434
        %v1739 = vunpack.c.l.b16 %v1435
        %v1740 = vunpack.c.l.b16 %v1436
        %v1741 = vunpack.c.h.b16 %v1436
        %v1742 = vunpack.c.l.b16 %v1437
        %v1743 = vunpack.c.l.b16 %v1438
        %v1744 = vunpack.c.h.b16 %v1438
        %v1745 = vunpack.c.l.b16 %v1439
        %v1746 = vunpack.c.l.b16 %v1440
        %v1747 = vunpack.c.h.b16 %v1440
        %v1748 = vunpack.c.l.b16 %v1441
        %v1749 = vunpack.c.l.b16 %v1442
        %v1750 = vunpack.c.h.b16 %v1442
        %v1751 = vunpack.c.l.b16 %v1443
        %v1752 = vunpack.c.l.b16 %v1444
        %v1753 = vunpack.c.h.b16 %v1444
        %v1754 = vunpack.c.l.b16 %v1445
        %v1755 = vunpack.c.l.b16 %v1446
        %v1756 = vunpack.c.h.b16 %v1446
        %v1757 = vunpack.c.l.b16 %v1447
        %v1758 = vunpack.c.l.b16 %v1448
        %v1759 = vunpack.c.h.b16 %v1448
        %v1760 = vunpack.c.l.b16 %v1449
        %v1761 = vunpack.c.l.b16 %v1450
        %v1762 = vunpack.c.h.b16 %v1450
        %v1763 = vunpack.c.l.b16 %v1451
        %v1764 = vunpack.c.l.b16 %v1452
        %v1765 = vunpack.c.h.b16 %v1452
        %v1766 = vunpack.c.l.b16 %v1453
        %v1767 = vunpack.c.l.b16 %v1454
        %v1768 = vunpack.c.h.b16 %v1454
        %v1769 = vunpack.c.l.b16 %v1455
        %v1770 = vunpack.c.l.b16 %v1456
        %v1771 = vunpack.c.h.b16 %v1456
        %v1772 = vunpack.c.l.b16 %v1457
        %v1773 = vunpack.c.l.b16 %v1458
        %v1774 = vunpack.c.h.b16 %v1458
        %v1775 = vunpack.c.l.b16 %v1459
        %v1776 = vunpack.c.l.b16 %v1460
        %v1777 = vunpack.c.h.b16 %v1460
        %v1778 = vunpack.c.l.b16 %v1461
        %v1779 = vunpack.c.l.b16 %v1462
        %v1780 = vunpack.c.h.b16 %v1462
        %v1781 = vunpack.c.l.b16 %v1463
        %v1782 = vunpack.c.l.b16 %v1464
        %v1783 = vunpack.c.h.b16 %v1464
        %v1784 = vunpack.c.l.b16 %v1465
        %v1785 = vunpack.c.l.b16 %v1466
        %v1786 = vunpack.c.h.b16 %v1466
        %v1787 = vunpack.c.l.b16 %v1467
        %v1788 = vunpack.c.l.b16 %v1468
        %v1789 = vunpack.c.h.b16 %v1468
        %v1790 = vunpack.c.l.b16 %v1469
        %v1791 = vunpack.c.l.b16 %v1470
        %v1792 = vunpack.c.h.b16 %v1470
        %v1793 = vunpack.c.l.b16 %v1471
        %v1794 = vunpack.c.l.b16 %v1472
        %v1795 = vunpack.c.h.b16 %v1472
        %v1796 = vunpack.c.l.b16 %v1473
        %v1797 = vunpack.c.l.b16 %v1474
        %v1798 = vunpack.c.h.b16 %v1474
        %v1799 = vunpack.c.l.b16 %v1475
        %v1800 = vunpack.c.l.b16 %v1476
        %v1801 = vunpack.c.h.b16 %v1476
        %v1802 = vunpack.c.l.b16 %v1477
        %v1803 = vunpack.c.l.b16 %v1478
        %v1804 = vunpack.c.h.b16 %v1478
        %v1805 = vunpack.c.l.b16 %v1479
        %v1806 = vunpack.c.l.b16 %v1480
        %v1807 = vunpack.c.h.b16 %v1480
        %v1808 = vunpack.c.l.b16 %v1481
        %v1809 = vunpack.c.l.b16 %v1482
        %v1810 = vunpack.c.h.b16 %v1482
        %v1811 = vunpack.c.l.b16 %v1483
        %v1812 = vunpack.c.l.b16 %v1484
        %v1813 = vunpack.c.h.b16 %v1484
        %v1814 = vunpack.c.l.b16 %v1485
        %v1815 = vunpack.c.l.b16 %v1486
        %v1816 = vunpack.c.h.b16 %v1486
        %v1817 = vunpack.c.l.b16 %v1487
        %v1818 = vunpack.c.l.b16 %v1488
        %v1819 = vunpack.c.h.b16 %v1488
        %v1820 = vunpack.c.l.b16 %v1489
        %v1821 = vunpack.c.l.b16 %v1490
        %v1822 = vunpack.c.h.b16 %v1490
        %v1823 = vunpack.c.l.b16 %v1491
        %v1824 = vunpack.c.l.b16 %v1492
        %v1825 = vunpack.c.h.b16 %v1492
        %v1826 = vunpack.c.l.b16 %v1493
        %v1827 = vunpack.c.l.b16 %v1494
        %v1828 = vunpack.c.h.b16 %v1494
        %v1829 = vunpack.c.l.b16 %v1495
        %v1830 = vunpack.c.l.b16 %v1496
        %v1831 = vunpack.c.h.b16 %v1496
        %v1832 = vunpack.c.l.b16 %v1497
        %v1833 = vunpack.c.l.b16 %v1498
        %v1834 = vunpack.c.h.b16 %v1498
        %v1835 = vunpack.c.l.b16 %v1499
        %v1836 = vunpack.c.l.b16 %v1500
        %v1837 = vunpack.c.h.b16 %v1500
        %v1838 = vunpack.c.l.b16 %v1501
        %v1839 = vpack.c.b16 %v1698, %v1695
        %v1840 = vpack.c.b16 %v1699, %v1696
        %v1841 = vpack.c.b16 %v1700, %v1697
        %v1842 = vpack.c.b16 %v1704, %v1701
        %v1843 = vpack.c.b16 %v1705, %v1702
        %v1844 = vpack.c.b16 %v1706, %v1703
        %v1845 = vpack.c.b16 %v1710, %v1707
        %v1846 = vpack.c.b16 %v1711, %v1708
        %v1847 = vpack.c.b16 %v1712, %v1709
        %v1848 = vpack.c.b16 %v1716, %v1713
        %v1849 = vpack.c.b16 %v1717, %v1714
        %v1850 = vpack.c.b16 %v1718, %v1715
        %v1851 = vpack.c.b16 %v1722, %v1719
        %v1852 = vpack.c.b16 %v1723, %v1720
        %v1853 = vpack.c.b16 %v1724, %v1721
        %v1854 = vpack.c.b16 %v1728, %v1725
        %v1855 = vpack.c.b16 %v1729, %v1726
        %v1856 = vpack.c.b16 %v1730, %v1727
        %v1857 = vpack.c.b16 %v1734, %v1731
        %v1858 = vpack.c.b16 %v1735, %v1732
        %v1859 = vpack.c.b16 %v1736, %v1733
        %v1860 = vpack.c.b16 %v1740, %v1737
        %v1861 = vpack.c.b16 %v1741, %v1738
        %v1862 = vpack.c.b16 %v1742, %v1739
        %v1863 = vpack.c.b16 %v1746, %v1743
        %v1864 = vpack.c.b16 %v1747, %v1744
        %v1865 = vpack.c.b16 %v1748, %v1745
        %v1866 = vpack.c.b16 %v1752, %v1749
        %v1867 = vpack.c.b16 %v1753, %v1750
        %v1868 = vpack.c.b16 %v1754, %v1751
        %v1869 = vpack.c.b16 %v1758, %v1755
        %v1870 = vpack.c.b16 %v1759, %v1756
        %v1871 = vpack.c.b16 %v1760, %v1757
        %v1872 = vpack.c.b16 %v1764, %v1761
        %v1873 = vpack.c.b16 %v1765, %v1762
        %v1874 = vpack.c.b16 %v1766, %v1763
        %v1875 = vpack.c.b16 %v1770, %v1767
        %v1876 = vpack.c.b16 %v1771, %v1768
        %v1877 = vpack.c.b16 %v1772, %v1769
        %v1878 = vpack.c.b16 %v1776, %v1773
        %v1879 = vpack.c.b16 %v1777, %v1774
        %v1880 = vpack.c.b16 %v1778, %v1775
        %v1881 = vpack.c.b16 %v1782, %v1779
        %v1882 = vpack.c.b16 %v1783, %v1780
        %v1883 = vpack.c.b16 %v1784, %v1781
        %v1884 = vpack.c.b16 %v1788, %v1785
        %v1885 = vpack.c.b16 %v1789, %v1786
        %v1886 = vpack.c.b16 %v1790, %v1787
        %v1887 = vpack.c.b16 %v1794, %v1791
        %v1888 = vpack.c.b16 %v1795, %v1792
        %v1889 = vpack.c.b16 %v1796, %v1793
        %v1890 = vpack.c.b16 %v1800, %v1797
        %v1891 = vpack.c.b16 %v1801, %v1798
        %v1892 = vpack.c.b16 %v1802, %v1799
        %v1893 = vpack.c.b16 %v1806, %v1803
        %v1894 = vpack.c.b16 %v1807, %v1804
        %v1895 = vpack.c.b16 %v1808, %v1805
        %v1896 = vpack.c.b16 %v1812, %v1809
        %v1897 = vpack.c.b16 %v1813, %v1810
        %v1898 = vpack.c.b16 %v1814, %v1811
        %v1899 = vpack.c.b16 %v1818, %v1815
        %v1900 = vpack.c.b16 %v1819, %v1816
        %v1901 = vpack.c.b16 %v1820, %v1817
        %v1902 = vpack.c.b16 %v1824, %v1821
        %v1903 = vpack.c.b16 %v1825, %v1822
        %v1904 = vpack.c.b16 %v1826, %v1823
        %v1905 = vpack.c.b16 %v1830, %v1827
        %v1906 = vpack.c.b16 %v1831, %v1828
        %v1907 = vpack.c.b16 %v1832, %v1829
        %v1908 = vpack.c.b16 %v1836, %v1833
        %v1909 = vpack.c.b16 %v1837, %v1834
        %v1910 = vpack.c.b16 %v1838, %v1835
        %v2031 = vunpack.c.l.b16 %v1502
        %v2032 = vunpack.c.l.b16 %v1503
        %v2033 = vunpack.c.l.b16 %v1504
        %v2034 = vunpack.c.l.b16 %v1505
        %v2035 = vunpack.c.l.b16 %v1506
        %v2036 = vunpack.c.l.b16 %v1507
        %v2037 = vunpack.c.l.b16 %v1508
        %v2038 = vunpack.c.l.b16 %v1509
        %v2039 = vunpack.c.l.b16 %v1510
        %v2040 = vunpack.c.l.b16 %v1511
        %v2041 = vunpack.c.l.b16 %v1512
        %v2042 = vunpack.c.l.b16 %v1513
        %v2043 = vunpack.c.l.b16 %v1514
        %v2044 = vunpack.c.l.b16 %v1515
        %v2045 = vunpack.c.l.b16 %v1516
        %v2046 = vunpack.c.l.b16 %v1517
        %v2047 = vunpack.c.l.b16 %v1518
        %v2048 = vunpack.c.l.b16 %v1519
        %v2049 = vunpack.c.l.b16 %v1520
        %v2050 = vunpack.c.l.b16 %v1521
        %v2051 = vunpack.c.l.b16 %v1522
        %v2052 = vunpack.c.l.b16 %v1523
        %v2053 = vunpack.c.l.b16 %v1524
        %v2054 = vunpack.c.l.b16 %v1525
        %v2055 = vunpack.c.l.b16 %v1526
        %v2056 = vunpack.c.l.b16 %v1527
        %v2057 = vunpack.c.l.b16 %v1528
        %v2058 = vunpack.c.l.b16 %v1529
        %v2059 = vunpack.c.l.b16 %v1530
        %v2060 = vunpack.c.l.b16 %v1531
        %v2061 = vunpack.c.l.b16 %v1532
        %v2062 = vunpack.c.l.b16 %v1533
        %v2063 = vunpack.c.l.b16 %v1534
        %v2064 = vunpack.c.l.b16 %v1535
        %v2065 = vunpack.c.l.b16 %v1536
        %v2066 = vunpack.c.l.b16 %v1537
        %v2067 = vunpack.c.l.b16 %v1538
        %v2068 = vunpack.c.l.b16 %v1539
        %v2069 = vunpack.c.l.b16 %v1540
        %v2070 = vunpack.c.l.b16 %v1541
        %v2071 = vunpack.c.l.b16 %v1542
        %v2072 = vunpack.c.l.b16 %v1543
        %v2073 = vunpack.c.l.b16 %v1544
        %v2074 = vunpack.c.l.b16 %v1545
        %v2075 = vunpack.c.l.b16 %v1546
        %v2076 = vunpack.c.l.b16 %v1547
        %v2077 = vunpack.c.l.b16 %v1548
        %v2078 = vunpack.c.l.b16 %v1549
        %v2079 = vpack.c.b16 %v2032, %v2031
        %v2080 = vpack.c.b16 %v2034, %v2033
        %v2081 = vpack.c.b16 %v2036, %v2035
        %v2082 = vpack.c.b16 %v2038, %v2037
        %v2083 = vpack.c.b16 %v2040, %v2039
        %v2084 = vpack.c.b16 %v2042, %v2041
        %v2085 = vpack.c.b16 %v2044, %v2043
        %v2086 = vpack.c.b16 %v2046, %v2045
        %v2087 = vpack.c.b16 %v2048, %v2047
        %v2088 = vpack.c.b16 %v2050, %v2049
        %v2089 = vpack.c.b16 %v2052, %v2051
        %v2090 = vpack.c.b16 %v2054, %v2053
        %v2091 = vpack.c.b16 %v2056, %v2055
        %v2092 = vpack.c.b16 %v2058, %v2057
        %v2093 = vpack.c.b16 %v2060, %v2059
        %v2094 = vpack.c.b16 %v2062, %v2061
        %v2095 = vpack.c.b16 %v2064, %v2063
        %v2096 = vpack.c.b16 %v2066, %v2065
        %v2097 = vpack.c.b16 %v2068, %v2067
        %v2098 = vpack.c.b16 %v2070, %v2069
        %v2099 = vpack.c.b16 %v2072, %v2071
        %v2100 = vpack.c.b16 %v2074, %v2073
        %v2101 = vpack.c.b16 %v2076, %v2075
        %v2102 = vpack.c.b16 %v2078, %v2077
        %2127 = vmatprep.subr.bf16.mxu0 0
        %2128 = vmatpush1.bf16.msra.mxu0 %v2086
        %2129 = vmatprep.subr.bf16.mxu0 0
        %2130 = vmatpush1.bf16.msra.mxu0 %v2085
        %2131 = vmatprep.subr.bf16.mxu0 0
        %2132 = vmatpush1.bf16.msra.mxu0 %v2084
        %2133 = vmatprep.subr.bf16.mxu0 0
        %2134 = vmatpush1.bf16.msra.mxu0 %v2083
        %2135 = vmatprep.subr.bf16.mxu0 0
        %2136 = vmatpush1.bf16.msra.mxu0 %v2082
        %2137 = vmatprep.subr.bf16.mxu0 0
        %2138 = vmatpush1.bf16.msra.mxu0 %v2081
        %2139 = vmatprep.subr.bf16.mxu0 0
        %2140 = vmatpush1.bf16.msra.mxu0 %v2080
        %2141 = vmatprep.subr.bf16.mxu0 0
        %2142 = vmatpush1.bf16.msra.mxu0 %v2079
        %2143 = vmatprep.subr.bf16.mxu0 0
        %2144 = vmatpush2.bf16.msra.mxu0 %v2094
        %2145 = vmatprep.subr.bf16.mxu0 0
        %2146 = vmatpush2.bf16.msra.mxu0 %v2093
        %2147 = vmatprep.subr.bf16.mxu0 0
        %2148 = vmatpush2.bf16.msra.mxu0 %v2092
        %2149 = vmatprep.subr.bf16.mxu0 0
        %2150 = vmatpush2.bf16.msra.mxu0 %v2091
        %2151 = vmatprep.subr.bf16.mxu0 0
        %2152 = vmatpush2.bf16.msra.mxu0 %v2090
        %2153 = vmatprep.subr.bf16.mxu0 0
        %2154 = vmatpush2.bf16.msra.mxu0 %v2089
        %2155 = vmatprep.subr.bf16.mxu0 0
        %2156 = vmatpush2.bf16.msra.mxu0 %v2088
        %2157 = vmatprep.subr.bf16.mxu0 0
        %2158 = vmatpush2.bf16.msra.mxu0 %v2087
        %2159 = vmatprep.mubr.bf16.mxu0 %v1840
        %2160 = vmatmul.mubr.bf16.gmra.mxu0 %v1839
        %v2161 = vpop.f32.mrf.mxu0
        %v2162 = vadd.f32 %v1551, %v2161
        %v2163 = vpop.f32.mrf.mxu0
        %v2164 = vpop.f32.mrf.mxu0
        %v2165 = vadd.f32 %v1552, %v2164
        %v2166 = vpop.f32.mrf.mxu0
        %2167 = vmatprep.mubr.bf16.mxu0 %v1843
        %2168 = vmatmul.mubr.bf16.gmra.mxu0 %v1842
        %v2169 = vpop.f32.mrf.mxu0
        %v2170 = vadd.f32 %v1553, %v2169
        %v2171 = vpop.f32.mrf.mxu0
        %v2172 = vpop.f32.mrf.mxu0
        %v2173 = vadd.f32 %v1554, %v2172
        %v2174 = vpop.f32.mrf.mxu0
        %2175 = vmatprep.mubr.bf16.mxu0 %v1846
        %2176 = vmatmul.mubr.bf16.gmra.mxu0 %v1845
        %v2177 = vpop.f32.mrf.mxu0
        %v2178 = vadd.f32 %v1555, %v2177
        %v2179 = vpop.f32.mrf.mxu0
        %v2180 = vpop.f32.mrf.mxu0
        %v2181 = vadd.f32 %v1556, %v2180
        %v2182 = vpop.f32.mrf.mxu0
        %2183 = vmatprep.mubr.bf16.mxu0 %v1849
        %2184 = vmatmul.mubr.bf16.gmra.mxu0 %v1848
        %v2185 = vpop.f32.mrf.mxu0
        %v2186 = vadd.f32 %v1557, %v2185
        %v2187 = vpop.f32.mrf.mxu0
        %v2188 = vpop.f32.mrf.mxu0
        %v2189 = vadd.f32 %v1558, %v2188
        %v2190 = vpop.f32.mrf.mxu0
        %2191 = vmatprep.mubr.bf16.mxu0 %v1852
        %2192 = vmatmul.mubr.bf16.gmra.mxu0 %v1851
        %v2193 = vpop.f32.mrf.mxu0
        %v2194 = vadd.f32 %v1559, %v2193
        %v2195 = vpop.f32.mrf.mxu0
        %v2196 = vpop.f32.mrf.mxu0
        %v2197 = vadd.f32 %v1560, %v2196
        %v2198 = vpop.f32.mrf.mxu0
        %2199 = vmatprep.mubr.bf16.mxu0 %v1855
        %2200 = vmatmul.mubr.bf16.gmra.mxu0 %v1854
        %v2201 = vpop.f32.mrf.mxu0
        %v2202 = vadd.f32 %v1561, %v2201
        %v2203 = vpop.f32.mrf.mxu0
        %v2204 = vpop.f32.mrf.mxu0
        %v2205 = vadd.f32 %v1562, %v2204
        %v2206 = vpop.f32.mrf.mxu0
        %2207 = vmatprep.mubr.bf16.mxu0 %v1858
        %2208 = vmatmul.mubr.bf16.gmra.mxu0 %v1857
        %v2209 = vpop.f32.mrf.mxu0
        %v2210 = vadd.f32 %v1563, %v2209
        %v2211 = vpop.f32.mrf.mxu0
        %v2212 = vpop.f32.mrf.mxu0
        %v2213 = vadd.f32 %v1564, %v2212
        %v2214 = vpop.f32.mrf.mxu0
        %2215 = vmatprep.mubr.bf16.mxu0 %v1861
        %2216 = vmatmul.mubr.bf16.gmra.mxu0 %v1860
        %v2217 = vpop.f32.mrf.mxu0
        %v2218 = vadd.f32 %v1565, %v2217
        %v2219 = vpop.f32.mrf.mxu0
        %v2220 = vpop.f32.mrf.mxu0
        %v2221 = vadd.f32 %v1566, %v2220
        %v2222 = vpop.f32.mrf.mxu0
        %2223 = vmatprep.mubr.bf16.mxu0 %v1864
        %2224 = vmatmul.mubr.bf16.gmra.mxu0 %v1863
        %v2225 = vpop.f32.mrf.mxu0
        %v2226 = vadd.f32 %v1567, %v2225
        %v2227 = vpop.f32.mrf.mxu0
        %v2228 = vpop.f32.mrf.mxu0
        %v2229 = vadd.f32 %v1568, %v2228
        %v2230 = vpop.f32.mrf.mxu0
        %2231 = vmatprep.mubr.bf16.mxu0 %v1867
        %2232 = vmatmul.mubr.bf16.gmra.mxu0 %v1866
        %v2233 = vpop.f32.mrf.mxu0
        %v2234 = vadd.f32 %v1569, %v2233
        %v2235 = vpop.f32.mrf.mxu0
        %v2236 = vpop.f32.mrf.mxu0
        %v2237 = vadd.f32 %v1570, %v2236
        %v2238 = vpop.f32.mrf.mxu0
        %2239 = vmatprep.mubr.bf16.mxu0 %v1870
        %2240 = vmatmul.mubr.bf16.gmra.mxu0 %v1869
        %v2241 = vpop.f32.mrf.mxu0
        %v2242 = vadd.f32 %v1571, %v2241
        %v2243 = vpop.f32.mrf.mxu0
        %v2244 = vpop.f32.mrf.mxu0
        %v2245 = vadd.f32 %v1572, %v2244
        %v2246 = vpop.f32.mrf.mxu0
        %2247 = vmatprep.mubr.bf16.mxu0 %v1873
        %2248 = vmatmul.mubr.bf16.gmra.mxu0 %v1872
        %v2249 = vpop.f32.mrf.mxu0
        %v2250 = vadd.f32 %v1573, %v2249
        %v2251 = vpop.f32.mrf.mxu0
        %v2252 = vpop.f32.mrf.mxu0
        %v2253 = vadd.f32 %v1574, %v2252
        %v2254 = vpop.f32.mrf.mxu0
        %2255 = vmatprep.mubr.bf16.mxu0 %v1876
        %2256 = vmatmul.mubr.bf16.gmra.mxu0 %v1875
        %v2257 = vpop.f32.mrf.mxu0
        %v2258 = vadd.f32 %v1575, %v2257
        %v2259 = vpop.f32.mrf.mxu0
        %v2260 = vpop.f32.mrf.mxu0
        %v2261 = vadd.f32 %v1576, %v2260
        %v2262 = vpop.f32.mrf.mxu0
        %2263 = vmatprep.mubr.bf16.mxu0 %v1879
        %2264 = vmatmul.mubr.bf16.gmra.mxu0 %v1878
        %v2265 = vpop.f32.mrf.mxu0
        %v2266 = vadd.f32 %v1577, %v2265
        %v2267 = vpop.f32.mrf.mxu0
        %v2268 = vpop.f32.mrf.mxu0
        %v2269 = vadd.f32 %v1578, %v2268
        %v2270 = vpop.f32.mrf.mxu0
        %2271 = vmatprep.mubr.bf16.mxu0 %v1882
        %2272 = vmatmul.mubr.bf16.gmra.mxu0 %v1881
        %v2273 = vpop.f32.mrf.mxu0
        %v2274 = vadd.f32 %v1579, %v2273
        %v2275 = vpop.f32.mrf.mxu0
        %v2276 = vpop.f32.mrf.mxu0
        %v2277 = vadd.f32 %v1580, %v2276
        %v2278 = vpop.f32.mrf.mxu0
        %2279 = vmatprep.mubr.bf16.mxu0 %v1885
        %2280 = vmatmul.mubr.bf16.gmra.mxu0 %v1884
        %v2281 = vpop.f32.mrf.mxu0
        %v2282 = vadd.f32 %v1581, %v2281
        %v2283 = vpop.f32.mrf.mxu0
        %v2284 = vpop.f32.mrf.mxu0
        %v2285 = vadd.f32 %v1582, %v2284
        %v2286 = vpop.f32.mrf.mxu0
        %2287 = vmatprep.mubr.bf16.mxu0 %v1888
        %2288 = vmatmul.mubr.bf16.gmra.mxu0 %v1887
        %v2289 = vpop.f32.mrf.mxu0
        %v2290 = vadd.f32 %v1583, %v2289
        %v2291 = vpop.f32.mrf.mxu0
        %v2292 = vpop.f32.mrf.mxu0
        %v2293 = vadd.f32 %v1584, %v2292
        %v2294 = vpop.f32.mrf.mxu0
        %2295 = vmatprep.mubr.bf16.mxu0 %v1891
        %2296 = vmatmul.mubr.bf16.gmra.mxu0 %v1890
        %v2297 = vpop.f32.mrf.mxu0
        %v2298 = vadd.f32 %v1585, %v2297
        %v2299 = vpop.f32.mrf.mxu0
        %v2300 = vpop.f32.mrf.mxu0
        %v2301 = vadd.f32 %v1586, %v2300
        %v2302 = vpop.f32.mrf.mxu0
        %2303 = vmatprep.mubr.bf16.mxu0 %v1894
        %2304 = vmatmul.mubr.bf16.gmra.mxu0 %v1893
        %v2305 = vpop.f32.mrf.mxu0
        %v2306 = vadd.f32 %v1587, %v2305
        %v2307 = vpop.f32.mrf.mxu0
        %v2308 = vpop.f32.mrf.mxu0
        %v2309 = vadd.f32 %v1588, %v2308
        %v2310 = vpop.f32.mrf.mxu0
        %2311 = vmatprep.mubr.bf16.mxu0 %v1897
        %2312 = vmatmul.mubr.bf16.gmra.mxu0 %v1896
        %v2313 = vpop.f32.mrf.mxu0
        %v2314 = vadd.f32 %v1589, %v2313
        %v2315 = vpop.f32.mrf.mxu0
        %v2316 = vpop.f32.mrf.mxu0
        %v2317 = vadd.f32 %v1590, %v2316
        %v2318 = vpop.f32.mrf.mxu0
        %2319 = vmatprep.mubr.bf16.mxu0 %v1900
        %2320 = vmatmul.mubr.bf16.gmra.mxu0 %v1899
        %v2321 = vpop.f32.mrf.mxu0
        %v2322 = vadd.f32 %v1591, %v2321
        %v2323 = vpop.f32.mrf.mxu0
        %v2324 = vpop.f32.mrf.mxu0
        %v2325 = vadd.f32 %v1592, %v2324
        %v2326 = vpop.f32.mrf.mxu0
        %2327 = vmatprep.mubr.bf16.mxu0 %v1903
        %2328 = vmatmul.mubr.bf16.gmra.mxu0 %v1902
        %v2329 = vpop.f32.mrf.mxu0
        %v2330 = vadd.f32 %v1593, %v2329
        %v2331 = vpop.f32.mrf.mxu0
        %v2332 = vpop.f32.mrf.mxu0
        %v2333 = vadd.f32 %v1594, %v2332
        %v2334 = vpop.f32.mrf.mxu0
        %2335 = vmatprep.mubr.bf16.mxu0 %v1906
        %2336 = vmatmul.mubr.bf16.gmra.mxu0 %v1905
        %v2337 = vpop.f32.mrf.mxu0
        %v2338 = vadd.f32 %v1595, %v2337
        %v2339 = vpop.f32.mrf.mxu0
        %v2340 = vpop.f32.mrf.mxu0
        %v2341 = vadd.f32 %v1596, %v2340
        %v2342 = vpop.f32.mrf.mxu0
        %2343 = vmatprep.mubr.bf16.mxu0 %v1909
        %2344 = vmatmul.mubr.bf16.gmra.mxu0 %v1908
        %v2345 = vpop.f32.mrf.mxu0
        %v2346 = vadd.f32 %v1597, %v2345
        %v2347 = vpop.f32.mrf.mxu0
        %v2348 = vpop.f32.mrf.mxu0
        %v2349 = vadd.f32 %v1598, %v2348
        %v2350 = vpop.f32.mrf.mxu0
        %2351 = vdwg.mxu0
        %2352 = vmatprep.subr.bf16.mxu0 0
        %2353 = vmatpush1.bf16.msra.mxu0 %v2102
        %2354 = vmatprep.subr.bf16.mxu0 0
        %2355 = vmatpush1.bf16.msra.mxu0 %v2101
        %2356 = vmatprep.subr.bf16.mxu0 0
        %2357 = vmatpush1.bf16.msra.mxu0 %v2100
        %2358 = vmatprep.subr.bf16.mxu0 0
        %2359 = vmatpush1.bf16.msra.mxu0 %v2099
        %2360 = vmatprep.subr.bf16.mxu0 0
        %2361 = vmatpush1.bf16.msra.mxu0 %v2098
        %2362 = vmatprep.subr.bf16.mxu0 0
        %2363 = vmatpush1.bf16.msra.mxu0 %v2097
        %2364 = vmatprep.subr.bf16.mxu0 0
        %2365 = vmatpush1.bf16.msra.mxu0 %v2096
        %2366 = vmatprep.subr.bf16.mxu0 0
        %2367 = vmatpush1.bf16.msra.mxu0 %v2095
        %2368 = vmatprep.subr.bf16.mxu0 0
        %2369 = vmatpush2.bf16.msra.mxu0 0
        %2370 = vmatprep.subr.bf16.mxu0 0
        %2371 = vmatpush2.bf16.msra.mxu0 0
        %2372 = vmatprep.subr.bf16.mxu0 0
        %2373 = vmatpush2.bf16.msra.mxu0 0
        %2374 = vmatprep.subr.bf16.mxu0 0
        %2375 = vmatpush2.bf16.msra.mxu0 0
        %2376 = vmatprep.subr.bf16.mxu0 0
        %2377 = vmatpush2.bf16.msra.mxu0 0
        %2378 = vmatprep.subr.bf16.mxu0 0
        %2379 = vmatpush2.bf16.msra.mxu0 0
        %2380 = vmatprep.subr.bf16.mxu0 0
        %2381 = vmatpush2.bf16.msra.mxu0 0
        %2382 = vmatprep.subr.bf16.mxu0 0
        %2383 = vmatpush2.bf16.msra.mxu0 0
        %2384 = vmatprep.mubr.bf16.mxu0 0
        %2385 = vmatmul.mubr.bf16.gmra.mxu0 %v1841
        %v2386 = vpop.f32.mrf.mxu0
        %v2387 = vadd.f32 %v2162, %v2386
        %v2388 = vpop.f32.mrf.mxu0
        %v2389 = vpop.f32.mrf.mxu0
        %v2390 = vadd.f32 %v2165, %v2389
        %v2391 = vpop.f32.mrf.mxu0
        %2392 = vmatprep.mubr.bf16.mxu0 0
        %2393 = vmatmul.mubr.bf16.gmra.mxu0 %v1844
        %v2394 = vpop.f32.mrf.mxu0
        %v2395 = vadd.f32 %v2170, %v2394
        %v2396 = vpop.f32.mrf.mxu0
        %v2397 = vpop.f32.mrf.mxu0
        %v2398 = vadd.f32 %v2173, %v2397
        %v2399 = vpop.f32.mrf.mxu0
        %2400 = vmatprep.mubr.bf16.mxu0 0
        %2401 = vmatmul.mubr.bf16.gmra.mxu0 %v1847
        %v2402 = vpop.f32.mrf.mxu0
        %v2403 = vadd.f32 %v2178, %v2402
        %v2404 = vpop.f32.mrf.mxu0
        %v2405 = vpop.f32.mrf.mxu0
        %v2406 = vadd.f32 %v2181, %v2405
        %v2407 = vpop.f32.mrf.mxu0
        %2408 = vmatprep.mubr.bf16.mxu0 0
        %2409 = vmatmul.mubr.bf16.gmra.mxu0 %v1850
        %v2410 = vpop.f32.mrf.mxu0
        %v2411 = vadd.f32 %v2186, %v2410
        %v2412 = vpop.f32.mrf.mxu0
        %v2413 = vpop.f32.mrf.mxu0
        %v2414 = vadd.f32 %v2189, %v2413
        %v2415 = vpop.f32.mrf.mxu0
        %2416 = vmatprep.mubr.bf16.mxu0 0
        %2417 = vmatmul.mubr.bf16.gmra.mxu0 %v1853
        %v2418 = vpop.f32.mrf.mxu0
        %v2419 = vadd.f32 %v2194, %v2418
        %v2420 = vpop.f32.mrf.mxu0
        %v2421 = vpop.f32.mrf.mxu0
        %v2422 = vadd.f32 %v2197, %v2421
        %v2423 = vpop.f32.mrf.mxu0
        %2424 = vmatprep.mubr.bf16.mxu0 0
        %2425 = vmatmul.mubr.bf16.gmra.mxu0 %v1856
        %v2426 = vpop.f32.mrf.mxu0
        %v2427 = vadd.f32 %v2202, %v2426
        %v2428 = vpop.f32.mrf.mxu0
        %v2429 = vpop.f32.mrf.mxu0
        %v2430 = vadd.f32 %v2205, %v2429
        %v2431 = vpop.f32.mrf.mxu0
        %2432 = vmatprep.mubr.bf16.mxu0 0
        %2433 = vmatmul.mubr.bf16.gmra.mxu0 %v1859
        %v2434 = vpop.f32.mrf.mxu0
        %v2435 = vadd.f32 %v2210, %v2434
        %v2436 = vpop.f32.mrf.mxu0
        %v2437 = vpop.f32.mrf.mxu0
        %v2438 = vadd.f32 %v2213, %v2437
        %v2439 = vpop.f32.mrf.mxu0
        %2440 = vmatprep.mubr.bf16.mxu0 0
        %2441 = vmatmul.mubr.bf16.gmra.mxu0 %v1862
        %v2442 = vpop.f32.mrf.mxu0
        %v2443 = vadd.f32 %v2218, %v2442
        %v2444 = vpop.f32.mrf.mxu0
        %v2445 = vpop.f32.mrf.mxu0
        %v2446 = vadd.f32 %v2221, %v2445
        %v2447 = vpop.f32.mrf.mxu0
        %2448 = vmatprep.mubr.bf16.mxu0 0
        %2449 = vmatmul.mubr.bf16.gmra.mxu0 %v1865
        %v2450 = vpop.f32.mrf.mxu0
        %v2451 = vadd.f32 %v2226, %v2450
        %v2452 = vpop.f32.mrf.mxu0
        %v2453 = vpop.f32.mrf.mxu0
        %v2454 = vadd.f32 %v2229, %v2453
        %v2455 = vpop.f32.mrf.mxu0
        %2456 = vmatprep.mubr.bf16.mxu0 0
        %2457 = vmatmul.mubr.bf16.gmra.mxu0 %v1868
        %v2458 = vpop.f32.mrf.mxu0
        %v2459 = vadd.f32 %v2234, %v2458
        %v2460 = vpop.f32.mrf.mxu0
        %v2461 = vpop.f32.mrf.mxu0
        %v2462 = vadd.f32 %v2237, %v2461
        %v2463 = vpop.f32.mrf.mxu0
        %2464 = vmatprep.mubr.bf16.mxu0 0
        %2465 = vmatmul.mubr.bf16.gmra.mxu0 %v1871
        %v2466 = vpop.f32.mrf.mxu0
        %v2467 = vadd.f32 %v2242, %v2466
        %v2468 = vpop.f32.mrf.mxu0
        %v2469 = vpop.f32.mrf.mxu0
        %v2470 = vadd.f32 %v2245, %v2469
        %v2471 = vpop.f32.mrf.mxu0
        %2472 = vmatprep.mubr.bf16.mxu0 0
        %2473 = vmatmul.mubr.bf16.gmra.mxu0 %v1874
        %v2474 = vpop.f32.mrf.mxu0
        %v2475 = vadd.f32 %v2250, %v2474
        %v2476 = vpop.f32.mrf.mxu0
        %v2477 = vpop.f32.mrf.mxu0
        %v2478 = vadd.f32 %v2253, %v2477
        %v2479 = vpop.f32.mrf.mxu0
        %2480 = vmatprep.mubr.bf16.mxu0 0
        %2481 = vmatmul.mubr.bf16.gmra.mxu0 %v1877
        %v2482 = vpop.f32.mrf.mxu0
        %v2483 = vadd.f32 %v2258, %v2482
        %v2484 = vpop.f32.mrf.mxu0
        %v2485 = vpop.f32.mrf.mxu0
        %v2486 = vadd.f32 %v2261, %v2485
        %v2487 = vpop.f32.mrf.mxu0
        %2488 = vmatprep.mubr.bf16.mxu0 0
        %2489 = vmatmul.mubr.bf16.gmra.mxu0 %v1880
        %v2490 = vpop.f32.mrf.mxu0
        %v2491 = vadd.f32 %v2266, %v2490
        %v2492 = vpop.f32.mrf.mxu0
        %v2493 = vpop.f32.mrf.mxu0
        %v2494 = vadd.f32 %v2269, %v2493
        %v2495 = vpop.f32.mrf.mxu0
        %2496 = vmatprep.mubr.bf16.mxu0 0
        %2497 = vmatmul.mubr.bf16.gmra.mxu0 %v1883
        %v2498 = vpop.f32.mrf.mxu0
        %v2499 = vadd.f32 %v2274, %v2498
        %v2500 = vpop.f32.mrf.mxu0
        %v2501 = vpop.f32.mrf.mxu0
        %v2502 = vadd.f32 %v2277, %v2501
        %v2503 = vpop.f32.mrf.mxu0
        %2504 = vmatprep.mubr.bf16.mxu0 0
        %2505 = vmatmul.mubr.bf16.gmra.mxu0 %v1886
        %v2506 = vpop.f32.mrf.mxu0
        %v2507 = vadd.f32 %v2282, %v2506
        %v2508 = vpop.f32.mrf.mxu0
        %v2509 = vpop.f32.mrf.mxu0
        %v2510 = vadd.f32 %v2285, %v2509
        %v2511 = vpop.f32.mrf.mxu0
        %2512 = vmatprep.mubr.bf16.mxu0 0
        %2513 = vmatmul.mubr.bf16.gmra.mxu0 %v1889
        %v2514 = vpop.f32.mrf.mxu0
        %v2515 = vadd.f32 %v2290, %v2514
        %v2516 = vpop.f32.mrf.mxu0
        %v2517 = vpop.f32.mrf.mxu0
        %v2518 = vadd.f32 %v2293, %v2517
        %v2519 = vpop.f32.mrf.mxu0
        %2520 = vmatprep.mubr.bf16.mxu0 0
        %2521 = vmatmul.mubr.bf16.gmra.mxu0 %v1892
        %v2522 = vpop.f32.mrf.mxu0
        %v2523 = vadd.f32 %v2298, %v2522
        %v2524 = vpop.f32.mrf.mxu0
        %v2525 = vpop.f32.mrf.mxu0
        %v2526 = vadd.f32 %v2301, %v2525
        %v2527 = vpop.f32.mrf.mxu0
        %2528 = vmatprep.mubr.bf16.mxu0 0
        %2529 = vmatmul.mubr.bf16.gmra.mxu0 %v1895
        %v2530 = vpop.f32.mrf.mxu0
        %v2531 = vadd.f32 %v2306, %v2530
        %v2532 = vpop.f32.mrf.mxu0
        %v2533 = vpop.f32.mrf.mxu0
        %v2534 = vadd.f32 %v2309, %v2533
        %v2535 = vpop.f32.mrf.mxu0
        %2536 = vmatprep.mubr.bf16.mxu0 0
        %2537 = vmatmul.mubr.bf16.gmra.mxu0 %v1898
        %v2538 = vpop.f32.mrf.mxu0
        %v2539 = vadd.f32 %v2314, %v2538
        %v2540 = vpop.f32.mrf.mxu0
        %v2541 = vpop.f32.mrf.mxu0
        %v2542 = vadd.f32 %v2317, %v2541
        %v2543 = vpop.f32.mrf.mxu0
        %2544 = vmatprep.mubr.bf16.mxu0 0
        %2545 = vmatmul.mubr.bf16.gmra.mxu0 %v1901
        %v2546 = vpop.f32.mrf.mxu0
        %v2547 = vadd.f32 %v2322, %v2546
        %v2548 = vpop.f32.mrf.mxu0
        %v2549 = vpop.f32.mrf.mxu0
        %v2550 = vadd.f32 %v2325, %v2549
        %v2551 = vpop.f32.mrf.mxu0
        %2552 = vmatprep.mubr.bf16.mxu0 0
        %2553 = vmatmul.mubr.bf16.gmra.mxu0 %v1904
        %v2554 = vpop.f32.mrf.mxu0
        %v2555 = vadd.f32 %v2330, %v2554
        %v2556 = vpop.f32.mrf.mxu0
        %v2557 = vpop.f32.mrf.mxu0
        %v2558 = vadd.f32 %v2333, %v2557
        %v2559 = vpop.f32.mrf.mxu0
        %2560 = vmatprep.mubr.bf16.mxu0 0
        %2561 = vmatmul.mubr.bf16.gmra.mxu0 %v1907
        %v2562 = vpop.f32.mrf.mxu0
        %v2563 = vadd.f32 %v2338, %v2562
        %v2564 = vpop.f32.mrf.mxu0
        %v2565 = vpop.f32.mrf.mxu0
        %v2566 = vadd.f32 %v2341, %v2565
        %v2567 = vpop.f32.mrf.mxu0
        %2568 = vmatprep.mubr.bf16.mxu0 0
        %2569 = vmatmul.mubr.bf16.gmra.mxu0 %v1910
        %v2570 = vpop.f32.mrf.mxu0
        %v2571 = vadd.f32 %v2346, %v2570
        %v2572 = vpop.f32.mrf.mxu0
        %v2573 = vpop.f32.mrf.mxu0
        %v2574 = vadd.f32 %v2349, %v2573
        %v2575 = vpop.f32.mrf.mxu0
        %2576 = vdwg.mxu0
        %s2577 = scalar_lea.vmem [#allocation13], %s312
        %2578 = vst [vmem:[%s2577] sm:$0xff] %v2387
        %2579 = vst [vmem:[%s2577 + $0x8] sm:$0xff] %v2390
        %2580 = vst [vmem:[%s2577 + $0x10] sm:$0xff] %v2395
        %2581 = vst [vmem:[%s2577 + $0x18] sm:$0xff] %v2398
        %2582 = vst [vmem:[%s2577 + $0x20] sm:$0xff] %v2403
        %2583 = vst [vmem:[%s2577 + $0x28] sm:$0xff] %v2406
        %2584 = vst [vmem:[%s2577 + $0x30] sm:$0xff] %v2411
        %2585 = vst [vmem:[%s2577 + $0x38] sm:$0xff] %v2414
        %2586 = vst [vmem:[%s2577 + $0x40] sm:$0xff] %v2419
        %2587 = vst [vmem:[%s2577 + $0x48] sm:$0xff] %v2422
        %2588 = vst [vmem:[%s2577 + $0x50] sm:$0xff] %v2427
        %2589 = vst [vmem:[%s2577 + $0x58] sm:$0xff] %v2430
        %2590 = vst [vmem:[%s2577 + $0x60] sm:$0xff] %v2435
        %2591 = vst [vmem:[%s2577 + $0x68] sm:$0xff] %v2438
        %2592 = vst [vmem:[%s2577 + $0x70] sm:$0xff] %v2443
        %2593 = vst [vmem:[%s2577 + $0x78] sm:$0xff] %v2446
        %2594 = vst [vmem:[%s2577 + $0x80] sm:$0xff] %v2451
        %2595 = vst [vmem:[%s2577 + $0x88] sm:$0xff] %v2454
        %2596 = vst [vmem:[%s2577 + $0x90] sm:$0xff] %v2459
        %2597 = vst [vmem:[%s2577 + $0x98] sm:$0xff] %v2462
        %2598 = vst [vmem:[%s2577 + $0xa0] sm:$0xff] %v2467
        %2599 = vst [vmem:[%s2577 + $0xa8] sm:$0xff] %v2470
        %2600 = vst [vmem:[%s2577 + $0xb0] sm:$0xff] %v2475
        %2601 = vst [vmem:[%s2577 + $0xb8] sm:$0xff] %v2478
        %2602 = vst [vmem:[%s2577 + $0xc0] sm:$0xff] %v2483
        %2603 = vst [vmem:[%s2577 + $0xc8] sm:$0xff] %v2486
        %2604 = vst [vmem:[%s2577 + $0xd0] sm:$0xff] %v2491
        %2605 = vst [vmem:[%s2577 + $0xd8] sm:$0xff] %v2494
        %2606 = vst [vmem:[%s2577 + $0xe0] sm:$0xff] %v2499
        %2607 = vst [vmem:[%s2577 + $0xe8] sm:$0xff] %v2502
        %2608 = vst [vmem:[%s2577 + $0xf0] sm:$0xff] %v2507
        %2609 = vst [vmem:[%s2577 + $0xf8] sm:$0xff] %v2510
        %2610 = vst [vmem:[%s2577 + $0x100] sm:$0xff] %v2515
        %2611 = vst [vmem:[%s2577 + $0x108] sm:$0xff] %v2518
        %2612 = vst [vmem:[%s2577 + $0x110] sm:$0xff] %v2523
        %2613 = vst [vmem:[%s2577 + $0x118] sm:$0xff] %v2526
        %2614 = vst [vmem:[%s2577 + $0x120] sm:$0xff] %v2531
        %2615 = vst [vmem:[%s2577 + $0x128] sm:$0xff] %v2534
        %2616 = vst [vmem:[%s2577 + $0x130] sm:$0xff] %v2539
        %2617 = vst [vmem:[%s2577 + $0x138] sm:$0xff] %v2542
        %2618 = vst [vmem:[%s2577 + $0x140] sm:$0xff] %v2547
        %2619 = vst [vmem:[%s2577 + $0x148] sm:$0xff] %v2550
        %2620 = vst [vmem:[%s2577 + $0x150] sm:$0xff] %v2555
        %2621 = vst [vmem:[%s2577 + $0x158] sm:$0xff] %v2558
        %2622 = vst [vmem:[%s2577 + $0x160] sm:$0xff] %v2563
        %2623 = vst [vmem:[%s2577 + $0x168] sm:$0xff] %v2566
        %2624 = vst [vmem:[%s2577 + $0x170] sm:$0xff] %v2571
        %2625 = vst [vmem:[%s2577 + $0x178] sm:$0xff] %v2574
        // Predicated region
        $region61: #{tpu_custom_call.1} parent=39 // pred_check
          %p2626 = pneg %p313
        $region62: #{tpu_custom_call.1} parent=39 // pred_check_branch
          %2628 = sbr.rel (%p2626) target = $region64
        $region63: #{tpu_custom_call.1} parent=39 // pred_region
          %v2629 = vlaneseq
          %v2630 = vshrl.u32 %v2629, 7
          %v2631 = vadd.s32 %v2630, 8
          %v2632 = vadd.s32 %v2630, 16
          %v2633 = vadd.s32 %v2630, 24
          %v2634 = vadd.s32 %v2630, 32
          %v2635 = vadd.s32 %v2630, 40
          %v2636 = vadd.s32 %v2630, 48
          %v2637 = vadd.s32 %v2630, 56
          %v2638 = vadd.s32 %v2630, 64
          %v2639 = vadd.s32 %v2630, 72
          %v2640 = vadd.s32 %v2630, 80
          %v2641 = vadd.s32 %v2630, 88
          %v2642 = vadd.s32 %v2630, 96
          %v2643 = vadd.s32 %v2630, 104
          %v2644 = vadd.s32 %v2630, 112
          %v2645 = vadd.s32 %v2630, 120
          %v2646 = vadd.s32 %v2630, 128
          %v2647 = vadd.s32 %v2630, 136
          %v2648 = vadd.s32 %v2630, 144
          %v2649 = vadd.s32 %v2630, 152
          %v2650 = vadd.s32 %v2630, 160
          %v2651 = vadd.s32 %v2630, 168
          %v2652 = vadd.s32 %v2630, 176
          %v2653 = vadd.s32 %v2630, 184
          %v2654 = vadd.s32 %v2630, 192
          %v2655 = vadd.s32 %v2630, 200
          %v2656 = vadd.s32 %v2630, 208
          %v2657 = vadd.s32 %v2630, 216
          %v2658 = vadd.s32 %v2630, 224
          %v2659 = vadd.s32 %v2630, 232
          %v2660 = vadd.s32 %v2630, 240
          %v2661 = vadd.s32 %v2630, 248
          %v2662 = vadd.s32 %v2630, 256
          %v2663 = vadd.s32 %v2630, 264
          %v2664 = vadd.s32 %v2630, 272
          %v2665 = vadd.s32 %v2630, 280
          %v2666 = vadd.s32 %v2630, 288
          %v2667 = vadd.s32 %v2630, 296
          %v2668 = vadd.s32 %v2630, 304
          %v2669 = vadd.s32 %v2630, 312
          %v2670 = vadd.s32 %v2630, 320
          %v2671 = vadd.s32 %v2630, 328
          %v2672 = vadd.s32 %v2630, 336
          %v2673 = vadd.s32 %v2630, 344
          %v2674 = vadd.s32 %v2630, 352
          %v2675 = vadd.s32 %v2630, 360
          %v2676 = vadd.s32 %v2630, 368
          %v2677 = vadd.s32 %v2630, 376
          %v2678 = vstv %s312
          %v2679 = vadd.s32 %v2630, %v2678
          %v2680 = vadd.s32 %v2631, %v2678
          %v2681 = vadd.s32 %v2632, %v2678
          %v2682 = vadd.s32 %v2633, %v2678
          %v2683 = vadd.s32 %v2634, %v2678
          %v2684 = vadd.s32 %v2635, %v2678
          %v2685 = vadd.s32 %v2636, %v2678
          %v2686 = vadd.s32 %v2637, %v2678
          %v2687 = vadd.s32 %v2638, %v2678
          %v2688 = vadd.s32 %v2639, %v2678
          %v2689 = vadd.s32 %v2640, %v2678
          %v2690 = vadd.s32 %v2641, %v2678
          %v2691 = vadd.s32 %v2642, %v2678
          %v2692 = vadd.s32 %v2643, %v2678
          %v2693 = vadd.s32 %v2644, %v2678
          %v2694 = vadd.s32 %v2645, %v2678
          %v2695 = vadd.s32 %v2646, %v2678
          %v2696 = vadd.s32 %v2647, %v2678
          %v2697 = vadd.s32 %v2648, %v2678
          %v2698 = vadd.s32 %v2649, %v2678
          %v2699 = vadd.s32 %v2650, %v2678
          %v2700 = vadd.s32 %v2651, %v2678
          %v2701 = vadd.s32 %v2652, %v2678
          %v2702 = vadd.s32 %v2653, %v2678
          %v2703 = vadd.s32 %v2654, %v2678
          %v2704 = vadd.s32 %v2655, %v2678
          %v2705 = vadd.s32 %v2656, %v2678
          %v2706 = vadd.s32 %v2657, %v2678
          %v2707 = vadd.s32 %v2658, %v2678
          %v2708 = vadd.s32 %v2659, %v2678
          %v2709 = vadd.s32 %v2660, %v2678
          %v2710 = vadd.s32 %v2661, %v2678
          %v2711 = vadd.s32 %v2662, %v2678
          %v2712 = vadd.s32 %v2663, %v2678
          %v2713 = vadd.s32 %v2664, %v2678
          %v2714 = vadd.s32 %v2665, %v2678
          %v2715 = vadd.s32 %v2666, %v2678
          %v2716 = vadd.s32 %v2667, %v2678
          %v2717 = vadd.s32 %v2668, %v2678
          %v2718 = vadd.s32 %v2669, %v2678
          %v2719 = vadd.s32 %v2670, %v2678
          %v2720 = vadd.s32 %v2671, %v2678
          %v2721 = vadd.s32 %v2672, %v2678
          %v2722 = vadd.s32 %v2673, %v2678
          %v2723 = vadd.s32 %v2674, %v2678
          %v2724 = vadd.s32 %v2675, %v2678
          %v2725 = vadd.s32 %v2676, %v2678
          %v2726 = vadd.s32 %v2677, %v2678
          %vm2727 = vcmp.lt.s32.totalorder %v2679, 300
          %vm2728 = vcmp.lt.s32.totalorder %v2680, 300
          %vm2729 = vcmp.lt.s32.totalorder %v2681, 300
          %vm2730 = vcmp.lt.s32.totalorder %v2682, 300
          %vm2731 = vcmp.lt.s32.totalorder %v2683, 300
          %vm2732 = vcmp.lt.s32.totalorder %v2684, 300
          %vm2733 = vcmp.lt.s32.totalorder %v2685, 300
          %vm2734 = vcmp.lt.s32.totalorder %v2686, 300
          %vm2735 = vcmp.lt.s32.totalorder %v2687, 300
          %vm2736 = vcmp.lt.s32.totalorder %v2688, 300
          %vm2737 = vcmp.lt.s32.totalorder %v2689, 300
          %vm2738 = vcmp.lt.s32.totalorder %v2690, 300
          %vm2739 = vcmp.lt.s32.totalorder %v2691, 300
          %vm2740 = vcmp.lt.s32.totalorder %v2692, 300
          %vm2741 = vcmp.lt.s32.totalorder %v2693, 300
          %vm2742 = vcmp.lt.s32.totalorder %v2694, 300
          %vm2743 = vcmp.lt.s32.totalorder %v2695, 300
          %vm2744 = vcmp.lt.s32.totalorder %v2696, 300
          %vm2745 = vcmp.lt.s32.totalorder %v2697, 300
          %vm2746 = vcmp.lt.s32.totalorder %v2698, 300
          %vm2747 = vcmp.lt.s32.totalorder %v2699, 300
          %vm2748 = vcmp.lt.s32.totalorder %v2700, 300
          %vm2749 = vcmp.lt.s32.totalorder %v2701, 300
          %vm2750 = vcmp.lt.s32.totalorder %v2702, 300
          %vm2751 = vcmp.lt.s32.totalorder %v2703, 300
          %vm2752 = vcmp.lt.s32.totalorder %v2704, 300
          %vm2753 = vcmp.lt.s32.totalorder %v2705, 300
          %vm2754 = vcmp.lt.s32.totalorder %v2706, 300
          %vm2755 = vcmp.lt.s32.totalorder %v2707, 300
          %vm2756 = vcmp.lt.s32.totalorder %v2708, 300
          %vm2757 = vcmp.lt.s32.totalorder %v2709, 300
          %vm2758 = vcmp.lt.s32.totalorder %v2710, 300
          %vm2759 = vcmp.lt.s32.totalorder %v2711, 300
          %vm2760 = vcmp.lt.s32.totalorder %v2712, 300
          %vm2761 = vcmp.lt.s32.totalorder %v2713, 300
          %vm2762 = vcmp.lt.s32.totalorder %v2714, 300
          %vm2763 = vcmp.lt.s32.totalorder %v2715, 300
          %vm2764 = vcmp.lt.s32.totalorder %v2716, 300
          %vm2765 = vcmp.lt.s32.totalorder %v2717, 300
          %vm2766 = vcmp.lt.s32.totalorder %v2718, 300
          %vm2767 = vcmp.lt.s32.totalorder %v2719, 300
          %vm2768 = vcmp.lt.s32.totalorder %v2720, 300
          %vm2769 = vcmp.lt.s32.totalorder %v2721, 300
          %vm2770 = vcmp.lt.s32.totalorder %v2722, 300
          %vm2771 = vcmp.lt.s32.totalorder %v2723, 300
          %vm2772 = vcmp.lt.s32.totalorder %v2724, 300
          %vm2773 = vcmp.lt.s32.totalorder %v2725, 300
          %vm2774 = vcmp.lt.s32.totalorder %v2726, 300
          %v2775 = vsel %vm2727, 1, 0
          %v2776 = vsel %vm2728, 1, 0
          %v2777 = vsel %vm2729, 1, 0
          %v2778 = vsel %vm2730, 1, 0
          %v2779 = vsel %vm2731, 1, 0
          %v2780 = vsel %vm2732, 1, 0
          %v2781 = vsel %vm2733, 1, 0
          %v2782 = vsel %vm2734, 1, 0
          %v2783 = vsel %vm2735, 1, 0
          %v2784 = vsel %vm2736, 1, 0
          %v2785 = vsel %vm2737, 1, 0
          %v2786 = vsel %vm2738, 1, 0
          %v2787 = vsel %vm2739, 1, 0
          %v2788 = vsel %vm2740, 1, 0
          %v2789 = vsel %vm2741, 1, 0
          %v2790 = vsel %vm2742, 1, 0
          %v2791 = vsel %vm2743, 1, 0
          %v2792 = vsel %vm2744, 1, 0
          %v2793 = vsel %vm2745, 1, 0
          %v2794 = vsel %vm2746, 1, 0
          %v2795 = vsel %vm2747, 1, 0
          %v2796 = vsel %vm2748, 1, 0
          %v2797 = vsel %vm2749, 1, 0
          %v2798 = vsel %vm2750, 1, 0
          %v2799 = vsel %vm2751, 1, 0
          %v2800 = vsel %vm2752, 1, 0
          %v2801 = vsel %vm2753, 1, 0
          %v2802 = vsel %vm2754, 1, 0
          %v2803 = vsel %vm2755, 1, 0
          %v2804 = vsel %vm2756, 1, 0
          %v2805 = vsel %vm2757, 1, 0
          %v2806 = vsel %vm2758, 1, 0
          %v2807 = vsel %vm2759, 1, 0
          %v2808 = vsel %vm2760, 1, 0
          %v2809 = vsel %vm2761, 1, 0
          %v2810 = vsel %vm2762, 1, 0
          %v2811 = vsel %vm2763, 1, 0
          %v2812 = vsel %vm2764, 1, 0
          %v2813 = vsel %vm2765, 1, 0
          %v2814 = vsel %vm2766, 1, 0
          %v2815 = vsel %vm2767, 1, 0
          %v2816 = vsel %vm2768, 1, 0
          %v2817 = vsel %vm2769, 1, 0
          %v2818 = vsel %vm2770, 1, 0
          %v2819 = vsel %vm2771, 1, 0
          %v2820 = vsel %vm2772, 1, 0
          %v2821 = vsel %vm2773, 1, 0
          %v2822 = vsel %vm2774, 1, 0
          %vm2823 = vcmp.eq.s32.totalorder %v2775, 1
          %vm2824 = vcmp.eq.s32.totalorder %v2776, 1
          %vm2825 = vcmp.eq.s32.totalorder %v2777, 1
          %vm2826 = vcmp.eq.s32.totalorder %v2778, 1
          %vm2827 = vcmp.eq.s32.totalorder %v2779, 1
          %vm2828 = vcmp.eq.s32.totalorder %v2780, 1
          %vm2829 = vcmp.eq.s32.totalorder %v2781, 1
          %vm2830 = vcmp.eq.s32.totalorder %v2782, 1
          %vm2831 = vcmp.eq.s32.totalorder %v2783, 1
          %vm2832 = vcmp.eq.s32.totalorder %v2784, 1
          %vm2833 = vcmp.eq.s32.totalorder %v2785, 1
          %vm2834 = vcmp.eq.s32.totalorder %v2786, 1
          %vm2835 = vcmp.eq.s32.totalorder %v2787, 1
          %vm2836 = vcmp.eq.s32.totalorder %v2788, 1
          %vm2837 = vcmp.eq.s32.totalorder %v2789, 1
          %vm2838 = vcmp.eq.s32.totalorder %v2790, 1
          %vm2839 = vcmp.eq.s32.totalorder %v2791, 1
          %vm2840 = vcmp.eq.s32.totalorder %v2792, 1
          %vm2841 = vcmp.eq.s32.totalorder %v2793, 1
          %vm2842 = vcmp.eq.s32.totalorder %v2794, 1
          %vm2843 = vcmp.eq.s32.totalorder %v2795, 1
          %vm2844 = vcmp.eq.s32.totalorder %v2796, 1
          %vm2845 = vcmp.eq.s32.totalorder %v2797, 1
          %vm2846 = vcmp.eq.s32.totalorder %v2798, 1
          %vm2847 = vcmp.eq.s32.totalorder %v2799, 1
          %vm2848 = vcmp.eq.s32.totalorder %v2800, 1
          %vm2849 = vcmp.eq.s32.totalorder %v2801, 1
          %vm2850 = vcmp.eq.s32.totalorder %v2802, 1
          %vm2851 = vcmp.eq.s32.totalorder %v2803, 1
          %vm2852 = vcmp.eq.s32.totalorder %v2804, 1
          %vm2853 = vcmp.eq.s32.totalorder %v2805, 1
          %vm2854 = vcmp.eq.s32.totalorder %v2806, 1
          %vm2855 = vcmp.eq.s32.totalorder %v2807, 1
          %vm2856 = vcmp.eq.s32.totalorder %v2808, 1
          %vm2857 = vcmp.eq.s32.totalorder %v2809, 1
          %vm2858 = vcmp.eq.s32.totalorder %v2810, 1
          %vm2859 = vcmp.eq.s32.totalorder %v2811, 1
          %vm2860 = vcmp.eq.s32.totalorder %v2812, 1
          %vm2861 = vcmp.eq.s32.totalorder %v2813, 1
          %vm2862 = vcmp.eq.s32.totalorder %v2814, 1
          %vm2863 = vcmp.eq.s32.totalorder %v2815, 1
          %vm2864 = vcmp.eq.s32.totalorder %v2816, 1
          %vm2865 = vcmp.eq.s32.totalorder %v2817, 1
          %vm2866 = vcmp.eq.s32.totalorder %v2818, 1
          %vm2867 = vcmp.eq.s32.totalorder %v2819, 1
          %vm2868 = vcmp.eq.s32.totalorder %v2820, 1
          %vm2869 = vcmp.eq.s32.totalorder %v2821, 1
          %vm2870 = vcmp.eq.s32.totalorder %v2822, 1
          %v2871 = vsel %vm2823, %v2387, 0.0
          %v2872 = vsel %vm2824, %v2390, 0.0
          %v2873 = vsel %vm2825, %v2395, 0.0
          %v2874 = vsel %vm2826, %v2398, 0.0
          %v2875 = vsel %vm2827, %v2403, 0.0
          %v2876 = vsel %vm2828, %v2406, 0.0
          %v2877 = vsel %vm2829, %v2411, 0.0
          %v2878 = vsel %vm2830, %v2414, 0.0
          %v2879 = vsel %vm2831, %v2419, 0.0
          %v2880 = vsel %vm2832, %v2422, 0.0
          %v2881 = vsel %vm2833, %v2427, 0.0
          %v2882 = vsel %vm2834, %v2430, 0.0
          %v2883 = vsel %vm2835, %v2435, 0.0
          %v2884 = vsel %vm2836, %v2438, 0.0
          %v2885 = vsel %vm2837, %v2443, 0.0
          %v2886 = vsel %vm2838, %v2446, 0.0
          %v2887 = vsel %vm2839, %v2451, 0.0
          %v2888 = vsel %vm2840, %v2454, 0.0
          %v2889 = vsel %vm2841, %v2459, 0.0
          %v2890 = vsel %vm2842, %v2462, 0.0
          %v2891 = vsel %vm2843, %v2467, 0.0
          %v2892 = vsel %vm2844, %v2470, 0.0
          %v2893 = vsel %vm2845, %v2475, 0.0
          %v2894 = vsel %vm2846, %v2478, 0.0
          %v2895 = vsel %vm2847, %v2483, 0.0
          %v2896 = vsel %vm2848, %v2486, 0.0
          %v2897 = vsel %vm2849, %v2491, 0.0
          %v2898 = vsel %vm2850, %v2494, 0.0
          %v2899 = vsel %vm2851, %v2499, 0.0
          %v2900 = vsel %vm2852, %v2502, 0.0
          %v2901 = vsel %vm2853, %v2507, 0.0
          %v2902 = vsel %vm2854, %v2510, 0.0
          %v2903 = vsel %vm2855, %v2515, 0.0
          %v2904 = vsel %vm2856, %v2518, 0.0
          %v2905 = vsel %vm2857, %v2523, 0.0
          %v2906 = vsel %vm2858, %v2526, 0.0
          %v2907 = vsel %vm2859, %v2531, 0.0
          %v2908 = vsel %vm2860, %v2534, 0.0
          %v2909 = vsel %vm2861, %v2539, 0.0
          %v2910 = vsel %vm2862, %v2542, 0.0
          %v2911 = vsel %vm2863, %v2547, 0.0
          %v2912 = vsel %vm2864, %v2550, 0.0
          %v2913 = vsel %vm2865, %v2555, 0.0
          %v2914 = vsel %vm2866, %v2558, 0.0
          %v2915 = vsel %vm2867, %v2563, 0.0
          %v2916 = vsel %vm2868, %v2566, 0.0
          %v2917 = vsel %vm2869, %v2571, 0.0
          %v2918 = vsel %vm2870, %v2574, 0.0
          %v2919 = vld [vmem:[#allocation5] sm:$0x1]
          %v2920 = vadd.f32 %v2871, %v2872
          %v2921 = vadd.f32 %v2920, %v2873
          %v2922 = vadd.f32 %v2921, %v2874
          %v2923 = vadd.f32 %v2922, %v2875
          %v2924 = vadd.f32 %v2923, %v2876
          %v2925 = vadd.f32 %v2924, %v2877
          %v2926 = vadd.f32 %v2925, %v2878
          %v2927 = vadd.f32 %v2926, %v2879
          %v2928 = vadd.f32 %v2927, %v2880
          %v2929 = vadd.f32 %v2928, %v2881
          %v2930 = vadd.f32 %v2929, %v2882
          %v2931 = vadd.f32 %v2930, %v2883
          %v2932 = vadd.f32 %v2931, %v2884
          %v2933 = vadd.f32 %v2932, %v2885
          %v2934 = vadd.f32 %v2933, %v2886
          %v2935 = vadd.f32 %v2934, %v2887
          %v2936 = vadd.f32 %v2935, %v2888
          %v2937 = vadd.f32 %v2936, %v2889
          %v2938 = vadd.f32 %v2937, %v2890
          %v2939 = vadd.f32 %v2938, %v2891
          %v2940 = vadd.f32 %v2939, %v2892
          %v2941 = vadd.f32 %v2940, %v2893
          %v2942 = vadd.f32 %v2941, %v2894
          %v2943 = vadd.f32 %v2942, %v2895
          %v2944 = vadd.f32 %v2943, %v2896
          %v2945 = vadd.f32 %v2944, %v2897
          %v2946 = vadd.f32 %v2945, %v2898
          %v2947 = vadd.f32 %v2946, %v2899
          %v2948 = vadd.f32 %v2947, %v2900
          %v2949 = vadd.f32 %v2948, %v2901
          %v2950 = vadd.f32 %v2949, %v2902
          %v2951 = vadd.f32 %v2950, %v2903
          %v2952 = vadd.f32 %v2951, %v2904
          %v2953 = vadd.f32 %v2952, %v2905
          %v2954 = vadd.f32 %v2953, %v2906
          %v2955 = vadd.f32 %v2954, %v2907
          %v2956 = vadd.f32 %v2955, %v2908
          %v2957 = vadd.f32 %v2956, %v2909
          %v2958 = vadd.f32 %v2957, %v2910
          %v2959 = vadd.f32 %v2958, %v2911
          %v2960 = vadd.f32 %v2959, %v2912
          %v2961 = vadd.f32 %v2960, %v2913
          %v2962 = vadd.f32 %v2961, %v2914
          %v2963 = vadd.f32 %v2962, %v2915
          %v2964 = vadd.f32 %v2963, %v2916
          %v2965 = vadd.f32 %v2964, %v2917
          %v2966 = vadd.f32 %v2965, %v2918
          %v2967 = vrot.slane %v2966, 4
          %v2968 = vadd.f32 %v2966, %v2967
          %v2969 = vrot.slane %v2968, 2
          %v2970 = vadd.f32 %v2968, %v2969
          %v2971 = vrot.slane %v2970, 1
          %v2972 = vadd.f32 %v2970, %v2971
          %v2973 = vadd.f32 %v2919, %v2972
          %2974 = vst [vmem:[#allocation5] sm:$0x1] %v2973
          %v2975 = vld [vmem:[#allocation6] sm:$0x1]
          %v2976 = vmul.f32 %v2871, %v2871
          %v2977 = vmul.f32 %v2872, %v2872
          %v2978 = vmul.f32 %v2873, %v2873
          %v2979 = vmul.f32 %v2874, %v2874
          %v2980 = vmul.f32 %v2875, %v2875
          %v2981 = vmul.f32 %v2876, %v2876
          %v2982 = vmul.f32 %v2877, %v2877
          %v2983 = vmul.f32 %v2878, %v2878
          %v2984 = vmul.f32 %v2879, %v2879
          %v2985 = vmul.f32 %v2880, %v2880
          %v2986 = vmul.f32 %v2881, %v2881
          %v2987 = vmul.f32 %v2882, %v2882
          %v2988 = vmul.f32 %v2883, %v2883
          %v2989 = vmul.f32 %v2884, %v2884
          %v2990 = vmul.f32 %v2885, %v2885
          %v2991 = vmul.f32 %v2886, %v2886
          %v2992 = vmul.f32 %v2887, %v2887
          %v2993 = vmul.f32 %v2888, %v2888
          %v2994 = vmul.f32 %v2889, %v2889
          %v2995 = vmul.f32 %v2890, %v2890
          %v2996 = vmul.f32 %v2891, %v2891
          %v2997 = vmul.f32 %v2892, %v2892
          %v2998 = vmul.f32 %v2893, %v2893
          %v2999 = vmul.f32 %v2894, %v2894
          %v3000 = vmul.f32 %v2895, %v2895
          %v3001 = vmul.f32 %v2896, %v2896
          %v3002 = vmul.f32 %v2897, %v2897
          %v3003 = vmul.f32 %v2898, %v2898
          %v3004 = vmul.f32 %v2899, %v2899
          %v3005 = vmul.f32 %v2900, %v2900
          %v3006 = vmul.f32 %v2901, %v2901
          %v3007 = vmul.f32 %v2902, %v2902
          %v3008 = vmul.f32 %v2903, %v2903
          %v3009 = vmul.f32 %v2904, %v2904
          %v3010 = vmul.f32 %v2905, %v2905
          %v3011 = vmul.f32 %v2906, %v2906
          %v3012 = vmul.f32 %v2907, %v2907
          %v3013 = vmul.f32 %v2908, %v2908
          %v3014 = vmul.f32 %v2909, %v2909
          %v3015 = vmul.f32 %v2910, %v2910
          %v3016 = vmul.f32 %v2911, %v2911
          %v3017 = vmul.f32 %v2912, %v2912
          %v3018 = vmul.f32 %v2913, %v2913
          %v3019 = vmul.f32 %v2914, %v2914
          %v3020 = vmul.f32 %v2915, %v2915
          %v3021 = vmul.f32 %v2916, %v2916
          %v3022 = vmul.f32 %v2917, %v2917
          %v3023 = vmul.f32 %v2918, %v2918
          %v3024 = vadd.f32 %v2976, %v2977
          %v3025 = vadd.f32 %v3024, %v2978
          %v3026 = vadd.f32 %v3025, %v2979
          %v3027 = vadd.f32 %v3026, %v2980
          %v3028 = vadd.f32 %v3027, %v2981
          %v3029 = vadd.f32 %v3028, %v2982
          %v3030 = vadd.f32 %v3029, %v2983
          %v3031 = vadd.f32 %v3030, %v2984
          %v3032 = vadd.f32 %v3031, %v2985
          %v3033 = vadd.f32 %v3032, %v2986
          %v3034 = vadd.f32 %v3033, %v2987
          %v3035 = vadd.f32 %v3034, %v2988
          %v3036 = vadd.f32 %v3035, %v2989
          %v3037 = vadd.f32 %v3036, %v2990
          %v3038 = vadd.f32 %v3037, %v2991
          %v3039 = vadd.f32 %v3038, %v2992
          %v3040 = vadd.f32 %v3039, %v2993
          %v3041 = vadd.f32 %v3040, %v2994
          %v3042 = vadd.f32 %v3041, %v2995
          %v3043 = vadd.f32 %v3042, %v2996
          %v3044 = vadd.f32 %v3043, %v2997
          %v3045 = vadd.f32 %v3044, %v2998
          %v3046 = vadd.f32 %v3045, %v2999
          %v3047 = vadd.f32 %v3046, %v3000
          %v3048 = vadd.f32 %v3047, %v3001
          %v3049 = vadd.f32 %v3048, %v3002
          %v3050 = vadd.f32 %v3049, %v3003
          %v3051 = vadd.f32 %v3050, %v3004
          %v3052 = vadd.f32 %v3051, %v3005
          %v3053 = vadd.f32 %v3052, %v3006
          %v3054 = vadd.f32 %v3053, %v3007
          %v3055 = vadd.f32 %v3054, %v3008
          %v3056 = vadd.f32 %v3055, %v3009
          %v3057 = vadd.f32 %v3056, %v3010
          %v3058 = vadd.f32 %v3057, %v3011
          %v3059 = vadd.f32 %v3058, %v3012
          %v3060 = vadd.f32 %v3059, %v3013
          %v3061 = vadd.f32 %v3060, %v3014
          %v3062 = vadd.f32 %v3061, %v3015
          %v3063 = vadd.f32 %v3062, %v3016
          %v3064 = vadd.f32 %v3063, %v3017
          %v3065 = vadd.f32 %v3064, %v3018
          %v3066 = vadd.f32 %v3065, %v3019
          %v3067 = vadd.f32 %v3066, %v3020
          %v3068 = vadd.f32 %v3067, %v3021
          %v3069 = vadd.f32 %v3068, %v3022
          %v3070 = vadd.f32 %v3069, %v3023
          %v3071 = vrot.slane %v3070, 4
          %v3072 = vadd.f32 %v3070, %v3071
          %v3073 = vrot.slane %v3072, 2
          %v3074 = vadd.f32 %v3072, %v3073
          %v3075 = vrot.slane %v3074, 1
          %v3076 = vadd.f32 %v3074, %v3075
          %v3077 = vadd.f32 %v2975, %v3076
          %3078 = vst [vmem:[#allocation6] sm:$0x1] %v3077
        $region64: #{tpu_custom_call.1} parent=39 // pred_fallthru
          _
        %p3079 = pnand %p313, %p315
        %p3080 = pneg %p3079
        // Predicated region
        $region65: #{tpu_custom_call.1} parent=39 // pred_check
          _
        $region66: #{tpu_custom_call.1} parent=39 // pred_check_branch
          %3082 = sbr.rel (%p3079) target = $region68
        $region67: #{tpu_custom_call.1} parent=39 // pred_region
          %v3083 = vld [vmem:[#allocation13] sm:$0xff]
          %v3084 = vld [vmem:[#allocation13 + $0x8] sm:$0xff]
          %v3085 = vld [vmem:[#allocation13 + $0x10] sm:$0xff]
          %v3086 = vld [vmem:[#allocation13 + $0x18] sm:$0xff]
          %v3087 = vld [vmem:[#allocation13 + $0x20] sm:$0xff]
          %v3088 = vld [vmem:[#allocation13 + $0x28] sm:$0xff]
          %v3089 = vld [vmem:[#allocation13 + $0x30] sm:$0xff]
          %v3090 = vld [vmem:[#allocation13 + $0x38] sm:$0xff]
          %v3091 = vld [vmem:[#allocation13 + $0x40] sm:$0xff]
          %v3092 = vld [vmem:[#allocation13 + $0x48] sm:$0xff]
          %v3093 = vld [vmem:[#allocation13 + $0x50] sm:$0xff]
          %v3094 = vld [vmem:[#allocation13 + $0x58] sm:$0xff]
          %v3095 = vld [vmem:[#allocation13 + $0x60] sm:$0xff]
          %v3096 = vld [vmem:[#allocation13 + $0x68] sm:$0xff]
          %v3097 = vld [vmem:[#allocation13 + $0x70] sm:$0xff]
          %v3098 = vld [vmem:[#allocation13 + $0x78] sm:$0xff]
          %v3099 = vld [vmem:[#allocation13 + $0x80] sm:$0xff]
          %v3100 = vld [vmem:[#allocation13 + $0x88] sm:$0xff]
          %v3101 = vld [vmem:[#allocation13 + $0x90] sm:$0xff]
          %v3102 = vld [vmem:[#allocation13 + $0x98] sm:$0xff]
          %v3103 = vld [vmem:[#allocation13 + $0xa0] sm:$0xff]
          %v3104 = vld [vmem:[#allocation13 + $0xa8] sm:$0xff]
          %v3105 = vld [vmem:[#allocation13 + $0xb0] sm:$0xff]
          %v3106 = vld [vmem:[#allocation13 + $0xb8] sm:$0xff]
          %v3107 = vld [vmem:[#allocation13 + $0xc0] sm:$0xff]
          %v3108 = vld [vmem:[#allocation13 + $0xc8] sm:$0xff]
          %v3109 = vld [vmem:[#allocation13 + $0xd0] sm:$0xff]
          %v3110 = vld [vmem:[#allocation13 + $0xd8] sm:$0xff]
          %v3111 = vld [vmem:[#allocation13 + $0xe0] sm:$0xff]
          %v3112 = vld [vmem:[#allocation13 + $0xe8] sm:$0xff]
          %v3113 = vld [vmem:[#allocation13 + $0xf0] sm:$0xff]
          %v3114 = vld [vmem:[#allocation13 + $0xf8] sm:$0xff]
          %v3115 = vld [vmem:[#allocation13 + $0x100] sm:$0xff]
          %v3116 = vld [vmem:[#allocation13 + $0x108] sm:$0xff]
          %v3117 = vld [vmem:[#allocation13 + $0x110] sm:$0xff]
          %v3118 = vld [vmem:[#allocation13 + $0x118] sm:$0xff]
          %v3119 = vld [vmem:[#allocation13 + $0x120] sm:$0xff]
          %v3120 = vld [vmem:[#allocation13 + $0x128] sm:$0xff]
          %v3121 = vld [vmem:[#allocation13 + $0x130] sm:$0xff]
          %v3122 = vld [vmem:[#allocation13 + $0x138] sm:$0xff]
          %v3123 = vld [vmem:[#allocation13 + $0x140] sm:$0xff]
          %v3124 = vld [vmem:[#allocation13 + $0x148] sm:$0xff]
          %v3125 = vld [vmem:[#allocation13 + $0x150] sm:$0xff]
          %v3126 = vld [vmem:[#allocation13 + $0x158] sm:$0xff]
          %v3127 = vld [vmem:[#allocation13 + $0x160] sm:$0xff]
          %v3128 = vld [vmem:[#allocation13 + $0x168] sm:$0xff]
          %v3129 = vld [vmem:[#allocation13 + $0x170] sm:$0xff]
          %v3130 = vld [vmem:[#allocation13 + $0x178] sm:$0xff]
          %v3131 = vld [vmem:[#allocation5] sm:$0x1]
          %v3132 = vmul.f32 %v3131, 0.0033333334
          %v3133 = vld [vmem:[#allocation6] sm:$0x1]
          %v3134 = vmul.f32 %v3133, 0.0033333334
          %v3135 = vmul.f32 %v3132, %v3132
          %v3136 = vsub.f32 %v3134, %v3135
          %v3138 = vlaneseq
          %v3139 = vshrl.u32 %v3138, 7
          %v3140 = vsub.s32 0, %v3139
          %v3141 = vrot.slane %v3132, %v3140
          %v3143 = vsub.f32 %v3083, %v3141
          %v3144 = vsub.f32 %v3084, %v3141
          %v3145 = vsub.f32 %v3085, %v3141
          %v3146 = vsub.f32 %v3086, %v3141
          %v3147 = vsub.f32 %v3087, %v3141
          %v3148 = vsub.f32 %v3088, %v3141
          %v3149 = vsub.f32 %v3089, %v3141
          %v3150 = vsub.f32 %v3090, %v3141
          %v3151 = vsub.f32 %v3091, %v3141
          %v3152 = vsub.f32 %v3092, %v3141
          %v3153 = vsub.f32 %v3093, %v3141
          %v3154 = vsub.f32 %v3094, %v3141
          %v3155 = vsub.f32 %v3095, %v3141
          %v3156 = vsub.f32 %v3096, %v3141
          %v3157 = vsub.f32 %v3097, %v3141
          %v3158 = vsub.f32 %v3098, %v3141
          %v3159 = vsub.f32 %v3099, %v3141
          %v3160 = vsub.f32 %v3100, %v3141
          %v3161 = vsub.f32 %v3101, %v3141
          %v3162 = vsub.f32 %v3102, %v3141
          %v3163 = vsub.f32 %v3103, %v3141
          %v3164 = vsub.f32 %v3104, %v3141
          %v3165 = vsub.f32 %v3105, %v3141
          %v3166 = vsub.f32 %v3106, %v3141
          %v3167 = vsub.f32 %v3107, %v3141
          %v3168 = vsub.f32 %v3108, %v3141
          %v3169 = vsub.f32 %v3109, %v3141
          %v3170 = vsub.f32 %v3110, %v3141
          %v3171 = vsub.f32 %v3111, %v3141
          %v3172 = vsub.f32 %v3112, %v3141
          %v3173 = vsub.f32 %v3113, %v3141
          %v3174 = vsub.f32 %v3114, %v3141
          %v3175 = vsub.f32 %v3115, %v3141
          %v3176 = vsub.f32 %v3116, %v3141
          %v3177 = vsub.f32 %v3117, %v3141
          %v3178 = vsub.f32 %v3118, %v3141
          %v3179 = vsub.f32 %v3119, %v3141
          %v3180 = vsub.f32 %v3120, %v3141
          %v3181 = vsub.f32 %v3121, %v3141
          %v3182 = vsub.f32 %v3122, %v3141
          %v3183 = vsub.f32 %v3123, %v3141
          %v3184 = vsub.f32 %v3124, %v3141
          %v3185 = vsub.f32 %v3125, %v3141
          %v3186 = vsub.f32 %v3126, %v3141
          %v3187 = vsub.f32 %v3127, %v3141
          %v3188 = vsub.f32 %v3128, %v3141
          %v3189 = vsub.f32 %v3129, %v3141
          %v3190 = vsub.f32 %v3130, %v3141
          %v3191 = vadd.f32 %v3136, 1e-05
          %v3192 = vrsqrt.pop %v3191
          %v3194 = vlaneseq
          %v3195 = vshrl.u32 %v3194, 7
          %v3196 = vsub.s32 0, %v3195
          %v3197 = vrot.slane %v3192, %v3196
          %v3199 = vmul.f32 %v3143, %v3197
          %v3200 = vmul.f32 %v3144, %v3197
          %v3201 = vmul.f32 %v3145, %v3197
          %v3202 = vmul.f32 %v3146, %v3197
          %v3203 = vmul.f32 %v3147, %v3197
          %v3204 = vmul.f32 %v3148, %v3197
          %v3205 = vmul.f32 %v3149, %v3197
          %v3206 = vmul.f32 %v3150, %v3197
          %v3207 = vmul.f32 %v3151, %v3197
          %v3208 = vmul.f32 %v3152, %v3197
          %v3209 = vmul.f32 %v3153, %v3197
          %v3210 = vmul.f32 %v3154, %v3197
          %v3211 = vmul.f32 %v3155, %v3197
          %v3212 = vmul.f32 %v3156, %v3197
          %v3213 = vmul.f32 %v3157, %v3197
          %v3214 = vmul.f32 %v3158, %v3197
          %v3215 = vmul.f32 %v3159, %v3197
          %v3216 = vmul.f32 %v3160, %v3197
          %v3217 = vmul.f32 %v3161, %v3197
          %v3218 = vmul.f32 %v3162, %v3197
          %v3219 = vmul.f32 %v3163, %v3197
          %v3220 = vmul.f32 %v3164, %v3197
          %v3221 = vmul.f32 %v3165, %v3197
          %v3222 = vmul.f32 %v3166, %v3197
          %v3223 = vmul.f32 %v3167, %v3197
          %v3224 = vmul.f32 %v3168, %v3197
          %v3225 = vmul.f32 %v3169, %v3197
          %v3226 = vmul.f32 %v3170, %v3197
          %v3227 = vmul.f32 %v3171, %v3197
          %v3228 = vmul.f32 %v3172, %v3197
          %v3229 = vmul.f32 %v3173, %v3197
          %v3230 = vmul.f32 %v3174, %v3197
          %v3231 = vmul.f32 %v3175, %v3197
          %v3232 = vmul.f32 %v3176, %v3197
          %v3233 = vmul.f32 %v3177, %v3197
          %v3234 = vmul.f32 %v3178, %v3197
          %v3235 = vmul.f32 %v3179, %v3197
          %v3236 = vmul.f32 %v3180, %v3197
          %v3237 = vmul.f32 %v3181, %v3197
          %v3238 = vmul.f32 %v3182, %v3197
          %v3239 = vmul.f32 %v3183, %v3197
          %v3240 = vmul.f32 %v3184, %v3197
          %v3241 = vmul.f32 %v3185, %v3197
          %v3242 = vmul.f32 %v3186, %v3197
          %v3243 = vmul.f32 %v3187, %v3197
          %v3244 = vmul.f32 %v3188, %v3197
          %v3245 = vmul.f32 %v3189, %v3197
          %v3246 = vmul.f32 %v3190, %v3197
          %v3247 = vld [vmem:[%s307] sm:$0x1]
          %v3249 = vlaneseq
          %v3250 = vshrl.u32 %v3249, 7
          %v3251 = vsub.s32 0, %v3250
          %v3252 = vrot.slane %v3247, %v3251
          %v3254 = vmul.f32 %v3199, %v3252
          %v3255 = vmul.f32 %v3200, %v3252
          %v3256 = vmul.f32 %v3201, %v3252
          %v3257 = vmul.f32 %v3202, %v3252
          %v3258 = vmul.f32 %v3203, %v3252
          %v3259 = vmul.f32 %v3204, %v3252
          %v3260 = vmul.f32 %v3205, %v3252
          %v3261 = vmul.f32 %v3206, %v3252
          %v3262 = vmul.f32 %v3207, %v3252
          %v3263 = vmul.f32 %v3208, %v3252
          %v3264 = vmul.f32 %v3209, %v3252
          %v3265 = vmul.f32 %v3210, %v3252
          %v3266 = vmul.f32 %v3211, %v3252
          %v3267 = vmul.f32 %v3212, %v3252
          %v3268 = vmul.f32 %v3213, %v3252
          %v3269 = vmul.f32 %v3214, %v3252
          %v3270 = vmul.f32 %v3215, %v3252
          %v3271 = vmul.f32 %v3216, %v3252
          %v3272 = vmul.f32 %v3217, %v3252
          %v3273 = vmul.f32 %v3218, %v3252
          %v3274 = vmul.f32 %v3219, %v3252
          %v3275 = vmul.f32 %v3220, %v3252
          %v3276 = vmul.f32 %v3221, %v3252
          %v3277 = vmul.f32 %v3222, %v3252
          %v3278 = vmul.f32 %v3223, %v3252
          %v3279 = vmul.f32 %v3224, %v3252
          %v3280 = vmul.f32 %v3225, %v3252
          %v3281 = vmul.f32 %v3226, %v3252
          %v3282 = vmul.f32 %v3227, %v3252
          %v3283 = vmul.f32 %v3228, %v3252
          %v3284 = vmul.f32 %v3229, %v3252
          %v3285 = vmul.f32 %v3230, %v3252
          %v3286 = vmul.f32 %v3231, %v3252
          %v3287 = vmul.f32 %v3232, %v3252
          %v3288 = vmul.f32 %v3233, %v3252
          %v3289 = vmul.f32 %v3234, %v3252
          %v3290 = vmul.f32 %v3235, %v3252
          %v3291 = vmul.f32 %v3236, %v3252
          %v3292 = vmul.f32 %v3237, %v3252
          %v3293 = vmul.f32 %v3238, %v3252
          %v3294 = vmul.f32 %v3239, %v3252
          %v3295 = vmul.f32 %v3240, %v3252
          %v3296 = vmul.f32 %v3241, %v3252
          %v3297 = vmul.f32 %v3242, %v3252
          %v3298 = vmul.f32 %v3243, %v3252
          %v3299 = vmul.f32 %v3244, %v3252
          %v3300 = vmul.f32 %v3245, %v3252
          %v3301 = vmul.f32 %v3246, %v3252
          %v3302 = vld [vmem:[%s310] sm:$0x1]
          %v3304 = vlaneseq
          %v3305 = vshrl.u32 %v3304, 7
          %v3306 = vsub.s32 0, %v3305
          %v3307 = vrot.slane %v3302, %v3306
          %v3309 = vadd.f32 %v3254, %v3307
          %v3310 = vadd.f32 %v3255, %v3307
          %v3311 = vadd.f32 %v3256, %v3307
          %v3312 = vadd.f32 %v3257, %v3307
          %v3313 = vadd.f32 %v3258, %v3307
          %v3314 = vadd.f32 %v3259, %v3307
          %v3315 = vadd.f32 %v3260, %v3307
          %v3316 = vadd.f32 %v3261, %v3307
          %v3317 = vadd.f32 %v3262, %v3307
          %v3318 = vadd.f32 %v3263, %v3307
          %v3319 = vadd.f32 %v3264, %v3307
          %v3320 = vadd.f32 %v3265, %v3307
          %v3321 = vadd.f32 %v3266, %v3307
          %v3322 = vadd.f32 %v3267, %v3307
          %v3323 = vadd.f32 %v3268, %v3307
          %v3324 = vadd.f32 %v3269, %v3307
          %v3325 = vadd.f32 %v3270, %v3307
          %v3326 = vadd.f32 %v3271, %v3307
          %v3327 = vadd.f32 %v3272, %v3307
          %v3328 = vadd.f32 %v3273, %v3307
          %v3329 = vadd.f32 %v3274, %v3307
          %v3330 = vadd.f32 %v3275, %v3307
          %v3331 = vadd.f32 %v3276, %v3307
          %v3332 = vadd.f32 %v3277, %v3307
          %v3333 = vadd.f32 %v3278, %v3307
          %v3334 = vadd.f32 %v3279, %v3307
          %v3335 = vadd.f32 %v3280, %v3307
          %v3336 = vadd.f32 %v3281, %v3307
          %v3337 = vadd.f32 %v3282, %v3307
          %v3338 = vadd.f32 %v3283, %v3307
          %v3339 = vadd.f32 %v3284, %v3307
          %v3340 = vadd.f32 %v3285, %v3307
          %v3341 = vadd.f32 %v3286, %v3307
          %v3342 = vadd.f32 %v3287, %v3307
          %v3343 = vadd.f32 %v3288, %v3307
          %v3344 = vadd.f32 %v3289, %v3307
          %v3345 = vadd.f32 %v3290, %v3307
          %v3346 = vadd.f32 %v3291, %v3307
          %v3347 = vadd.f32 %v3292, %v3307
          %v3348 = vadd.f32 %v3293, %v3307
          %v3349 = vadd.f32 %v3294, %v3307
          %v3350 = vadd.f32 %v3295, %v3307
          %v3351 = vadd.f32 %v3296, %v3307
          %v3352 = vadd.f32 %v3297, %v3307
          %v3353 = vadd.f32 %v3298, %v3307
          %v3354 = vadd.f32 %v3299, %v3307
          %v3355 = vadd.f32 %v3300, %v3307
          %v3356 = vadd.f32 %v3301, %v3307
          %v3357 = vlaneseq
          %v3358 = vshrl.u32 %v3357, 7
          %v3359 = vadd.s32 %v3358, 8
          %v3360 = vadd.s32 %v3358, 16
          %v3361 = vadd.s32 %v3358, 24
          %v3362 = vadd.s32 %v3358, 32
          %v3363 = vadd.s32 %v3358, 40
          %v3364 = vadd.s32 %v3358, 48
          %v3365 = vadd.s32 %v3358, 56
          %v3366 = vadd.s32 %v3358, 64
          %v3367 = vadd.s32 %v3358, 72
          %v3368 = vadd.s32 %v3358, 80
          %v3369 = vadd.s32 %v3358, 88
          %v3370 = vadd.s32 %v3358, 96
          %v3371 = vadd.s32 %v3358, 104
          %v3372 = vadd.s32 %v3358, 112
          %v3373 = vadd.s32 %v3358, 120
          %v3374 = vadd.s32 %v3358, 128
          %v3375 = vadd.s32 %v3358, 136
          %v3376 = vadd.s32 %v3358, 144
          %v3377 = vadd.s32 %v3358, 152
          %v3378 = vadd.s32 %v3358, 160
          %v3379 = vadd.s32 %v3358, 168
          %v3380 = vadd.s32 %v3358, 176
          %v3381 = vadd.s32 %v3358, 184
          %v3382 = vadd.s32 %v3358, 192
          %v3383 = vadd.s32 %v3358, 200
          %v3384 = vadd.s32 %v3358, 208
          %v3385 = vadd.s32 %v3358, 216
          %v3386 = vadd.s32 %v3358, 224
          %v3387 = vadd.s32 %v3358, 232
          %v3388 = vadd.s32 %v3358, 240
          %v3389 = vadd.s32 %v3358, 248
          %v3390 = vadd.s32 %v3358, 256
          %v3391 = vadd.s32 %v3358, 264
          %v3392 = vadd.s32 %v3358, 272
          %v3393 = vadd.s32 %v3358, 280
          %v3394 = vadd.s32 %v3358, 288
          %v3395 = vadd.s32 %v3358, 296
          %v3396 = vadd.s32 %v3358, 304
          %v3397 = vadd.s32 %v3358, 312
          %v3398 = vadd.s32 %v3358, 320
          %v3399 = vadd.s32 %v3358, 328
          %v3400 = vadd.s32 %v3358, 336
          %v3401 = vadd.s32 %v3358, 344
          %v3402 = vadd.s32 %v3358, 352
          %v3403 = vadd.s32 %v3358, 360
          %v3404 = vadd.s32 %v3358, 368
          %v3405 = vadd.s32 %v3358, 376
          %vm3406 = vcmp.lt.s32.totalorder %v3358, 300
          %vm3407 = vcmp.lt.s32.totalorder %v3359, 300
          %vm3408 = vcmp.lt.s32.totalorder %v3360, 300
          %vm3409 = vcmp.lt.s32.totalorder %v3361, 300
          %vm3410 = vcmp.lt.s32.totalorder %v3362, 300
          %vm3411 = vcmp.lt.s32.totalorder %v3363, 300
          %vm3412 = vcmp.lt.s32.totalorder %v3364, 300
          %vm3413 = vcmp.lt.s32.totalorder %v3365, 300
          %vm3414 = vcmp.lt.s32.totalorder %v3366, 300
          %vm3415 = vcmp.lt.s32.totalorder %v3367, 300
          %vm3416 = vcmp.lt.s32.totalorder %v3368, 300
          %vm3417 = vcmp.lt.s32.totalorder %v3369, 300
          %vm3418 = vcmp.lt.s32.totalorder %v3370, 300
          %vm3419 = vcmp.lt.s32.totalorder %v3371, 300
          %vm3420 = vcmp.lt.s32.totalorder %v3372, 300
          %vm3421 = vcmp.lt.s32.totalorder %v3373, 300
          %vm3422 = vcmp.lt.s32.totalorder %v3374, 300
          %vm3423 = vcmp.lt.s32.totalorder %v3375, 300
          %vm3424 = vcmp.lt.s32.totalorder %v3376, 300
          %vm3425 = vcmp.lt.s32.totalorder %v3377, 300
          %vm3426 = vcmp.lt.s32.totalorder %v3378, 300
          %vm3427 = vcmp.lt.s32.totalorder %v3379, 300
          %vm3428 = vcmp.lt.s32.totalorder %v3380, 300
          %vm3429 = vcmp.lt.s32.totalorder %v3381, 300
          %vm3430 = vcmp.lt.s32.totalorder %v3382, 300
          %vm3431 = vcmp.lt.s32.totalorder %v3383, 300
          %vm3432 = vcmp.lt.s32.totalorder %v3384, 300
          %vm3433 = vcmp.lt.s32.totalorder %v3385, 300
          %vm3434 = vcmp.lt.s32.totalorder %v3386, 300
          %vm3435 = vcmp.lt.s32.totalorder %v3387, 300
          %vm3436 = vcmp.lt.s32.totalorder %v3388, 300
          %vm3437 = vcmp.lt.s32.totalorder %v3389, 300
          %vm3438 = vcmp.lt.s32.totalorder %v3390, 300
          %vm3439 = vcmp.lt.s32.totalorder %v3391, 300
          %vm3440 = vcmp.lt.s32.totalorder %v3392, 300
          %vm3441 = vcmp.lt.s32.totalorder %v3393, 300
          %vm3442 = vcmp.lt.s32.totalorder %v3394, 300
          %vm3443 = vcmp.lt.s32.totalorder %v3395, 300
          %vm3444 = vcmp.lt.s32.totalorder %v3396, 300
          %vm3445 = vcmp.lt.s32.totalorder %v3397, 300
          %vm3446 = vcmp.lt.s32.totalorder %v3398, 300
          %vm3447 = vcmp.lt.s32.totalorder %v3399, 300
          %vm3448 = vcmp.lt.s32.totalorder %v3400, 300
          %vm3449 = vcmp.lt.s32.totalorder %v3401, 300
          %vm3450 = vcmp.lt.s32.totalorder %v3402, 300
          %vm3451 = vcmp.lt.s32.totalorder %v3403, 300
          %vm3452 = vcmp.lt.s32.totalorder %v3404, 300
          %vm3453 = vcmp.lt.s32.totalorder %v3405, 300
          %v3454 = vmax.f32 %v3309, 0.0
          %v3455 = vmax.f32 %v3310, 0.0
          %v3456 = vmax.f32 %v3311, 0.0
          %v3457 = vmax.f32 %v3312, 0.0
          %v3458 = vmax.f32 %v3313, 0.0
          %v3459 = vmax.f32 %v3314, 0.0
          %v3460 = vmax.f32 %v3315, 0.0
          %v3461 = vmax.f32 %v3316, 0.0
          %v3462 = vmax.f32 %v3317, 0.0
          %v3463 = vmax.f32 %v3318, 0.0
          %v3464 = vmax.f32 %v3319, 0.0
          %v3465 = vmax.f32 %v3320, 0.0
          %v3466 = vmax.f32 %v3321, 0.0
          %v3467 = vmax.f32 %v3322, 0.0
          %v3468 = vmax.f32 %v3323, 0.0
          %v3469 = vmax.f32 %v3324, 0.0
          %v3470 = vmax.f32 %v3325, 0.0
          %v3471 = vmax.f32 %v3326, 0.0
          %v3472 = vmax.f32 %v3327, 0.0
          %v3473 = vmax.f32 %v3328, 0.0
          %v3474 = vmax.f32 %v3329, 0.0
          %v3475 = vmax.f32 %v3330, 0.0
          %v3476 = vmax.f32 %v3331, 0.0
          %v3477 = vmax.f32 %v3332, 0.0
          %v3478 = vmax.f32 %v3333, 0.0
          %v3479 = vmax.f32 %v3334, 0.0
          %v3480 = vmax.f32 %v3335, 0.0
          %v3481 = vmax.f32 %v3336, 0.0
          %v3482 = vmax.f32 %v3337, 0.0
          %v3483 = vmax.f32 %v3338, 0.0
          %v3484 = vmax.f32 %v3339, 0.0
          %v3485 = vmax.f32 %v3340, 0.0
          %v3486 = vmax.f32 %v3341, 0.0
          %v3487 = vmax.f32 %v3342, 0.0
          %v3488 = vmax.f32 %v3343, 0.0
          %v3489 = vmax.f32 %v3344, 0.0
          %v3490 = vmax.f32 %v3345, 0.0
          %v3491 = vmax.f32 %v3346, 0.0
          %v3492 = vmax.f32 %v3347, 0.0
          %v3493 = vmax.f32 %v3348, 0.0
          %v3494 = vmax.f32 %v3349, 0.0
          %v3495 = vmax.f32 %v3350, 0.0
          %v3496 = vmax.f32 %v3351, 0.0
          %v3497 = vmax.f32 %v3352, 0.0
          %v3498 = vmax.f32 %v3353, 0.0
          %v3499 = vmax.f32 %v3354, 0.0
          %v3500 = vmax.f32 %v3355, 0.0
          %v3501 = vmax.f32 %v3356, 0.0
          %v3502 = vsel %vm3406, 1, 0
          %v3503 = vsel %vm3407, 1, 0
          %v3504 = vsel %vm3408, 1, 0
          %v3505 = vsel %vm3409, 1, 0
          %v3506 = vsel %vm3410, 1, 0
          %v3507 = vsel %vm3411, 1, 0
          %v3508 = vsel %vm3412, 1, 0
          %v3509 = vsel %vm3413, 1, 0
          %v3510 = vsel %vm3414, 1, 0
          %v3511 = vsel %vm3415, 1, 0
          %v3512 = vsel %vm3416, 1, 0
          %v3513 = vsel %vm3417, 1, 0
          %v3514 = vsel %vm3418, 1, 0
          %v3515 = vsel %vm3419, 1, 0
          %v3516 = vsel %vm3420, 1, 0
          %v3517 = vsel %vm3421, 1, 0
          %v3518 = vsel %vm3422, 1, 0
          %v3519 = vsel %vm3423, 1, 0
          %v3520 = vsel %vm3424, 1, 0
          %v3521 = vsel %vm3425, 1, 0
          %v3522 = vsel %vm3426, 1, 0
          %v3523 = vsel %vm3427, 1, 0
          %v3524 = vsel %vm3428, 1, 0
          %v3525 = vsel %vm3429, 1, 0
          %v3526 = vsel %vm3430, 1, 0
          %v3527 = vsel %vm3431, 1, 0
          %v3528 = vsel %vm3432, 1, 0
          %v3529 = vsel %vm3433, 1, 0
          %v3530 = vsel %vm3434, 1, 0
          %v3531 = vsel %vm3435, 1, 0
          %v3532 = vsel %vm3436, 1, 0
          %v3533 = vsel %vm3437, 1, 0
          %v3534 = vsel %vm3438, 1, 0
          %v3535 = vsel %vm3439, 1, 0
          %v3536 = vsel %vm3440, 1, 0
          %v3537 = vsel %vm3441, 1, 0
          %v3538 = vsel %vm3442, 1, 0
          %v3539 = vsel %vm3443, 1, 0
          %v3540 = vsel %vm3444, 1, 0
          %v3541 = vsel %vm3445, 1, 0
          %v3542 = vsel %vm3446, 1, 0
          %v3543 = vsel %vm3447, 1, 0
          %v3544 = vsel %vm3448, 1, 0
          %v3545 = vsel %vm3449, 1, 0
          %v3546 = vsel %vm3450, 1, 0
          %v3547 = vsel %vm3451, 1, 0
          %v3548 = vsel %vm3452, 1, 0
          %v3549 = vsel %vm3453, 1, 0
          %vm3550 = vcmp.eq.s32.totalorder %v3502, 1
          %vm3551 = vcmp.eq.s32.totalorder %v3503, 1
          %vm3552 = vcmp.eq.s32.totalorder %v3504, 1
          %vm3553 = vcmp.eq.s32.totalorder %v3505, 1
          %vm3554 = vcmp.eq.s32.totalorder %v3506, 1
          %vm3555 = vcmp.eq.s32.totalorder %v3507, 1
          %vm3556 = vcmp.eq.s32.totalorder %v3508, 1
          %vm3557 = vcmp.eq.s32.totalorder %v3509, 1
          %vm3558 = vcmp.eq.s32.totalorder %v3510, 1
          %vm3559 = vcmp.eq.s32.totalorder %v3511, 1
          %vm3560 = vcmp.eq.s32.totalorder %v3512, 1
          %vm3561 = vcmp.eq.s32.totalorder %v3513, 1
          %vm3562 = vcmp.eq.s32.totalorder %v3514, 1
          %vm3563 = vcmp.eq.s32.totalorder %v3515, 1
          %vm3564 = vcmp.eq.s32.totalorder %v3516, 1
          %vm3565 = vcmp.eq.s32.totalorder %v3517, 1
          %vm3566 = vcmp.eq.s32.totalorder %v3518, 1
          %vm3567 = vcmp.eq.s32.totalorder %v3519, 1
          %vm3568 = vcmp.eq.s32.totalorder %v3520, 1
          %vm3569 = vcmp.eq.s32.totalorder %v3521, 1
          %vm3570 = vcmp.eq.s32.totalorder %v3522, 1
          %vm3571 = vcmp.eq.s32.totalorder %v3523, 1
          %vm3572 = vcmp.eq.s32.totalorder %v3524, 1
          %vm3573 = vcmp.eq.s32.totalorder %v3525, 1
          %vm3574 = vcmp.eq.s32.totalorder %v3526, 1
          %vm3575 = vcmp.eq.s32.totalorder %v3527, 1
          %vm3576 = vcmp.eq.s32.totalorder %v3528, 1
          %vm3577 = vcmp.eq.s32.totalorder %v3529, 1
          %vm3578 = vcmp.eq.s32.totalorder %v3530, 1
          %vm3579 = vcmp.eq.s32.totalorder %v3531, 1
          %vm3580 = vcmp.eq.s32.totalorder %v3532, 1
          %vm3581 = vcmp.eq.s32.totalorder %v3533, 1
          %vm3582 = vcmp.eq.s32.totalorder %v3534, 1
          %vm3583 = vcmp.eq.s32.totalorder %v3535, 1
          %vm3584 = vcmp.eq.s32.totalorder %v3536, 1
          %vm3585 = vcmp.eq.s32.totalorder %v3537, 1
          %vm3586 = vcmp.eq.s32.totalorder %v3538, 1
          %vm3587 = vcmp.eq.s32.totalorder %v3539, 1
          %vm3588 = vcmp.eq.s32.totalorder %v3540, 1
          %vm3589 = vcmp.eq.s32.totalorder %v3541, 1
          %vm3590 = vcmp.eq.s32.totalorder %v3542, 1
          %vm3591 = vcmp.eq.s32.totalorder %v3543, 1
          %vm3592 = vcmp.eq.s32.totalorder %v3544, 1
          %vm3593 = vcmp.eq.s32.totalorder %v3545, 1
          %vm3594 = vcmp.eq.s32.totalorder %v3546, 1
          %vm3595 = vcmp.eq.s32.totalorder %v3547, 1
          %vm3596 = vcmp.eq.s32.totalorder %v3548, 1
          %vm3597 = vcmp.eq.s32.totalorder %v3549, 1
          %v3598 = vsel %vm3550, %v3454, 0.0
          %v3599 = vsel %vm3551, %v3455, 0.0
          %v3600 = vsel %vm3552, %v3456, 0.0
          %v3601 = vsel %vm3553, %v3457, 0.0
          %v3602 = vsel %vm3554, %v3458, 0.0
          %v3603 = vsel %vm3555, %v3459, 0.0
          %v3604 = vsel %vm3556, %v3460, 0.0
          %v3605 = vsel %vm3557, %v3461, 0.0
          %v3606 = vsel %vm3558, %v3462, 0.0
          %v3607 = vsel %vm3559, %v3463, 0.0
          %v3608 = vsel %vm3560, %v3464, 0.0
          %v3609 = vsel %vm3561, %v3465, 0.0
          %v3610 = vsel %vm3562, %v3466, 0.0
          %v3611 = vsel %vm3563, %v3467, 0.0
          %v3612 = vsel %vm3564, %v3468, 0.0
          %v3613 = vsel %vm3565, %v3469, 0.0
          %v3614 = vsel %vm3566, %v3470, 0.0
          %v3615 = vsel %vm3567, %v3471, 0.0
          %v3616 = vsel %vm3568, %v3472, 0.0
          %v3617 = vsel %vm3569, %v3473, 0.0
          %v3618 = vsel %vm3570, %v3474, 0.0
          %v3619 = vsel %vm3571, %v3475, 0.0
          %v3620 = vsel %vm3572, %v3476, 0.0
          %v3621 = vsel %vm3573, %v3477, 0.0
          %v3622 = vsel %vm3574, %v3478, 0.0
          %v3623 = vsel %vm3575, %v3479, 0.0
          %v3624 = vsel %vm3576, %v3480, 0.0
          %v3625 = vsel %vm3577, %v3481, 0.0
          %v3626 = vsel %vm3578, %v3482, 0.0
          %v3627 = vsel %vm3579, %v3483, 0.0
          %v3628 = vsel %vm3580, %v3484, 0.0
          %v3629 = vsel %vm3581, %v3485, 0.0
          %v3630 = vsel %vm3582, %v3486, 0.0
          %v3631 = vsel %vm3583, %v3487, 0.0
          %v3632 = vsel %vm3584, %v3488, 0.0
          %v3633 = vsel %vm3585, %v3489, 0.0
          %v3634 = vsel %vm3586, %v3490, 0.0
          %v3635 = vsel %vm3587, %v3491, 0.0
          %v3636 = vsel %vm3588, %v3492, 0.0
          %v3637 = vsel %vm3589, %v3493, 0.0
          %v3638 = vsel %vm3590, %v3494, 0.0
          %v3639 = vsel %vm3591, %v3495, 0.0
          %v3640 = vsel %vm3592, %v3496, 0.0
          %v3641 = vsel %vm3593, %v3497, 0.0
          %v3642 = vsel %vm3594, %v3498, 0.0
          %v3643 = vsel %vm3595, %v3499, 0.0
          %v3644 = vsel %vm3596, %v3500, 0.0
          %v3645 = vsel %vm3597, %v3501, 0.0
          %v3646 = vpack.c.bf16 %v3599, %v3598
          %v3647 = vpack.c.bf16 %v3601, %v3600
          %v3648 = vpack.c.bf16 %v3603, %v3602
          %v3649 = vpack.c.bf16 %v3605, %v3604
          %v3650 = vpack.c.bf16 %v3607, %v3606
          %v3651 = vpack.c.bf16 %v3609, %v3608
          %v3652 = vpack.c.bf16 %v3611, %v3610
          %v3653 = vpack.c.bf16 %v3613, %v3612
          %v3654 = vpack.c.bf16 %v3615, %v3614
          %v3655 = vpack.c.bf16 %v3617, %v3616
          %v3656 = vpack.c.bf16 %v3619, %v3618
          %v3657 = vpack.c.bf16 %v3621, %v3620
          %v3658 = vpack.c.bf16 %v3623, %v3622
          %v3659 = vpack.c.bf16 %v3625, %v3624
          %v3660 = vpack.c.bf16 %v3627, %v3626
          %v3661 = vpack.c.bf16 %v3629, %v3628
          %v3662 = vpack.c.bf16 %v3631, %v3630
          %v3663 = vpack.c.bf16 %v3633, %v3632
          %v3664 = vpack.c.bf16 %v3635, %v3634
          %v3665 = vpack.c.bf16 %v3637, %v3636
          %v3666 = vpack.c.bf16 %v3639, %v3638
          %v3667 = vpack.c.bf16 %v3641, %v3640
          %v3668 = vpack.c.bf16 %v3643, %v3642
          %v3669 = vpack.c.bf16 %v3645, %v3644
          %v3694 = vunpack.c.l.b16 %v3646
          %v3695 = vunpack.c.h.b16 %v3646
          %v3696 = vunpack.c.l.b16 %v3647
          %v3697 = vunpack.c.h.b16 %v3647
          %v3698 = vunpack.c.l.b16 %v3648
          %v3699 = vunpack.c.h.b16 %v3648
          %v3700 = vunpack.c.l.b16 %v3649
          %v3701 = vunpack.c.h.b16 %v3649
          %v3702 = vunpack.c.l.b16 %v3650
          %v3703 = vunpack.c.h.b16 %v3650
          %v3704 = vunpack.c.l.b16 %v3651
          %v3705 = vunpack.c.h.b16 %v3651
          %v3706 = vunpack.c.l.b16 %v3652
          %v3707 = vunpack.c.h.b16 %v3652
          %v3708 = vunpack.c.l.b16 %v3653
          %v3709 = vunpack.c.h.b16 %v3653
          %v3710 = vunpack.c.l.b16 %v3654
          %v3711 = vunpack.c.h.b16 %v3654
          %v3712 = vunpack.c.l.b16 %v3655
          %v3713 = vunpack.c.h.b16 %v3655
          %v3714 = vunpack.c.l.b16 %v3656
          %v3715 = vunpack.c.h.b16 %v3656
          %v3716 = vunpack.c.l.b16 %v3657
          %v3717 = vunpack.c.h.b16 %v3657
          %v3718 = vunpack.c.l.b16 %v3658
          %v3719 = vunpack.c.h.b16 %v3658
          %v3720 = vunpack.c.l.b16 %v3659
          %v3721 = vunpack.c.h.b16 %v3659
          %v3722 = vunpack.c.l.b16 %v3660
          %v3723 = vunpack.c.h.b16 %v3660
          %v3724 = vunpack.c.l.b16 %v3661
          %v3725 = vunpack.c.h.b16 %v3661
          %v3726 = vunpack.c.l.b16 %v3662
          %v3727 = vunpack.c.h.b16 %v3662
          %v3728 = vunpack.c.l.b16 %v3663
          %v3729 = vunpack.c.h.b16 %v3663
          %v3730 = vunpack.c.l.b16 %v3664
          %v3731 = vunpack.c.h.b16 %v3664
          %v3732 = vunpack.c.l.b16 %v3665
          %v3733 = vunpack.c.h.b16 %v3665
          %v3734 = vunpack.c.l.b16 %v3666
          %v3735 = vunpack.c.h.b16 %v3666
          %v3736 = vunpack.c.l.b16 %v3667
          %v3737 = vunpack.c.h.b16 %v3667
          %v3738 = vunpack.c.l.b16 %v3668
          %v3739 = vunpack.c.h.b16 %v3668
          %v3740 = vunpack.c.l.b16 %v3669
          %v3741 = vunpack.c.h.b16 %v3669
          %v3742 = vpack.c.b16 %v3694, %v3694
          %v3743 = vpack.c.b16 %v3695, %v3695
          %v3744 = vpack.c.b16 %v3696, %v3696
          %v3745 = vpack.c.b16 %v3697, %v3697
          %v3746 = vpack.c.b16 %v3698, %v3698
          %v3747 = vpack.c.b16 %v3699, %v3699
          %v3748 = vpack.c.b16 %v3700, %v3700
          %v3749 = vpack.c.b16 %v3701, %v3701
          %v3750 = vpack.c.b16 %v3702, %v3702
          %v3751 = vpack.c.b16 %v3703, %v3703
          %v3752 = vpack.c.b16 %v3704, %v3704
          %v3753 = vpack.c.b16 %v3705, %v3705
          %v3754 = vpack.c.b16 %v3706, %v3706
          %v3755 = vpack.c.b16 %v3707, %v3707
          %v3756 = vpack.c.b16 %v3708, %v3708
          %v3757 = vpack.c.b16 %v3709, %v3709
          %v3758 = vpack.c.b16 %v3710, %v3710
          %v3759 = vpack.c.b16 %v3711, %v3711
          %v3760 = vpack.c.b16 %v3712, %v3712
          %v3761 = vpack.c.b16 %v3713, %v3713
          %v3762 = vpack.c.b16 %v3714, %v3714
          %v3763 = vpack.c.b16 %v3715, %v3715
          %v3764 = vpack.c.b16 %v3716, %v3716
          %v3765 = vpack.c.b16 %v3717, %v3717
          %v3766 = vpack.c.b16 %v3718, %v3718
          %v3767 = vpack.c.b16 %v3719, %v3719
          %v3768 = vpack.c.b16 %v3720, %v3720
          %v3769 = vpack.c.b16 %v3721, %v3721
          %v3770 = vpack.c.b16 %v3722, %v3722
          %v3771 = vpack.c.b16 %v3723, %v3723
          %v3772 = vpack.c.b16 %v3724, %v3724
          %v3773 = vpack.c.b16 %v3725, %v3725
          %v3774 = vpack.c.b16 %v3726, %v3726
          %v3775 = vpack.c.b16 %v3727, %v3727
          %v3776 = vpack.c.b16 %v3728, %v3728
          %v3777 = vpack.c.b16 %v3729, %v3729
          %v3778 = vpack.c.b16 %v3730, %v3730
          %v3779 = vpack.c.b16 %v3731, %v3731
          %v3780 = vpack.c.b16 %v3732, %v3732
          %v3781 = vpack.c.b16 %v3733, %v3733
          %v3782 = vpack.c.b16 %v3734, %v3734
          %v3783 = vpack.c.b16 %v3735, %v3735
          %v3784 = vpack.c.b16 %v3736, %v3736
          %v3785 = vpack.c.b16 %v3737, %v3737
          %v3786 = vpack.c.b16 %v3738, %v3738
          %v3787 = vpack.c.b16 %v3739, %v3739
          %v3788 = vpack.c.b16 %v3740, %v3740
          %v3789 = vpack.c.b16 %v3741, %v3741
          %3838 = vst [vmem:[#allocation2] sm:$0xf] %v3742
          %3839 = vst [vmem:[#allocation2 + $0x4] sm:$0xf] %v3743
          %3840 = vst [vmem:[#allocation2 + $0x8] sm:$0xf] %v3744
          %3841 = vst [vmem:[#allocation2 + $0xc] sm:$0xf] %v3745
          %3842 = vst [vmem:[#allocation2 + $0x10] sm:$0xf] %v3746
          %3843 = vst [vmem:[#allocation2 + $0x14] sm:$0xf] %v3747
          %3844 = vst [vmem:[#allocation2 + $0x18] sm:$0xf] %v3748
          %3845 = vst [vmem:[#allocation2 + $0x1c] sm:$0xf] %v3749
          %3846 = vst [vmem:[#allocation2 + $0x20] sm:$0xf] %v3750
          %3847 = vst [vmem:[#allocation2 + $0x24] sm:$0xf] %v3751
          %3848 = vst [vmem:[#allocation2 + $0x28] sm:$0xf] %v3752
          %3849 = vst [vmem:[#allocation2 + $0x2c] sm:$0xf] %v3753
          %3850 = vst [vmem:[#allocation2 + $0x30] sm:$0xf] %v3754
          %3851 = vst [vmem:[#allocation2 + $0x34] sm:$0xf] %v3755
          %3852 = vst [vmem:[#allocation2 + $0x38] sm:$0xf] %v3756
          %3853 = vst [vmem:[#allocation2 + $0x3c] sm:$0xf] %v3757
          %3854 = vst [vmem:[#allocation2 + $0x40] sm:$0xf] %v3758
          %3855 = vst [vmem:[#allocation2 + $0x44] sm:$0xf] %v3759
          %3856 = vst [vmem:[#allocation2 + $0x48] sm:$0xf] %v3760
          %3857 = vst [vmem:[#allocation2 + $0x4c] sm:$0xf] %v3761
          %3858 = vst [vmem:[#allocation2 + $0x50] sm:$0xf] %v3762
          %3859 = vst [vmem:[#allocation2 + $0x54] sm:$0xf] %v3763
          %3860 = vst [vmem:[#allocation2 + $0x58] sm:$0xf] %v3764
          %3861 = vst [vmem:[#allocation2 + $0x5c] sm:$0xf] %v3765
          %3862 = vst [vmem:[#allocation2 + $0x60] sm:$0xf] %v3766
          %3863 = vst [vmem:[#allocation2 + $0x64] sm:$0xf] %v3767
          %3864 = vst [vmem:[#allocation2 + $0x68] sm:$0xf] %v3768
          %3865 = vst [vmem:[#allocation2 + $0x6c] sm:$0xf] %v3769
          %3866 = vst [vmem:[#allocation2 + $0x70] sm:$0xf] %v3770
          %3867 = vst [vmem:[#allocation2 + $0x74] sm:$0xf] %v3771
          %3868 = vst [vmem:[#allocation2 + $0x78] sm:$0xf] %v3772
          %3869 = vst [vmem:[#allocation2 + $0x7c] sm:$0xf] %v3773
          %3870 = vst [vmem:[#allocation2 + $0x80] sm:$0xf] %v3774
          %3871 = vst [vmem:[#allocation2 + $0x84] sm:$0xf] %v3775
          %3872 = vst [vmem:[#allocation2 + $0x88] sm:$0xf] %v3776
          %3873 = vst [vmem:[#allocation2 + $0x8c] sm:$0xf] %v3777
          %3874 = vst [vmem:[#allocation2 + $0x90] sm:$0xf] %v3778
          %3875 = vst [vmem:[#allocation2 + $0x94] sm:$0xf] %v3779
          %3876 = vst [vmem:[#allocation2 + $0x98] sm:$0xf] %v3780
          %3877 = vst [vmem:[#allocation2 + $0x9c] sm:$0xf] %v3781
          %3878 = vst [vmem:[#allocation2 + $0xa0] sm:$0xf] %v3782
          %3879 = vst [vmem:[#allocation2 + $0xa4] sm:$0xf] %v3783
          %3880 = vst [vmem:[#allocation2 + $0xa8] sm:$0xf] %v3784
          %3881 = vst [vmem:[#allocation2 + $0xac] sm:$0xf] %v3785
          %3882 = vst [vmem:[#allocation2 + $0xb0] sm:$0xf] %v3786
          %3883 = vst [vmem:[#allocation2 + $0xb4] sm:$0xf] %v3787
          %3884 = vst [vmem:[#allocation2 + $0xb8] sm:$0xf] %v3788
          %3885 = vst [vmem:[#allocation2 + $0xbc] sm:$0xf] %v3789
        $region68: #{tpu_custom_call.1} parent=39 // pred_fallthru
          _
        // Predicated region
        $region69: #{tpu_custom_call.1} parent=39 // pred_check
          %p3886 = pneg %p177
        $region70: #{tpu_custom_call.1} parent=39 // pred_check_branch
          %3888 = sbr.rel (%p3886) target = $region72
        $region71: #{tpu_custom_call.1} parent=39 // pred_region
          %s3890 = ssub.s32 6144, 6144
          %3891 = vsyncadd [#allocation10], %s3890
          %s3892 = sshll.u32 [#allocation13], 4
          %s3893 = int_to_ptr.vmem [resolvable:$true] %s3892
          %3898 = dma.vmem_to_hbm [thread:$0]  %s3893, 6144, %s6, [#allocation10], 128, 128, 8
        $region72: #{tpu_custom_call.1} parent=39 // pred_fallthru
          _
        // Predicated region
        $region73: #{tpu_custom_call.1} parent=39 // pred_check
          %p3899 = pneg %p177
        $region74: #{tpu_custom_call.1} parent=39 // pred_check_branch
          %3901 = sbr.rel (%p3899) target = $region76
        $region75: #{tpu_custom_call.1} parent=39 // pred_region
          %3902 = dma.done [#allocation10], 6144
        $region76: #{tpu_custom_call.1} parent=39 // pred_fallthru
          _
      $region40: #{tpu_custom_call.1} parent=5 // pred_fallthru
        _
      %p3903 = scmp.le.s32.totalorder 2, %s17
      // Predicated region
      $region77: #{tpu_custom_call.1} parent=5 // pred_check
        %p3904 = pneg %p3903
      $region78: #{tpu_custom_call.1} parent=5 // pred_check_branch
        %3906 = sbr.rel (%p3904) target = $region80
      $region79: #{tpu_custom_call.1} parent=5 // pred_region
        %s3907 = ssub.s32 %s17, 2
      $region80: #{tpu_custom_call.1} parent=5 // pred_fallthru
        _
    $region6: #{tpu_custom_call.1} parent=1 // loop_footer
      %s21 = sadd.s32 1, %s17
    $region7: #{tpu_custom_call.1} parent=1 // loop_footer_branch
      %16 = sbr.rel target = $region3
    $region8: #{tpu_custom_call.1} parent=1 // loop_exit
      _
    %3908 = vsyncpa [#allocation9], 1
    %s3909 = scalar_lea.sflag [#allocation9], 1
    %3910 = vsyncpa %s3909, 1
    %3911 = vsyncpa [#allocation12], 1
    %s3912 = scalar_lea.sflag [#allocation12], 1
    %3913 = vsyncpa %s3912, 1
    %3914 = vsyncpa [#allocation10], 1
    %s3915 = scalar_lea.sflag [#allocation10], 1
    %3916 = vsyncpa %s3915, 1
  %3917 = vsyncmov [#allocation7]
  %s3918 = vpop.sfrf %3917
  %p3919 = scmp.eq.s32.totalorder %s3918, 0
  %p3920 = pneg %p3919
  %3922 = shalt.err (%p3920)

</llo_original>
